<compile_context>
chip_gen: v6e
topology: v6e:2x2x1
jax: 0.10.0
libtpu: 0.0.40
codegen_flags: <defaults>
</compile_context>

<pallas_src>
import jax
import jax.numpy as jnp
from jax import lax
from jax.experimental import pallas as pl
from jax.experimental.pallas import tpu as pltpu


def _layernorm(x, w, b, eps=1e-5):
    mu = jnp.mean(x, axis=-1, keepdims=True)
    var = jnp.mean((x - mu) ** 2, axis=-1, keepdims=True)
    return (x - mu) * lax.rsqrt(var + eps) * w + b


def block_kernel(
    # inputs
    x_ref, att_shift_ref, wkv_ref, ffn_shift_ref,
    ln0w, ln0b, ln1w, ln1b, ln2w, ln2b,
    att_wa, att_wb, att_wdecay, att_u, att_wo, lnxw, lnxb,
    ffn_wa, ffn_wb, ffn_wv,
    # outputs
    y_ref, att_shift_out_ref, wkv_out_ref, ffn_shift_out_ref,
):
    BBLK, T, C = x_ref.shape
    H = wkv_ref.shape[1]
    N = wkv_ref.shape[2]
    F = ffn_wv.shape[0]
    BT = BBLK * T
    cdt = att_wa.dtype                       # matmul operand dtype (bf16)

    x_in = x_ref[...].reshape(BT, C)         # fold (batch, time) -> M rows

    # ---- ln0 (layer 0 only) + ln1 ----
    x0 = _layernorm(x_in, ln0w[...], ln0b[...])
    x1 = _layernorm(x0, ln1w[...], ln1b[...])

    # ---- token shift: roll rows down by 1, replace row 0 of every batch ----
    tpos = lax.broadcasted_iota(jnp.int32, (BBLK, T, C), 1)
    rolled = pltpu.roll(x1, shift=1, axis=0).reshape(BBLK, T, C)
    sx = jnp.where(tpos == 0, att_shift_ref[...], rolled).reshape(BT, C)

    # ---- fused r/k/v/g projection (mix coefficients folded into Wa/Wb) ----
    rkvg = (
        jnp.dot(x1.astype(cdt), att_wa[...], preferred_element_type=jnp.float32)
        + jnp.dot(sx.astype(cdt), att_wb[...], preferred_element_type=jnp.float32)
    )
    r = rkvg[:, 0 * C:1 * C]
    k = rkvg[:, 1 * C:2 * C]
    v = rkvg[:, 2 * C:3 * C]
    g_lin = rkvg[:, 3 * C:4 * C]
    g = g_lin * jax.nn.sigmoid(g_lin)        # SiLU gate

    r4 = r.reshape(BBLK, T, H, N)
    k4 = k.reshape(BBLK, T, H, N)
    v4 = v.reshape(BBLK, T, H, N)

    u = att_u[...][None, :, :]               # (1, H, N)   "time_first"
    wdec = att_wdecay[...][None, :, :, None]  # (1, H, N, 1) = exp(-exp(decay))
    s = wkv_ref[...]                         # (BBLK, H, N, N) f32 state

    # ---- WKV recurrence: out_t = (r·(u*k))*v + r@s ;  s <- w*s + k^T v ----
    # Per-step GroupNorm over each head is fused here; per-step outputs stay in
    # registers and are concatenated once at the end.
    # TODO(synk): for large T switch to the chunked RWKV-5 matmul (MXU) form.
    outs = []
    for t in range(T):
        rt = r4[:, t]                        # (BBLK, H, N)
        kt = k4[:, t]
        vt = v4[:, t]
        ruk = jnp.sum(rt * u * kt, axis=-1, keepdims=True)   # (BBLK, H, 1)
        rs = jnp.sum(rt[..., :, None] * s, axis=2)           # (BBLK, H, N)
        out = ruk * vt + rs
        mu = jnp.mean(out, axis=-1, keepdims=True)
        var = jnp.mean((out - mu) ** 2, axis=-1, keepdims=True)
        # GroupNorm eps = 1e-5 * head_size_divisor**2 (= 64e-5 in RWKV-5)
        outs.append(((out - mu) * lax.rsqrt(var + 64e-5)).reshape(BBLK, 1, C))
        s = wdec * s + kt[..., :, None] * vt[..., None, :]

    gn = jnp.concatenate(outs, axis=1).reshape(BT, C)
    gn = gn * lnxw[...] + lnxb[...]
    att_out = jnp.dot((gn * g).astype(cdt), att_wo[...],
                      preferred_element_type=jnp.float32)

    x_res = x0 + att_out

    # ---------------- ChannelMix ----------------
    x2 = _layernorm(x_res, ln2w[...], ln2b[...])
    rolled2 = pltpu.roll(x2, shift=1, axis=0).reshape(BBLK, T, C)
    sx2 = jnp.where(tpos == 0, ffn_shift_ref[...], rolled2).reshape(BT, C)

    lin = (
        jnp.dot(x2.astype(cdt), ffn_wa[...], preferred_element_type=jnp.float32)
        + jnp.dot(sx2.astype(cdt), ffn_wb[...], preferred_element_type=jnp.float32)
    )
    kk = jnp.maximum(lin[:, :F], 0.0)
    kk = kk * kk
    rr = jax.nn.sigmoid(lin[:, F:])
    kv = jnp.dot(kk.astype(cdt), ffn_wv[...], preferred_element_type=jnp.float32)
    ffn_out = rr * kv

    # ---------------- outputs ----------------
    y_ref[...] = (x_res + ffn_out).reshape(BBLK, T, C)
    att_shift_out_ref[...] = x1.reshape(BBLK, T, C)[:, T - 1:T, :]
    wkv_out_ref[...] = s
    ffn_shift_out_ref[...] = x2.reshape(BBLK, T, C)[:, T - 1:T, :]


def _fold_params(params, matmul_dtype):
    """One-off host-side folding of mix coefficients into projection weights."""
    C = params["att_Wr"].shape[0]

    def col(v):                              # (1, C) -> (C, 1) row scale
        return v.reshape(C, 1)

    mr, mk = col(params["att_mix_r"]), col(params["att_mix_k"])
    mv, mg = col(params["att_mix_v"]), col(params["att_mix_g"])
    wr, wk = params["att_Wr"], params["att_Wk"]
    wv, wg = params["att_Wv"], params["att_Wg"]
    att_wa = jnp.concatenate([mr * wr, mk * wk, mv * wv, mg * wg], axis=1)
    att_wb = jnp.concatenate(
        [(1.0 - mr) * wr, (1.0 - mk) * wk, (1.0 - mv) * wv, (1.0 - mg) * wg],
        axis=1)

    cmk, cmr = col(params["ffn_mix_k"]), col(params["ffn_mix_r"])
    fwk, fwr = params["ffn_Wk"], params["ffn_Wr"]
    ffn_wa = jnp.concatenate([cmk * fwk, cmr * fwr], axis=1)
    ffn_wb = jnp.concatenate([(1.0 - cmk) * fwk, (1.0 - cmr) * fwr], axis=1)

    return dict(
        att_wa=att_wa.astype(matmul_dtype),
        att_wb=att_wb.astype(matmul_dtype),
        att_wdecay=jnp.exp(-jnp.exp(params["att_decay"])),
        att_u=params["att_faaaa"],
        att_wo=params["att_Wo"].astype(matmul_dtype),
        ffn_wa=ffn_wa.astype(matmul_dtype),
        ffn_wb=ffn_wb.astype(matmul_dtype),
        ffn_wv=params["ffn_Wv"].astype(matmul_dtype),
    )


def rwkv_block(x, att_shift, wkv_state, ffn_shift, params, *,
               batch_block=None, matmul_dtype=jnp.bfloat16):
    B, T, C = x.shape
    _, H, N, _ = wkv_state.shape
    if batch_block is None:
        batch_block = B
    assert B % batch_block == 0, "batch must be divisible by batch_block"
    bblk = batch_block
    # NOTE: on v7x keep the grid length (B // bblk) a multiple of 2 so both
    # TensorCores get work; at production C, also consider pl.Buffered(1) on
    # the constant-weight specs to avoid double-buffering resident weights.

    fp = _fold_params(params, matmul_dtype)
    param_args = [
        params["ln0_w"], params["ln0_b"],
        params["ln1_w"], params["ln1_b"],
        params["ln2_w"], params["ln2_b"],
        fp["att_wa"], fp["att_wb"], fp["att_wdecay"], fp["att_u"],
        fp["att_wo"], params["lnx_w"], params["lnx_b"],
        fp["ffn_wa"], fp["ffn_wb"], fp["ffn_wv"],
    ]

    def full_spec(a):
        ndim = a.ndim
        return pl.BlockSpec(a.shape, lambda b: (0,) * ndim)

    in_specs = [
        pl.BlockSpec((bblk, T, C), lambda b: (b, 0, 0)),
        pl.BlockSpec((bblk, 1, C), lambda b: (b, 0, 0)),
        pl.BlockSpec((bblk, H, N, N), lambda b: (b, 0, 0, 0)),
        pl.BlockSpec((bblk, 1, C), lambda b: (b, 0, 0)),
    ] + [full_spec(a) for a in param_args]

    out_shape = (
        jax.ShapeDtypeStruct((B, T, C), jnp.float32),
        jax.ShapeDtypeStruct((B, 1, C), jnp.float32),
        jax.ShapeDtypeStruct((B, H, N, N), jnp.float32),
        jax.ShapeDtypeStruct((B, 1, C), jnp.float32),
    )
    out_specs = (
        pl.BlockSpec((bblk, T, C), lambda b: (b, 0, 0)),
        pl.BlockSpec((bblk, 1, C), lambda b: (b, 0, 0)),
        pl.BlockSpec((bblk, H, N, N), lambda b: (b, 0, 0, 0)),
        pl.BlockSpec((bblk, 1, C), lambda b: (b, 0, 0)),
    )

    return pl.pallas_call(
        block_kernel,
        out_shape=out_shape,
        grid_spec=pltpu.PrefetchScalarGridSpec(
            num_scalar_prefetch=0,
            grid=(B // bblk,),
            in_specs=in_specs,
            out_specs=out_specs,
        ),
        # recurrent state buffers are updated "in place"
        input_output_aliases={1: 1, 2: 2, 3: 3},
        compiler_params=pltpu.CompilerParams(
            dimension_semantics=("parallel",),
            vmem_limit_bytes=64 * 1024 * 1024,
        ),
    )(x, att_shift, wkv_state, ffn_shift, *param_args)


def rwkv_block_reference(x, att_shift, wkv_state, ffn_shift, params):
    """Pure-JAX f32 mirror of the PyTorch Block.forward (dropout == 0)."""
    B, T, C = x.shape
    H, N = params["att_decay"].shape

    def ln(z, w, b, eps=1e-5):
        mu = jnp.mean(z, -1, keepdims=True)
        var = jnp.mean((z - mu) ** 2, -1, keepdims=True)
        return (z - mu) * lax.rsqrt(var + eps) * w + b

    x0 = ln(x, params["ln0_w"], params["ln0_b"])
    x1 = ln(x0, params["ln1_w"], params["ln1_b"])
    sx = jnp.concatenate([att_shift, x1[:, :-1]], axis=1)
    mk, mv = params["att_mix_k"], params["att_mix_v"]
    mr, mg = params["att_mix_r"], params["att_mix_g"]
    xk = x1 * mk + sx * (1 - mk)
    xv = x1 * mv + sx * (1 - mv)
    xr = x1 * mr + sx * (1 - mr)
    xg = x1 * mg + sx * (1 - mg)
    r = xr @ params["att_Wr"]
    k = xk @ params["att_Wk"]
    v = xv @ params["att_Wv"]
    gl = xg @ params["att_Wg"]
    g = gl * jax.nn.sigmoid(gl)

    w = jnp.exp(-jnp.exp(params["att_decay"]))
    u = params["att_faaaa"]
    s = wkv_state
    r4 = r.reshape(B, T, H, N)
    k4 = k.reshape(B, T, H, N)
    v4 = v.reshape(B, T, H, N)
    outs = []
    for t in range(T):
        rt, kt, vt = r4[:, t], k4[:, t], v4[:, t]
        a = kt[..., :, None] * vt[..., None, :]
        outs.append(
            jnp.sum(rt[..., :, None] * (u[None, :, :, None] * a + s), axis=2))
        s = w[None, :, :, None] * s + a
    y_att = jnp.stack(outs, axis=1)
    mu = jnp.mean(y_att, -1, keepdims=True)
    var = jnp.mean((y_att - mu) ** 2, -1, keepdims=True)
    gn = ((y_att - mu) * lax.rsqrt(var + 64e-5)).reshape(B, T, C)
    gn = gn * params["lnx_w"] + params["lnx_b"]
    att_out = (gn * g) @ params["att_Wo"]

    x_res = x0 + att_out
    x2 = ln(x_res, params["ln2_w"], params["ln2_b"])
    sx2 = jnp.concatenate([ffn_shift, x2[:, :-1]], axis=1)
    cmk, cmr = params["ffn_mix_k"], params["ffn_mix_r"]
    xk2 = x2 * cmk + sx2 * (1 - cmk)
    xr2 = x2 * cmr + sx2 * (1 - cmr)
    kk = jnp.maximum(xk2 @ params["ffn_Wk"], 0.0)
    kk = kk * kk
    kv = kk @ params["ffn_Wv"]
    ffn_out = jax.nn.sigmoid(xr2 @ params["ffn_Wr"]) * kv
    y = x_res + ffn_out
    return y, x1[:, T - 1:T], s, x2[:, T - 1:T]


def make_params(key, C, H, N, F):
    ks = list(jax.random.split(key, 32))
    nk = iter(ks)

    def mat(shape, scale=0.05):
        return jax.random.normal(next(nk), shape, jnp.float32) * scale

    def mix(shape):
        return jax.random.uniform(next(nk), shape, jnp.float32, 0.1, 0.9)

    return dict(
        ln0_w=jnp.ones((1, C), jnp.float32),
        ln0_b=jnp.zeros((1, C), jnp.float32),
        ln1_w=jnp.ones((1, C), jnp.float32),
        ln1_b=jnp.zeros((1, C), jnp.float32),
        ln2_w=jnp.ones((1, C), jnp.float32),
        ln2_b=jnp.zeros((1, C), jnp.float32),
        att_mix_k=mix((1, C)),
        att_mix_v=mix((1, C)),
        att_mix_r=mix((1, C)),
        att_mix_g=mix((1, C)),
        att_decay=mat((H, N), 0.5),      # w = exp(-exp(decay))
        att_faaaa=mat((H, N), 0.5),      # "time_first" / u
        att_Wr=mat((C, C)),
        att_Wk=mat((C, C)),
        att_Wv=mat((C, C)),
        att_Wg=mat((C, C)),
        att_Wo=mat((C, C)),
        lnx_w=jnp.ones((1, C), jnp.float32),
        lnx_b=jnp.zeros((1, C), jnp.float32),
        ffn_mix_k=mix((1, C)),
        ffn_mix_r=mix((1, C)),
        ffn_Wk=mat((C, F)),
        ffn_Wv=mat((F, C)),
        ffn_Wr=mat((C, C)),
    )


if __name__ == "__main__":
    # n_embd=64, head_size=32 -> 2 heads, T=8, B=4 (grid of 2 batch blocks).
    B, T, C = 4, 8, 64
    N = 32
    H = C // N
    F = 2 * C

    root = jax.random.PRNGKey(0)
    k_x, k_as, k_wkv, k_fs, k_p = jax.random.split(root, 5)

    x = jax.random.normal(k_x, (B, T, C), jnp.float32)
    att_shift = jax.random.normal(k_as, (B, 1, C), jnp.float32)
    wkv_state = jax.random.normal(k_wkv, (B, H, N, N), jnp.float32) * 0.1
    ffn_shift = jax.random.normal(k_fs, (B, 1, C), jnp.float32)
    params = make_params(k_p, C, H, N, F)

    # pure-JAX reference (computed before the kernel call; kernel aliases state)
    ref = rwkv_block_reference(x, att_shift, wkv_state, ffn_shift, params)

    out = jax.block_until_ready(
        rwkv_block(x, att_shift, wkv_state, ffn_shift, params, batch_block=2)
    )
    y, att_shift_out, wkv_out, ffn_shift_out = out

    assert y.shape == (B, T, C)
    assert att_shift_out.shape == (B, 1, C)
    assert wkv_out.shape == (B, H, N, N)
    assert ffn_shift_out.shape == (B, 1, C)

    # bf16-matmul kernel vs f32 reference: precision noise is ~1e-2; any
    # structural bug (wrong shift / recurrence / slicing) would be O(1).
    for name, got, want in zip(("y", "att_shift", "wkv", "ffn_shift"), out, ref):
        assert bool(jnp.all(jnp.isfinite(got))), name
        err = float(jnp.max(jnp.abs(got - want)))
        assert err < 5e-2, f"{name}: max abs err {err}"

    print("KERNEL_OK")
</pallas_src>

<mosaic_0001>
module attributes {stable_mosaic.version = 11 : i64} {
  func.func @block_kernel(%arg0: i32, %arg1: memref<2x8x64xf32, #tpu.memory_space<vmem>>, %arg2: memref<2x1x64xf32, #tpu.memory_space<vmem>>, %arg3: memref<2x2x32x32xf32, #tpu.memory_space<vmem>>, %arg4: memref<2x1x64xf32, #tpu.memory_space<vmem>>, %arg5: memref<1x64xf32, #tpu.memory_space<vmem>>, %arg6: memref<1x64xf32, #tpu.memory_space<vmem>>, %arg7: memref<1x64xf32, #tpu.memory_space<vmem>>, %arg8: memref<1x64xf32, #tpu.memory_space<vmem>>, %arg9: memref<1x64xf32, #tpu.memory_space<vmem>>, %arg10: memref<1x64xf32, #tpu.memory_space<vmem>>, %arg11: memref<64x256xbf16, #tpu.memory_space<vmem>>, %arg12: memref<64x256xbf16, #tpu.memory_space<vmem>>, %arg13: memref<2x32xf32, #tpu.memory_space<vmem>>, %arg14: memref<2x32xf32, #tpu.memory_space<vmem>>, %arg15: memref<64x64xbf16, #tpu.memory_space<vmem>>, %arg16: memref<1x64xf32, #tpu.memory_space<vmem>>, %arg17: memref<1x64xf32, #tpu.memory_space<vmem>>, %arg18: memref<64x192xbf16, #tpu.memory_space<vmem>>, %arg19: memref<64x192xbf16, #tpu.memory_space<vmem>>, %arg20: memref<128x64xbf16, #tpu.memory_space<vmem>>, %arg21: memref<2x8x64xf32, #tpu.memory_space<vmem>>, %arg22: memref<2x1x64xf32, #tpu.memory_space<vmem>>, %arg23: memref<2x2x32x32xf32, #tpu.memory_space<vmem>>, %arg24: memref<2x1x64xf32, #tpu.memory_space<vmem>>) attributes {dimension_semantics = [#tpu.dimension_semantics<parallel>], iteration_bounds = array<i64: 2>, scalar_prefetch = 0 : i64, scratch_operands = 0 : i64, tpu.core_type = #tpu.core_type<tc>, window_params = [{transform_indices = @transform_0, window_bounds = array<i64: 2, 8, 64>}, {transform_indices = @transform_1, window_bounds = array<i64: 2, 1, 64>}, {transform_indices = @transform_2, window_bounds = array<i64: 2, 2, 32, 32>}, {transform_indices = @transform_3, window_bounds = array<i64: 2, 1, 64>}, {pipeline_mode = #tpu.pipeline_mode<synchronous>, transform_indices = @transform_4, window_bounds = array<i64: 1, 64>}, {pipeline_mode = #tpu.pipeline_mode<synchronous>, transform_indices = @transform_5, window_bounds = array<i64: 1, 64>}, {pipeline_mode = #tpu.pipeline_mode<synchronous>, transform_indices = @transform_6, window_bounds = array<i64: 1, 64>}, {pipeline_mode = #tpu.pipeline_mode<synchronous>, transform_indices = @transform_7, window_bounds = array<i64: 1, 64>}, {pipeline_mode = #tpu.pipeline_mode<synchronous>, transform_indices = @transform_8, window_bounds = array<i64: 1, 64>}, {pipeline_mode = #tpu.pipeline_mode<synchronous>, transform_indices = @transform_9, window_bounds = array<i64: 1, 64>}, {pipeline_mode = #tpu.pipeline_mode<synchronous>, transform_indices = @transform_10, window_bounds = array<i64: 64, 256>}, {pipeline_mode = #tpu.pipeline_mode<synchronous>, transform_indices = @transform_11, window_bounds = array<i64: 64, 256>}, {pipeline_mode = #tpu.pipeline_mode<synchronous>, transform_indices = @transform_12, window_bounds = array<i64: 2, 32>}, {pipeline_mode = #tpu.pipeline_mode<synchronous>, transform_indices = @transform_13, window_bounds = array<i64: 2, 32>}, {pipeline_mode = #tpu.pipeline_mode<synchronous>, transform_indices = @transform_14, window_bounds = array<i64: 64, 64>}, {pipeline_mode = #tpu.pipeline_mode<synchronous>, transform_indices = @transform_15, window_bounds = array<i64: 1, 64>}, {pipeline_mode = #tpu.pipeline_mode<synchronous>, transform_indices = @transform_16, window_bounds = array<i64: 1, 64>}, {pipeline_mode = #tpu.pipeline_mode<synchronous>, transform_indices = @transform_17, window_bounds = array<i64: 64, 192>}, {pipeline_mode = #tpu.pipeline_mode<synchronous>, transform_indices = @transform_18, window_bounds = array<i64: 64, 192>}, {pipeline_mode = #tpu.pipeline_mode<synchronous>, transform_indices = @transform_19, window_bounds = array<i64: 128, 64>}, {transform_indices = @transform_20, window_bounds = array<i64: 2, 8, 64>}, {transform_indices = @transform_21, window_bounds = array<i64: 2, 1, 64>}, {transform_indices = @transform_22, window_bounds = array<i64: 2, 2, 32, 32>}, {transform_indices = @transform_23, window_bounds = array<i64: 2, 1, 64>}]} {
    %c0 = arith.constant 0 : index
    %c0_0 = arith.constant 0 : index
    %c0_1 = arith.constant 0 : index
    %0 = vector.load %arg1[%c0, %c0_0, %c0_1] : memref<2x8x64xf32, #tpu.memory_space<vmem>>, vector<2x8x64xf32>
    %1 = vector.shape_cast %0 : vector<2x8x64xf32> to vector<16x64xf32>
    %c0_2 = arith.constant 0 : index
    %c0_3 = arith.constant 0 : index
    %2 = vector.load %arg5[%c0_2, %c0_3] : memref<1x64xf32, #tpu.memory_space<vmem>>, vector<1x64xf32>
    %c0_4 = arith.constant 0 : index
    %c0_5 = arith.constant 0 : index
    %3 = vector.load %arg6[%c0_4, %c0_5] : memref<1x64xf32, #tpu.memory_space<vmem>>, vector<1x64xf32>
    %cst = arith.constant dense<0.000000e+00> : vector<16xf32>
    %4 = vector.multi_reduction <add>, %1, %cst [1] : vector<16x64xf32> to vector<16xf32>
    %5 = vector.shape_cast %4 : vector<16xf32> to vector<16x1xf32>
    %cst_6 = arith.constant 6.400000e+01 : f32
    %6 = vector.broadcast %cst_6 : f32 to vector<16x1xf32>
    %7 = arith.divf %5, %6 : vector<16x1xf32>
    %8 = vector.broadcast %7 : vector<16x1xf32> to vector<16x64xf32>
    %9 = arith.subf %1, %8 : vector<16x64xf32>
    %10 = arith.mulf %9, %9 : vector<16x64xf32>
    %cst_7 = arith.constant dense<0.000000e+00> : vector<16xf32>
    %11 = vector.multi_reduction <add>, %10, %cst_7 [1] : vector<16x64xf32> to vector<16xf32>
    %12 = vector.shape_cast %11 : vector<16xf32> to vector<16x1xf32>
    %cst_8 = arith.constant 6.400000e+01 : f32
    %13 = vector.broadcast %cst_8 : f32 to vector<16x1xf32>
    %14 = arith.divf %12, %13 : vector<16x1xf32>
    %15 = vector.broadcast %7 : vector<16x1xf32> to vector<16x64xf32>
    %16 = arith.subf %1, %15 : vector<16x64xf32>
    %cst_9 = arith.constant 9.99999974E-6 : f32
    %17 = vector.broadcast %cst_9 : f32 to vector<16x1xf32>
    %18 = arith.addf %14, %17 : vector<16x1xf32>
    %19 = math.rsqrt %18 : vector<16x1xf32>
    %20 = vector.broadcast %19 : vector<16x1xf32> to vector<16x64xf32>
    %21 = arith.mulf %16, %20 : vector<16x64xf32>
    %22 = vector.broadcast %2 : vector<1x64xf32> to vector<16x64xf32>
    %23 = arith.mulf %21, %22 : vector<16x64xf32>
    %24 = vector.broadcast %3 : vector<1x64xf32> to vector<16x64xf32>
    %25 = arith.addf %23, %24 : vector<16x64xf32>
    %c0_10 = arith.constant 0 : index
    %c0_11 = arith.constant 0 : index
    %26 = vector.load %arg7[%c0_10, %c0_11] : memref<1x64xf32, #tpu.memory_space<vmem>>, vector<1x64xf32>
    %c0_12 = arith.constant 0 : index
    %c0_13 = arith.constant 0 : index
    %27 = vector.load %arg8[%c0_12, %c0_13] : memref<1x64xf32, #tpu.memory_space<vmem>>, vector<1x64xf32>
    %cst_14 = arith.constant dense<0.000000e+00> : vector<16xf32>
    %28 = vector.multi_reduction <add>, %25, %cst_14 [1] : vector<16x64xf32> to vector<16xf32>
    %29 = vector.shape_cast %28 : vector<16xf32> to vector<16x1xf32>
    %cst_15 = arith.constant 6.400000e+01 : f32
    %30 = vector.broadcast %cst_15 : f32 to vector<16x1xf32>
    %31 = arith.divf %29, %30 : vector<16x1xf32>
    %32 = vector.broadcast %31 : vector<16x1xf32> to vector<16x64xf32>
    %33 = arith.subf %25, %32 : vector<16x64xf32>
    %34 = arith.mulf %33, %33 : vector<16x64xf32>
    %cst_16 = arith.constant dense<0.000000e+00> : vector<16xf32>
    %35 = vector.multi_reduction <add>, %34, %cst_16 [1] : vector<16x64xf32> to vector<16xf32>
    %36 = vector.shape_cast %35 : vector<16xf32> to vector<16x1xf32>
    %cst_17 = arith.constant 6.400000e+01 : f32
    %37 = vector.broadcast %cst_17 : f32 to vector<16x1xf32>
    %38 = arith.divf %36, %37 : vector<16x1xf32>
    %39 = vector.broadcast %31 : vector<16x1xf32> to vector<16x64xf32>
    %40 = arith.subf %25, %39 : vector<16x64xf32>
    %cst_18 = arith.constant 9.99999974E-6 : f32
    %41 = vector.broadcast %cst_18 : f32 to vector<16x1xf32>
    %42 = arith.addf %38, %41 : vector<16x1xf32>
    %43 = math.rsqrt %42 : vector<16x1xf32>
    %44 = vector.broadcast %43 : vector<16x1xf32> to vector<16x64xf32>
    %45 = arith.mulf %40, %44 : vector<16x64xf32>
    %46 = vector.broadcast %26 : vector<1x64xf32> to vector<16x64xf32>
    %47 = arith.mulf %45, %46 : vector<16x64xf32>
    %48 = vector.broadcast %27 : vector<1x64xf32> to vector<16x64xf32>
    %49 = arith.addf %47, %48 : vector<16x64xf32>
    %50 = tpu.iota {dimensions = array<i32: 1>} : vector<2x8x64xi32>
    %c1_i32 = arith.constant 1 : i32
    %51 = tpu.dynamic_rotate %49 by %c1_i32 dim 0 : vector<16x64xf32>, i32 -> vector<16x64xf32>
    %52 = vector.shape_cast %51 : vector<16x64xf32> to vector<2x8x64xf32>
    %c0_i32 = arith.constant 0 : i32
    %53 = vector.broadcast %c0_i32 : i32 to vector<2x8x64xi32>
    %54 = arith.cmpi eq, %50, %53 : vector<2x8x64xi32>
    %c0_19 = arith.constant 0 : index
    %c0_20 = arith.constant 0 : index
    %c0_21 = arith.constant 0 : index
    %55 = vector.load %arg2[%c0_19, %c0_20, %c0_21] : memref<2x1x64xf32, #tpu.memory_space<vmem>>, vector<2x1x64xf32>
    %56 = vector.shape_cast %55 : vector<2x1x64xf32> to vector<2x1x64xf32>
    %57 = vector.broadcast %56 : vector<2x1x64xf32> to vector<2x8x64xf32>
    %58 = arith.select %54, %57, %52 : vector<2x8x64xi1>, vector<2x8x64xf32>
    %59 = vector.shape_cast %58 : vector<2x8x64xf32> to vector<16x64xf32>
    %60 = arith.truncf %49 : vector<16x64xf32> to vector<16x64xbf16>
    %c0_22 = arith.constant 0 : index
    %c0_23 = arith.constant 0 : index
    %61 = vector.load %arg11[%c0_22, %c0_23] : memref<64x256xbf16, #tpu.memory_space<vmem>>, vector<64x256xbf16>
    %cst_24 = arith.constant dense<0.000000e+00> : vector<16x256xf32>
    %62 = tpu.matmul %60, %61, %cst_24 {dimension_numbers = #tpu.dot_dimension_numbers<[1], [0], [0], [1], [0, 0, 1, 1], [], []>} : vector<16x64xbf16>, vector<64x256xbf16>, vector<16x256xf32> -> vector<16x256xf32>
    %63 = arith.truncf %59 : vector<16x64xf32> to vector<16x64xbf16>
    %c0_25 = arith.constant 0 : index
    %c0_26 = arith.constant 0 : index
    %64 = vector.load %arg12[%c0_25, %c0_26] : memref<64x256xbf16, #tpu.memory_space<vmem>>, vector<64x256xbf16>
    %cst_27 = arith.constant dense<0.000000e+00> : vector<16x256xf32>
    %65 = tpu.matmul %63, %64, %cst_27 {dimension_numbers = #tpu.dot_dimension_numbers<[1], [0], [0], [1], [0, 0, 1, 1], [], []>} : vector<16x64xbf16>, vector<64x256xbf16>, vector<16x256xf32> -> vector<16x256xf32>
    %66 = arith.addf %62, %65 : vector<16x256xf32>
    %67 = vector.extract_strided_slice %66 {offsets = [0, 0], sizes = [16, 64], strides = [1, 1]} : vector<16x256xf32> to vector<16x64xf32>
    %68 = vector.extract_strided_slice %66 {offsets = [0, 64], sizes = [16, 64], strides = [1, 1]} : vector<16x256xf32> to vector<16x64xf32>
    %69 = vector.extract_strided_slice %66 {offsets = [0, 128], sizes = [16, 64], strides = [1, 1]} : vector<16x256xf32> to vector<16x64xf32>
    %70 = vector.extract_strided_slice %66 {offsets = [0, 192], sizes = [16, 64], strides = [1, 1]} : vector<16x256xf32> to vector<16x64xf32>
    %71 = arith.negf %70 : vector<16x64xf32>
    %72 = math.exp %71 : vector<16x64xf32>
    %cst_28 = arith.constant 1.000000e+00 : f32
    %73 = vector.broadcast %cst_28 : f32 to vector<16x64xf32>
    %74 = arith.addf %73, %72 : vector<16x64xf32>
    %75 = arith.divf %73, %74 : vector<16x64xf32>
    %76 = arith.mulf %70, %75 : vector<16x64xf32>
    %77 = vector.shape_cast %67 : vector<16x64xf32> to vector<2x8x2x32xf32>
    %78 = vector.shape_cast %68 : vector<16x64xf32> to vector<2x8x2x32xf32>
    %79 = vector.shape_cast %69 : vector<16x64xf32> to vector<2x8x2x32xf32>
    %c0_29 = arith.constant 0 : index
    %c0_30 = arith.constant 0 : index
    %80 = vector.load %arg14[%c0_29, %c0_30] : memref<2x32xf32, #tpu.memory_space<vmem>>, vector<2x32xf32>
    %81 = vector.shape_cast %80 : vector<2x32xf32> to vector<1x2x32xf32>
    %c0_31 = arith.constant 0 : index
    %c0_32 = arith.constant 0 : index
    %82 = vector.load %arg13[%c0_31, %c0_32] : memref<2x32xf32, #tpu.memory_space<vmem>>, vector<2x32xf32>
    %83 = vector.shape_cast %82 : vector<2x32xf32> to vector<1x2x32x1xf32>
    %c0_33 = arith.constant 0 : index
    %c0_34 = arith.constant 0 : index
    %c0_35 = arith.constant 0 : index
    %c0_36 = arith.constant 0 : index
    %84 = vector.load %arg3[%c0_33, %c0_34, %c0_35, %c0_36] : memref<2x2x32x32xf32, #tpu.memory_space<vmem>>, vector<2x2x32x32xf32>
    %85 = vector.extract_strided_slice %77 {offsets = [0, 0, 0, 0], sizes = [2, 1, 2, 32], strides = [1, 1, 1, 1]} : vector<2x8x2x32xf32> to vector<2x1x2x32xf32>
    %86 = vector.shape_cast %85 : vector<2x1x2x32xf32> to vector<2x2x32xf32>
    %87 = vector.extract_strided_slice %78 {offsets = [0, 0, 0, 0], sizes = [2, 1, 2, 32], strides = [1, 1, 1, 1]} : vector<2x8x2x32xf32> to vector<2x1x2x32xf32>
    %88 = vector.shape_cast %87 : vector<2x1x2x32xf32> to vector<2x2x32xf32>
    %89 = vector.extract_strided_slice %79 {offsets = [0, 0, 0, 0], sizes = [2, 1, 2, 32], strides = [1, 1, 1, 1]} : vector<2x8x2x32xf32> to vector<2x1x2x32xf32>
    %90 = vector.shape_cast %89 : vector<2x1x2x32xf32> to vector<2x2x32xf32>
    %91 = vector.broadcast %81 : vector<1x2x32xf32> to vector<2x2x32xf32>
    %92 = arith.mulf %86, %91 : vector<2x2x32xf32>
    %93 = arith.mulf %92, %88 : vector<2x2x32xf32>
    %cst_37 = arith.constant dense<0.000000e+00> : vector<2x2xf32>
    %94 = vector.multi_reduction <add>, %93, %cst_37 [2] : vector<2x2x32xf32> to vector<2x2xf32>
    %95 = vector.shape_cast %94 : vector<2x2xf32> to vector<2x2x1xf32>
    %96 = vector.shape_cast %86 : vector<2x2x32xf32> to vector<2x2x32x1xf32>
    %97 = vector.broadcast %96 : vector<2x2x32x1xf32> to vector<2x2x32x32xf32>
    %98 = arith.mulf %97, %84 : vector<2x2x32x32xf32>
    %cst_38 = arith.constant dense<0.000000e+00> : vector<2x2x32xf32>
    %99 = vector.multi_reduction <add>, %98, %cst_38 [2] : vector<2x2x32x32xf32> to vector<2x2x32xf32>
    %100 = vector.broadcast %95 : vector<2x2x1xf32> to vector<2x2x32xf32>
    %101 = arith.mulf %100, %90 : vector<2x2x32xf32>
    %102 = arith.addf %101, %99 : vector<2x2x32xf32>
    %cst_39 = arith.constant dense<0.000000e+00> : vector<2x2xf32>
    %103 = vector.multi_reduction <add>, %102, %cst_39 [2] : vector<2x2x32xf32> to vector<2x2xf32>
    %104 = vector.shape_cast %103 : vector<2x2xf32> to vector<2x2x1xf32>
    %cst_40 = arith.constant 3.200000e+01 : f32
    %105 = vector.broadcast %cst_40 : f32 to vector<2x2x1xf32>
    %106 = arith.divf %104, %105 : vector<2x2x1xf32>
    %107 = vector.broadcast %106 : vector<2x2x1xf32> to vector<2x2x32xf32>
    %108 = arith.subf %102, %107 : vector<2x2x32xf32>
    %109 = arith.mulf %108, %108 : vector<2x2x32xf32>
    %cst_41 = arith.constant dense<0.000000e+00> : vector<2x2xf32>
    %110 = vector.multi_reduction <add>, %109, %cst_41 [2] : vector<2x2x32xf32> to vector<2x2xf32>
    %111 = vector.shape_cast %110 : vector<2x2xf32> to vector<2x2x1xf32>
    %cst_42 = arith.constant 3.200000e+01 : f32
    %112 = vector.broadcast %cst_42 : f32 to vector<2x2x1xf32>
    %113 = arith.divf %111, %112 : vector<2x2x1xf32>
    %114 = vector.broadcast %106 : vector<2x2x1xf32> to vector<2x2x32xf32>
    %115 = arith.subf %102, %114 : vector<2x2x32xf32>
    %cst_43 = arith.constant 6.400000e-04 : f32
    %116 = vector.broadcast %cst_43 : f32 to vector<2x2x1xf32>
    %117 = arith.addf %113, %116 : vector<2x2x1xf32>
    %118 = math.rsqrt %117 : vector<2x2x1xf32>
    %119 = vector.broadcast %118 : vector<2x2x1xf32> to vector<2x2x32xf32>
    %120 = arith.mulf %115, %119 : vector<2x2x32xf32>
    %121 = vector.shape_cast %120 : vector<2x2x32xf32> to vector<2x1x64xf32>
    %122 = vector.broadcast %83 : vector<1x2x32x1xf32> to vector<2x2x32x32xf32>
    %123 = arith.mulf %122, %84 : vector<2x2x32x32xf32>
    %124 = vector.shape_cast %88 : vector<2x2x32xf32> to vector<2x2x32x1xf32>
    %125 = vector.shape_cast %90 : vector<2x2x32xf32> to vector<2x2x1x32xf32>
    %126 = vector.broadcast %124 : vector<2x2x32x1xf32> to vector<2x2x32x32xf32>
    %127 = vector.broadcast %125 : vector<2x2x1x32xf32> to vector<2x2x32x32xf32>
    %128 = arith.mulf %126, %127 : vector<2x2x32x32xf32>
    %129 = arith.addf %123, %128 : vector<2x2x32x32xf32>
    %130 = vector.extract_strided_slice %77 {offsets = [0, 1, 0, 0], sizes = [2, 1, 2, 32], strides = [1, 1, 1, 1]} : vector<2x8x2x32xf32> to vector<2x1x2x32xf32>
    %131 = vector.shape_cast %130 : vector<2x1x2x32xf32> to vector<2x2x32xf32>
    %132 = vector.extract_strided_slice %78 {offsets = [0, 1, 0, 0], sizes = [2, 1, 2, 32], strides = [1, 1, 1, 1]} : vector<2x8x2x32xf32> to vector<2x1x2x32xf32>
    %133 = vector.shape_cast %132 : vector<2x1x2x32xf32> to vector<2x2x32xf32>
    %134 = vector.extract_strided_slice %79 {offsets = [0, 1, 0, 0], sizes = [2, 1, 2, 32], strides = [1, 1, 1, 1]} : vector<2x8x2x32xf32> to vector<2x1x2x32xf32>
    %135 = vector.shape_cast %134 : vector<2x1x2x32xf32> to vector<2x2x32xf32>
    %136 = vector.broadcast %81 : vector<1x2x32xf32> to vector<2x2x32xf32>
    %137 = arith.mulf %131, %136 : vector<2x2x32xf32>
    %138 = arith.mulf %137, %133 : vector<2x2x32xf32>
    %cst_44 = arith.constant dense<0.000000e+00> : vector<2x2xf32>
    %139 = vector.multi_reduction <add>, %138, %cst_44 [2] : vector<2x2x32xf32> to vector<2x2xf32>
    %140 = vector.shape_cast %139 : vector<2x2xf32> to vector<2x2x1xf32>
    %141 = vector.shape_cast %131 : vector<2x2x32xf32> to vector<2x2x32x1xf32>
    %142 = vector.broadcast %141 : vector<2x2x32x1xf32> to vector<2x2x32x32xf32>
    %143 = arith.mulf %142, %129 : vector<2x2x32x32xf32>
    %cst_45 = arith.constant dense<0.000000e+00> : vector<2x2x32xf32>
    %144 = vector.multi_reduction <add>, %143, %cst_45 [2] : vector<2x2x32x32xf32> to vector<2x2x32xf32>
    %145 = vector.broadcast %140 : vector<2x2x1xf32> to vector<2x2x32xf32>
    %146 = arith.mulf %145, %135 : vector<2x2x32xf32>
    %147 = arith.addf %146, %144 : vector<2x2x32xf32>
    %cst_46 = arith.constant dense<0.000000e+00> : vector<2x2xf32>
    %148 = vector.multi_reduction <add>, %147, %cst_46 [2] : vector<2x2x32xf32> to vector<2x2xf32>
    %149 = vector.shape_cast %148 : vector<2x2xf32> to vector<2x2x1xf32>
    %cst_47 = arith.constant 3.200000e+01 : f32
    %150 = vector.broadcast %cst_47 : f32 to vector<2x2x1xf32>
    %151 = arith.divf %149, %150 : vector<2x2x1xf32>
    %152 = vector.broadcast %151 : vector<2x2x1xf32> to vector<2x2x32xf32>
    %153 = arith.subf %147, %152 : vector<2x2x32xf32>
    %154 = arith.mulf %153, %153 : vector<2x2x32xf32>
    %cst_48 = arith.constant dense<0.000000e+00> : vector<2x2xf32>
    %155 = vector.multi_reduction <add>, %154, %cst_48 [2] : vector<2x2x32xf32> to vector<2x2xf32>
    %156 = vector.shape_cast %155 : vector<2x2xf32> to vector<2x2x1xf32>
    %cst_49 = arith.constant 3.200000e+01 : f32
    %157 = vector.broadcast %cst_49 : f32 to vector<2x2x1xf32>
    %158 = arith.divf %156, %157 : vector<2x2x1xf32>
    %159 = vector.broadcast %151 : vector<2x2x1xf32> to vector<2x2x32xf32>
    %160 = arith.subf %147, %159 : vector<2x2x32xf32>
    %cst_50 = arith.constant 6.400000e-04 : f32
    %161 = vector.broadcast %cst_50 : f32 to vector<2x2x1xf32>
    %162 = arith.addf %158, %161 : vector<2x2x1xf32>
    %163 = math.rsqrt %162 : vector<2x2x1xf32>
    %164 = vector.broadcast %163 : vector<2x2x1xf32> to vector<2x2x32xf32>
    %165 = arith.mulf %160, %164 : vector<2x2x32xf32>
    %166 = vector.shape_cast %165 : vector<2x2x32xf32> to vector<2x1x64xf32>
    %167 = vector.broadcast %83 : vector<1x2x32x1xf32> to vector<2x2x32x32xf32>
    %168 = arith.mulf %167, %129 : vector<2x2x32x32xf32>
    %169 = vector.shape_cast %133 : vector<2x2x32xf32> to vector<2x2x32x1xf32>
    %170 = vector.shape_cast %135 : vector<2x2x32xf32> to vector<2x2x1x32xf32>
    %171 = vector.broadcast %169 : vector<2x2x32x1xf32> to vector<2x2x32x32xf32>
    %172 = vector.broadcast %170 : vector<2x2x1x32xf32> to vector<2x2x32x32xf32>
    %173 = arith.mulf %171, %172 : vector<2x2x32x32xf32>
    %174 = arith.addf %168, %173 : vector<2x2x32x32xf32>
    %175 = vector.extract_strided_slice %77 {offsets = [0, 2, 0, 0], sizes = [2, 1, 2, 32], strides = [1, 1, 1, 1]} : vector<2x8x2x32xf32> to vector<2x1x2x32xf32>
    %176 = vector.shape_cast %175 : vector<2x1x2x32xf32> to vector<2x2x32xf32>
    %177 = vector.extract_strided_slice %78 {offsets = [0, 2, 0, 0], sizes = [2, 1, 2, 32], strides = [1, 1, 1, 1]} : vector<2x8x2x32xf32> to vector<2x1x2x32xf32>
    %178 = vector.shape_cast %177 : vector<2x1x2x32xf32> to vector<2x2x32xf32>
    %179 = vector.extract_strided_slice %79 {offsets = [0, 2, 0, 0], sizes = [2, 1, 2, 32], strides = [1, 1, 1, 1]} : vector<2x8x2x32xf32> to vector<2x1x2x32xf32>
    %180 = vector.shape_cast %179 : vector<2x1x2x32xf32> to vector<2x2x32xf32>
    %181 = vector.broadcast %81 : vector<1x2x32xf32> to vector<2x2x32xf32>
    %182 = arith.mulf %176, %181 : vector<2x2x32xf32>
    %183 = arith.mulf %182, %178 : vector<2x2x32xf32>
    %cst_51 = arith.constant dense<0.000000e+00> : vector<2x2xf32>
    %184 = vector.multi_reduction <add>, %183, %cst_51 [2] : vector<2x2x32xf32> to vector<2x2xf32>
    %185 = vector.shape_cast %184 : vector<2x2xf32> to vector<2x2x1xf32>
    %186 = vector.shape_cast %176 : vector<2x2x32xf32> to vector<2x2x32x1xf32>
    %187 = vector.broadcast %186 : vector<2x2x32x1xf32> to vector<2x2x32x32xf32>
    %188 = arith.mulf %187, %174 : vector<2x2x32x32xf32>
    %cst_52 = arith.constant dense<0.000000e+00> : vector<2x2x32xf32>
    %189 = vector.multi_reduction <add>, %188, %cst_52 [2] : vector<2x2x32x32xf32> to vector<2x2x32xf32>
    %190 = vector.broadcast %185 : vector<2x2x1xf32> to vector<2x2x32xf32>
    %191 = arith.mulf %190, %180 : vector<2x2x32xf32>
    %192 = arith.addf %191, %189 : vector<2x2x32xf32>
    %cst_53 = arith.constant dense<0.000000e+00> : vector<2x2xf32>
    %193 = vector.multi_reduction <add>, %192, %cst_53 [2] : vector<2x2x32xf32> to vector<2x2xf32>
    %194 = vector.shape_cast %193 : vector<2x2xf32> to vector<2x2x1xf32>
    %cst_54 = arith.constant 3.200000e+01 : f32
    %195 = vector.broadcast %cst_54 : f32 to vector<2x2x1xf32>
    %196 = arith.divf %194, %195 : vector<2x2x1xf32>
    %197 = vector.broadcast %196 : vector<2x2x1xf32> to vector<2x2x32xf32>
    %198 = arith.subf %192, %197 : vector<2x2x32xf32>
    %199 = arith.mulf %198, %198 : vector<2x2x32xf32>
    %cst_55 = arith.constant dense<0.000000e+00> : vector<2x2xf32>
    %200 = vector.multi_reduction <add>, %199, %cst_55 [2] : vector<2x2x32xf32> to vector<2x2xf32>
    %201 = vector.shape_cast %200 : vector<2x2xf32> to vector<2x2x1xf32>
    %cst_56 = arith.constant 3.200000e+01 : f32
    %202 = vector.broadcast %cst_56 : f32 to vector<2x2x1xf32>
    %203 = arith.divf %201, %202 : vector<2x2x1xf32>
    %204 = vector.broadcast %196 : vector<2x2x1xf32> to vector<2x2x32xf32>
    %205 = arith.subf %192, %204 : vector<2x2x32xf32>
    %cst_57 = arith.constant 6.400000e-04 : f32
    %206 = vector.broadcast %cst_57 : f32 to vector<2x2x1xf32>
    %207 = arith.addf %203, %206 : vector<2x2x1xf32>
    %208 = math.rsqrt %207 : vector<2x2x1xf32>
    %209 = vector.broadcast %208 : vector<2x2x1xf32> to vector<2x2x32xf32>
    %210 = arith.mulf %205, %209 : vector<2x2x32xf32>
    %211 = vector.shape_cast %210 : vector<2x2x32xf32> to vector<2x1x64xf32>
    %212 = vector.broadcast %83 : vector<1x2x32x1xf32> to vector<2x2x32x32xf32>
    %213 = arith.mulf %212, %174 : vector<2x2x32x32xf32>
    %214 = vector.shape_cast %178 : vector<2x2x32xf32> to vector<2x2x32x1xf32>
    %215 = vector.shape_cast %180 : vector<2x2x32xf32> to vector<2x2x1x32xf32>
    %216 = vector.broadcast %214 : vector<2x2x32x1xf32> to vector<2x2x32x32xf32>
    %217 = vector.broadcast %215 : vector<2x2x1x32xf32> to vector<2x2x32x32xf32>
    %218 = arith.mulf %216, %217 : vector<2x2x32x32xf32>
    %219 = arith.addf %213, %218 : vector<2x2x32x32xf32>
    %220 = vector.extract_strided_slice %77 {offsets = [0, 3, 0, 0], sizes = [2, 1, 2, 32], strides = [1, 1, 1, 1]} : vector<2x8x2x32xf32> to vector<2x1x2x32xf32>
    %221 = vector.shape_cast %220 : vector<2x1x2x32xf32> to vector<2x2x32xf32>
    %222 = vector.extract_strided_slice %78 {offsets = [0, 3, 0, 0], sizes = [2, 1, 2, 32], strides = [1, 1, 1, 1]} : vector<2x8x2x32xf32> to vector<2x1x2x32xf32>
    %223 = vector.shape_cast %222 : vector<2x1x2x32xf32> to vector<2x2x32xf32>
    %224 = vector.extract_strided_slice %79 {offsets = [0, 3, 0, 0], sizes = [2, 1, 2, 32], strides = [1, 1, 1, 1]} : vector<2x8x2x32xf32> to vector<2x1x2x32xf32>
    %225 = vector.shape_cast %224 : vector<2x1x2x32xf32> to vector<2x2x32xf32>
    %226 = vector.broadcast %81 : vector<1x2x32xf32> to vector<2x2x32xf32>
    %227 = arith.mulf %221, %226 : vector<2x2x32xf32>
    %228 = arith.mulf %227, %223 : vector<2x2x32xf32>
    %cst_58 = arith.constant dense<0.000000e+00> : vector<2x2xf32>
    %229 = vector.multi_reduction <add>, %228, %cst_58 [2] : vector<2x2x32xf32> to vector<2x2xf32>
    %230 = vector.shape_cast %229 : vector<2x2xf32> to vector<2x2x1xf32>
    %231 = vector.shape_cast %221 : vector<2x2x32xf32> to vector<2x2x32x1xf32>
    %232 = vector.broadcast %231 : vector<2x2x32x1xf32> to vector<2x2x32x32xf32>
    %233 = arith.mulf %232, %219 : vector<2x2x32x32xf32>
    %cst_59 = arith.constant dense<0.000000e+00> : vector<2x2x32xf32>
    %234 = vector.multi_reduction <add>, %233, %cst_59 [2] : vector<2x2x32x32xf32> to vector<2x2x32xf32>
    %235 = vector.broadcast %230 : vector<2x2x1xf32> to vector<2x2x32xf32>
    %236 = arith.mulf %235, %225 : vector<2x2x32xf32>
    %237 = arith.addf %236, %234 : vector<2x2x32xf32>
    %cst_60 = arith.constant dense<0.000000e+00> : vector<2x2xf32>
    %238 = vector.multi_reduction <add>, %237, %cst_60 [2] : vector<2x2x32xf32> to vector<2x2xf32>
    %239 = vector.shape_cast %238 : vector<2x2xf32> to vector<2x2x1xf32>
    %cst_61 = arith.constant 3.200000e+01 : f32
    %240 = vector.broadcast %cst_61 : f32 to vector<2x2x1xf32>
    %241 = arith.divf %239, %240 : vector<2x2x1xf32>
    %242 = vector.broadcast %241 : vector<2x2x1xf32> to vector<2x2x32xf32>
    %243 = arith.subf %237, %242 : vector<2x2x32xf32>
    %244 = arith.mulf %243, %243 : vector<2x2x32xf32>
    %cst_62 = arith.constant dense<0.000000e+00> : vector<2x2xf32>
    %245 = vector.multi_reduction <add>, %244, %cst_62 [2] : vector<2x2x32xf32> to vector<2x2xf32>
    %246 = vector.shape_cast %245 : vector<2x2xf32> to vector<2x2x1xf32>
    %cst_63 = arith.constant 3.200000e+01 : f32
    %247 = vector.broadcast %cst_63 : f32 to vector<2x2x1xf32>
    %248 = arith.divf %246, %247 : vector<2x2x1xf32>
    %249 = vector.broadcast %241 : vector<2x2x1xf32> to vector<2x2x32xf32>
    %250 = arith.subf %237, %249 : vector<2x2x32xf32>
    %cst_64 = arith.constant 6.400000e-04 : f32
    %251 = vector.broadcast %cst_64 : f32 to vector<2x2x1xf32>
    %252 = arith.addf %248, %251 : vector<2x2x1xf32>
    %253 = math.rsqrt %252 : vector<2x2x1xf32>
    %254 = vector.broadcast %253 : vector<2x2x1xf32> to vector<2x2x32xf32>
    %255 = arith.mulf %250, %254 : vector<2x2x32xf32>
    %256 = vector.shape_cast %255 : vector<2x2x32xf32> to vector<2x1x64xf32>
    %257 = vector.broadcast %83 : vector<1x2x32x1xf32> to vector<2x2x32x32xf32>
    %258 = arith.mulf %257, %219 : vector<2x2x32x32xf32>
    %259 = vector.shape_cast %223 : vector<2x2x32xf32> to vector<2x2x32x1xf32>
    %260 = vector.shape_cast %225 : vector<2x2x32xf32> to vector<2x2x1x32xf32>
    %261 = vector.broadcast %259 : vector<2x2x32x1xf32> to vector<2x2x32x32xf32>
    %262 = vector.broadcast %260 : vector<2x2x1x32xf32> to vector<2x2x32x32xf32>
    %263 = arith.mulf %261, %262 : vector<2x2x32x32xf32>
    %264 = arith.addf %258, %263 : vector<2x2x32x32xf32>
    %265 = vector.extract_strided_slice %77 {offsets = [0, 4, 0, 0], sizes = [2, 1, 2, 32], strides = [1, 1, 1, 1]} : vector<2x8x2x32xf32> to vector<2x1x2x32xf32>
    %266 = vector.shape_cast %265 : vector<2x1x2x32xf32> to vector<2x2x32xf32>
    %267 = vector.extract_strided_slice %78 {offsets = [0, 4, 0, 0], sizes = [2, 1, 2, 32], strides = [1, 1, 1, 1]} : vector<2x8x2x32xf32> to vector<2x1x2x32xf32>
    %268 = vector.shape_cast %267 : vector<2x1x2x32xf32> to vector<2x2x32xf32>
    %269 = vector.extract_strided_slice %79 {offsets = [0, 4, 0, 0], sizes = [2, 1, 2, 32], strides = [1, 1, 1, 1]} : vector<2x8x2x32xf32> to vector<2x1x2x32xf32>
    %270 = vector.shape_cast %269 : vector<2x1x2x32xf32> to vector<2x2x32xf32>
    %271 = vector.broadcast %81 : vector<1x2x32xf32> to vector<2x2x32xf32>
    %272 = arith.mulf %266, %271 : vector<2x2x32xf32>
    %273 = arith.mulf %272, %268 : vector<2x2x32xf32>
    %cst_65 = arith.constant dense<0.000000e+00> : vector<2x2xf32>
    %274 = vector.multi_reduction <add>, %273, %cst_65 [2] : vector<2x2x32xf32> to vector<2x2xf32>
    %275 = vector.shape_cast %274 : vector<2x2xf32> to vector<2x2x1xf32>
    %276 = vector.shape_cast %266 : vector<2x2x32xf32> to vector<2x2x32x1xf32>
    %277 = vector.broadcast %276 : vector<2x2x32x1xf32> to vector<2x2x32x32xf32>
    %278 = arith.mulf %277, %264 : vector<2x2x32x32xf32>
    %cst_66 = arith.constant dense<0.000000e+00> : vector<2x2x32xf32>
    %279 = vector.multi_reduction <add>, %278, %cst_66 [2] : vector<2x2x32x32xf32> to vector<2x2x32xf32>
    %280 = vector.broadcast %275 : vector<2x2x1xf32> to vector<2x2x32xf32>
    %281 = arith.mulf %280, %270 : vector<2x2x32xf32>
    %282 = arith.addf %281, %279 : vector<2x2x32xf32>
    %cst_67 = arith.constant dense<0.000000e+00> : vector<2x2xf32>
    %283 = vector.multi_reduction <add>, %282, %cst_67 [2] : vector<2x2x32xf32> to vector<2x2xf32>
    %284 = vector.shape_cast %283 : vector<2x2xf32> to vector<2x2x1xf32>
    %cst_68 = arith.constant 3.200000e+01 : f32
    %285 = vector.broadcast %cst_68 : f32 to vector<2x2x1xf32>
    %286 = arith.divf %284, %285 : vector<2x2x1xf32>
    %287 = vector.broadcast %286 : vector<2x2x1xf32> to vector<2x2x32xf32>
    %288 = arith.subf %282, %287 : vector<2x2x32xf32>
    %289 = arith.mulf %288, %288 : vector<2x2x32xf32>
    %cst_69 = arith.constant dense<0.000000e+00> : vector<2x2xf32>
    %290 = vector.multi_reduction <add>, %289, %cst_69 [2] : vector<2x2x32xf32> to vector<2x2xf32>
    %291 = vector.shape_cast %290 : vector<2x2xf32> to vector<2x2x1xf32>
    %cst_70 = arith.constant 3.200000e+01 : f32
    %292 = vector.broadcast %cst_70 : f32 to vector<2x2x1xf32>
    %293 = arith.divf %291, %292 : vector<2x2x1xf32>
    %294 = vector.broadcast %286 : vector<2x2x1xf32> to vector<2x2x32xf32>
    %295 = arith.subf %282, %294 : vector<2x2x32xf32>
    %cst_71 = arith.constant 6.400000e-04 : f32
    %296 = vector.broadcast %cst_71 : f32 to vector<2x2x1xf32>
    %297 = arith.addf %293, %296 : vector<2x2x1xf32>
    %298 = math.rsqrt %297 : vector<2x2x1xf32>
    %299 = vector.broadcast %298 : vector<2x2x1xf32> to vector<2x2x32xf32>
    %300 = arith.mulf %295, %299 : vector<2x2x32xf32>
    %301 = vector.shape_cast %300 : vector<2x2x32xf32> to vector<2x1x64xf32>
    %302 = vector.broadcast %83 : vector<1x2x32x1xf32> to vector<2x2x32x32xf32>
    %303 = arith.mulf %302, %264 : vector<2x2x32x32xf32>
    %304 = vector.shape_cast %268 : vector<2x2x32xf32> to vector<2x2x32x1xf32>
    %305 = vector.shape_cast %270 : vector<2x2x32xf32> to vector<2x2x1x32xf32>
    %306 = vector.broadcast %304 : vector<2x2x32x1xf32> to vector<2x2x32x32xf32>
    %307 = vector.broadcast %305 : vector<2x2x1x32xf32> to vector<2x2x32x32xf32>
    %308 = arith.mulf %306, %307 : vector<2x2x32x32xf32>
    %309 = arith.addf %303, %308 : vector<2x2x32x32xf32>
    %310 = vector.extract_strided_slice %77 {offsets = [0, 5, 0, 0], sizes = [2, 1, 2, 32], strides = [1, 1, 1, 1]} : vector<2x8x2x32xf32> to vector<2x1x2x32xf32>
    %311 = vector.shape_cast %310 : vector<2x1x2x32xf32> to vector<2x2x32xf32>
    %312 = vector.extract_strided_slice %78 {offsets = [0, 5, 0, 0], sizes = [2, 1, 2, 32], strides = [1, 1, 1, 1]} : vector<2x8x2x32xf32> to vector<2x1x2x32xf32>
    %313 = vector.shape_cast %312 : vector<2x1x2x32xf32> to vector<2x2x32xf32>
    %314 = vector.extract_strided_slice %79 {offsets = [0, 5, 0, 0], sizes = [2, 1, 2, 32], strides = [1, 1, 1, 1]} : vector<2x8x2x32xf32> to vector<2x1x2x32xf32>
    %315 = vector.shape_cast %314 : vector<2x1x2x32xf32> to vector<2x2x32xf32>
    %316 = vector.broadcast %81 : vector<1x2x32xf32> to vector<2x2x32xf32>
    %317 = arith.mulf %311, %316 : vector<2x2x32xf32>
    %318 = arith.mulf %317, %313 : vector<2x2x32xf32>
    %cst_72 = arith.constant dense<0.000000e+00> : vector<2x2xf32>
    %319 = vector.multi_reduction <add>, %318, %cst_72 [2] : vector<2x2x32xf32> to vector<2x2xf32>
    %320 = vector.shape_cast %319 : vector<2x2xf32> to vector<2x2x1xf32>
    %321 = vector.shape_cast %311 : vector<2x2x32xf32> to vector<2x2x32x1xf32>
    %322 = vector.broadcast %321 : vector<2x2x32x1xf32> to vector<2x2x32x32xf32>
    %323 = arith.mulf %322, %309 : vector<2x2x32x32xf32>
    %cst_73 = arith.constant dense<0.000000e+00> : vector<2x2x32xf32>
    %324 = vector.multi_reduction <add>, %323, %cst_73 [2] : vector<2x2x32x32xf32> to vector<2x2x32xf32>
    %325 = vector.broadcast %320 : vector<2x2x1xf32> to vector<2x2x32xf32>
    %326 = arith.mulf %325, %315 : vector<2x2x32xf32>
    %327 = arith.addf %326, %324 : vector<2x2x32xf32>
    %cst_74 = arith.constant dense<0.000000e+00> : vector<2x2xf32>
    %328 = vector.multi_reduction <add>, %327, %cst_74 [2] : vector<2x2x32xf32> to vector<2x2xf32>
    %329 = vector.shape_cast %328 : vector<2x2xf32> to vector<2x2x1xf32>
    %cst_75 = arith.constant 3.200000e+01 : f32
    %330 = vector.broadcast %cst_75 : f32 to vector<2x2x1xf32>
    %331 = arith.divf %329, %330 : vector<2x2x1xf32>
    %332 = vector.broadcast %331 : vector<2x2x1xf32> to vector<2x2x32xf32>
    %333 = arith.subf %327, %332 : vector<2x2x32xf32>
    %334 = arith.mulf %333, %333 : vector<2x2x32xf32>
    %cst_76 = arith.constant dense<0.000000e+00> : vector<2x2xf32>
    %335 = vector.multi_reduction <add>, %334, %cst_76 [2] : vector<2x2x32xf32> to vector<2x2xf32>
    %336 = vector.shape_cast %335 : vector<2x2xf32> to vector<2x2x1xf32>
    %cst_77 = arith.constant 3.200000e+01 : f32
    %337 = vector.broadcast %cst_77 : f32 to vector<2x2x1xf32>
    %338 = arith.divf %336, %337 : vector<2x2x1xf32>
    %339 = vector.broadcast %331 : vector<2x2x1xf32> to vector<2x2x32xf32>
    %340 = arith.subf %327, %339 : vector<2x2x32xf32>
    %cst_78 = arith.constant 6.400000e-04 : f32
    %341 = vector.broadcast %cst_78 : f32 to vector<2x2x1xf32>
    %342 = arith.addf %338, %341 : vector<2x2x1xf32>
    %343 = math.rsqrt %342 : vector<2x2x1xf32>
    %344 = vector.broadcast %343 : vector<2x2x1xf32> to vector<2x2x32xf32>
    %345 = arith.mulf %340, %344 : vector<2x2x32xf32>
    %346 = vector.shape_cast %345 : vector<2x2x32xf32> to vector<2x1x64xf32>
    %347 = vector.broadcast %83 : vector<1x2x32x1xf32> to vector<2x2x32x32xf32>
    %348 = arith.mulf %347, %309 : vector<2x2x32x32xf32>
    %349 = vector.shape_cast %313 : vector<2x2x32xf32> to vector<2x2x32x1xf32>
    %350 = vector.shape_cast %315 : vector<2x2x32xf32> to vector<2x2x1x32xf32>
    %351 = vector.broadcast %349 : vector<2x2x32x1xf32> to vector<2x2x32x32xf32>
    %352 = vector.broadcast %350 : vector<2x2x1x32xf32> to vector<2x2x32x32xf32>
    %353 = arith.mulf %351, %352 : vector<2x2x32x32xf32>
    %354 = arith.addf %348, %353 : vector<2x2x32x32xf32>
    %355 = vector.extract_strided_slice %77 {offsets = [0, 6, 0, 0], sizes = [2, 1, 2, 32], strides = [1, 1, 1, 1]} : vector<2x8x2x32xf32> to vector<2x1x2x32xf32>
    %356 = vector.shape_cast %355 : vector<2x1x2x32xf32> to vector<2x2x32xf32>
    %357 = vector.extract_strided_slice %78 {offsets = [0, 6, 0, 0], sizes = [2, 1, 2, 32], strides = [1, 1, 1, 1]} : vector<2x8x2x32xf32> to vector<2x1x2x32xf32>
    %358 = vector.shape_cast %357 : vector<2x1x2x32xf32> to vector<2x2x32xf32>
    %359 = vector.extract_strided_slice %79 {offsets = [0, 6, 0, 0], sizes = [2, 1, 2, 32], strides = [1, 1, 1, 1]} : vector<2x8x2x32xf32> to vector<2x1x2x32xf32>
    %360 = vector.shape_cast %359 : vector<2x1x2x32xf32> to vector<2x2x32xf32>
    %361 = vector.broadcast %81 : vector<1x2x32xf32> to vector<2x2x32xf32>
    %362 = arith.mulf %356, %361 : vector<2x2x32xf32>
    %363 = arith.mulf %362, %358 : vector<2x2x32xf32>
    %cst_79 = arith.constant dense<0.000000e+00> : vector<2x2xf32>
    %364 = vector.multi_reduction <add>, %363, %cst_79 [2] : vector<2x2x32xf32> to vector<2x2xf32>
    %365 = vector.shape_cast %364 : vector<2x2xf32> to vector<2x2x1xf32>
    %366 = vector.shape_cast %356 : vector<2x2x32xf32> to vector<2x2x32x1xf32>
    %367 = vector.broadcast %366 : vector<2x2x32x1xf32> to vector<2x2x32x32xf32>
    %368 = arith.mulf %367, %354 : vector<2x2x32x32xf32>
    %cst_80 = arith.constant dense<0.000000e+00> : vector<2x2x32xf32>
    %369 = vector.multi_reduction <add>, %368, %cst_80 [2] : vector<2x2x32x32xf32> to vector<2x2x32xf32>
    %370 = vector.broadcast %365 : vector<2x2x1xf32> to vector<2x2x32xf32>
    %371 = arith.mulf %370, %360 : vector<2x2x32xf32>
    %372 = arith.addf %371, %369 : vector<2x2x32xf32>
    %cst_81 = arith.constant dense<0.000000e+00> : vector<2x2xf32>
    %373 = vector.multi_reduction <add>, %372, %cst_81 [2] : vector<2x2x32xf32> to vector<2x2xf32>
    %374 = vector.shape_cast %373 : vector<2x2xf32> to vector<2x2x1xf32>
    %cst_82 = arith.constant 3.200000e+01 : f32
    %375 = vector.broadcast %cst_82 : f32 to vector<2x2x1xf32>
    %376 = arith.divf %374, %375 : vector<2x2x1xf32>
    %377 = vector.broadcast %376 : vector<2x2x1xf32> to vector<2x2x32xf32>
    %378 = arith.subf %372, %377 : vector<2x2x32xf32>
    %379 = arith.mulf %378, %378 : vector<2x2x32xf32>
    %cst_83 = arith.constant dense<0.000000e+00> : vector<2x2xf32>
    %380 = vector.multi_reduction <add>, %379, %cst_83 [2] : vector<2x2x32xf32> to vector<2x2xf32>
    %381 = vector.shape_cast %380 : vector<2x2xf32> to vector<2x2x1xf32>
    %cst_84 = arith.constant 3.200000e+01 : f32
    %382 = vector.broadcast %cst_84 : f32 to vector<2x2x1xf32>
    %383 = arith.divf %381, %382 : vector<2x2x1xf32>
    %384 = vector.broadcast %376 : vector<2x2x1xf32> to vector<2x2x32xf32>
    %385 = arith.subf %372, %384 : vector<2x2x32xf32>
    %cst_85 = arith.constant 6.400000e-04 : f32
    %386 = vector.broadcast %cst_85 : f32 to vector<2x2x1xf32>
    %387 = arith.addf %383, %386 : vector<2x2x1xf32>
    %388 = math.rsqrt %387 : vector<2x2x1xf32>
    %389 = vector.broadcast %388 : vector<2x2x1xf32> to vector<2x2x32xf32>
    %390 = arith.mulf %385, %389 : vector<2x2x32xf32>
    %391 = vector.shape_cast %390 : vector<2x2x32xf32> to vector<2x1x64xf32>
    %392 = vector.broadcast %83 : vector<1x2x32x1xf32> to vector<2x2x32x32xf32>
    %393 = arith.mulf %392, %354 : vector<2x2x32x32xf32>
    %394 = vector.shape_cast %358 : vector<2x2x32xf32> to vector<2x2x32x1xf32>
    %395 = vector.shape_cast %360 : vector<2x2x32xf32> to vector<2x2x1x32xf32>
    %396 = vector.broadcast %394 : vector<2x2x32x1xf32> to vector<2x2x32x32xf32>
    %397 = vector.broadcast %395 : vector<2x2x1x32xf32> to vector<2x2x32x32xf32>
    %398 = arith.mulf %396, %397 : vector<2x2x32x32xf32>
    %399 = arith.addf %393, %398 : vector<2x2x32x32xf32>
    %400 = vector.extract_strided_slice %77 {offsets = [0, 7, 0, 0], sizes = [2, 1, 2, 32], strides = [1, 1, 1, 1]} : vector<2x8x2x32xf32> to vector<2x1x2x32xf32>
    %401 = vector.shape_cast %400 : vector<2x1x2x32xf32> to vector<2x2x32xf32>
    %402 = vector.extract_strided_slice %78 {offsets = [0, 7, 0, 0], sizes = [2, 1, 2, 32], strides = [1, 1, 1, 1]} : vector<2x8x2x32xf32> to vector<2x1x2x32xf32>
    %403 = vector.shape_cast %402 : vector<2x1x2x32xf32> to vector<2x2x32xf32>
    %404 = vector.extract_strided_slice %79 {offsets = [0, 7, 0, 0], sizes = [2, 1, 2, 32], strides = [1, 1, 1, 1]} : vector<2x8x2x32xf32> to vector<2x1x2x32xf32>
    %405 = vector.shape_cast %404 : vector<2x1x2x32xf32> to vector<2x2x32xf32>
    %406 = vector.broadcast %81 : vector<1x2x32xf32> to vector<2x2x32xf32>
    %407 = arith.mulf %401, %406 : vector<2x2x32xf32>
    %408 = arith.mulf %407, %403 : vector<2x2x32xf32>
    %cst_86 = arith.constant dense<0.000000e+00> : vector<2x2xf32>
    %409 = vector.multi_reduction <add>, %408, %cst_86 [2] : vector<2x2x32xf32> to vector<2x2xf32>
    %410 = vector.shape_cast %409 : vector<2x2xf32> to vector<2x2x1xf32>
    %411 = vector.shape_cast %401 : vector<2x2x32xf32> to vector<2x2x32x1xf32>
    %412 = vector.broadcast %411 : vector<2x2x32x1xf32> to vector<2x2x32x32xf32>
    %413 = arith.mulf %412, %399 : vector<2x2x32x32xf32>
    %cst_87 = arith.constant dense<0.000000e+00> : vector<2x2x32xf32>
    %414 = vector.multi_reduction <add>, %413, %cst_87 [2] : vector<2x2x32x32xf32> to vector<2x2x32xf32>
    %415 = vector.broadcast %410 : vector<2x2x1xf32> to vector<2x2x32xf32>
    %416 = arith.mulf %415, %405 : vector<2x2x32xf32>
    %417 = arith.addf %416, %414 : vector<2x2x32xf32>
    %cst_88 = arith.constant dense<0.000000e+00> : vector<2x2xf32>
    %418 = vector.multi_reduction <add>, %417, %cst_88 [2] : vector<2x2x32xf32> to vector<2x2xf32>
    %419 = vector.shape_cast %418 : vector<2x2xf32> to vector<2x2x1xf32>
    %cst_89 = arith.constant 3.200000e+01 : f32
    %420 = vector.broadcast %cst_89 : f32 to vector<2x2x1xf32>
    %421 = arith.divf %419, %420 : vector<2x2x1xf32>
    %422 = vector.broadcast %421 : vector<2x2x1xf32> to vector<2x2x32xf32>
    %423 = arith.subf %417, %422 : vector<2x2x32xf32>
    %424 = arith.mulf %423, %423 : vector<2x2x32xf32>
    %cst_90 = arith.constant dense<0.000000e+00> : vector<2x2xf32>
    %425 = vector.multi_reduction <add>, %424, %cst_90 [2] : vector<2x2x32xf32> to vector<2x2xf32>
    %426 = vector.shape_cast %425 : vector<2x2xf32> to vector<2x2x1xf32>
    %cst_91 = arith.constant 3.200000e+01 : f32
    %427 = vector.broadcast %cst_91 : f32 to vector<2x2x1xf32>
    %428 = arith.divf %426, %427 : vector<2x2x1xf32>
    %429 = vector.broadcast %421 : vector<2x2x1xf32> to vector<2x2x32xf32>
    %430 = arith.subf %417, %429 : vector<2x2x32xf32>
    %cst_92 = arith.constant 6.400000e-04 : f32
    %431 = vector.broadcast %cst_92 : f32 to vector<2x2x1xf32>
    %432 = arith.addf %428, %431 : vector<2x2x1xf32>
    %433 = math.rsqrt %432 : vector<2x2x1xf32>
    %434 = vector.broadcast %433 : vector<2x2x1xf32> to vector<2x2x32xf32>
    %435 = arith.mulf %430, %434 : vector<2x2x32xf32>
    %436 = vector.shape_cast %435 : vector<2x2x32xf32> to vector<2x1x64xf32>
    %437 = vector.broadcast %83 : vector<1x2x32x1xf32> to vector<2x2x32x32xf32>
    %438 = arith.mulf %437, %399 : vector<2x2x32x32xf32>
    %439 = vector.shape_cast %403 : vector<2x2x32xf32> to vector<2x2x32x1xf32>
    %440 = vector.shape_cast %405 : vector<2x2x32xf32> to vector<2x2x1x32xf32>
    %441 = vector.broadcast %439 : vector<2x2x32x1xf32> to vector<2x2x32x32xf32>
    %442 = vector.broadcast %440 : vector<2x2x1x32xf32> to vector<2x2x32x32xf32>
    %443 = arith.mulf %441, %442 : vector<2x2x32x32xf32>
    %444 = arith.addf %438, %443 : vector<2x2x32x32xf32>
    %445 = tpu.concatenate %121, %166, %211, %256, %301, %346, %391, %436 in 1 : vector<2x1x64xf32>, vector<2x1x64xf32>, vector<2x1x64xf32>, vector<2x1x64xf32>, vector<2x1x64xf32>, vector<2x1x64xf32>, vector<2x1x64xf32>, vector<2x1x64xf32> -> vector<2x8x64xf32>
    %446 = vector.shape_cast %445 : vector<2x8x64xf32> to vector<16x64xf32>
    %c0_93 = arith.constant 0 : index
    %c0_94 = arith.constant 0 : index
    %447 = vector.load %arg16[%c0_93, %c0_94] : memref<1x64xf32, #tpu.memory_space<vmem>>, vector<1x64xf32>
    %448 = vector.broadcast %447 : vector<1x64xf32> to vector<16x64xf32>
    %449 = arith.mulf %446, %448 : vector<16x64xf32>
    %c0_95 = arith.constant 0 : index
    %c0_96 = arith.constant 0 : index
    %450 = vector.load %arg17[%c0_95, %c0_96] : memref<1x64xf32, #tpu.memory_space<vmem>>, vector<1x64xf32>
    %451 = vector.broadcast %450 : vector<1x64xf32> to vector<16x64xf32>
    %452 = arith.addf %449, %451 : vector<16x64xf32>
    %453 = arith.mulf %452, %76 : vector<16x64xf32>
    %454 = arith.truncf %453 : vector<16x64xf32> to vector<16x64xbf16>
    %c0_97 = arith.constant 0 : index
    %c0_98 = arith.constant 0 : index
    %455 = vector.load %arg15[%c0_97, %c0_98] : memref<64x64xbf16, #tpu.memory_space<vmem>>, vector<64x64xbf16>
    %cst_99 = arith.constant dense<0.000000e+00> : vector<16x64xf32>
    %456 = tpu.matmul %454, %455, %cst_99 {dimension_numbers = #tpu.dot_dimension_numbers<[1], [0], [0], [1], [0, 0, 1, 1], [], []>} : vector<16x64xbf16>, vector<64x64xbf16>, vector<16x64xf32> -> vector<16x64xf32>
    %457 = arith.addf %25, %456 : vector<16x64xf32>
    %c0_100 = arith.constant 0 : index
    %c0_101 = arith.constant 0 : index
    %458 = vector.load %arg9[%c0_100, %c0_101] : memref<1x64xf32, #tpu.memory_space<vmem>>, vector<1x64xf32>
    %c0_102 = arith.constant 0 : index
    %c0_103 = arith.constant 0 : index
    %459 = vector.load %arg10[%c0_102, %c0_103] : memref<1x64xf32, #tpu.memory_space<vmem>>, vector<1x64xf32>
    %cst_104 = arith.constant dense<0.000000e+00> : vector<16xf32>
    %460 = vector.multi_reduction <add>, %457, %cst_104 [1] : vector<16x64xf32> to vector<16xf32>
    %461 = vector.shape_cast %460 : vector<16xf32> to vector<16x1xf32>
    %cst_105 = arith.constant 6.400000e+01 : f32
    %462 = vector.broadcast %cst_105 : f32 to vector<16x1xf32>
    %463 = arith.divf %461, %462 : vector<16x1xf32>
    %464 = vector.broadcast %463 : vector<16x1xf32> to vector<16x64xf32>
    %465 = arith.subf %457, %464 : vector<16x64xf32>
    %466 = arith.mulf %465, %465 : vector<16x64xf32>
    %cst_106 = arith.constant dense<0.000000e+00> : vector<16xf32>
    %467 = vector.multi_reduction <add>, %466, %cst_106 [1] : vector<16x64xf32> to vector<16xf32>
    %468 = vector.shape_cast %467 : vector<16xf32> to vector<16x1xf32>
    %cst_107 = arith.constant 6.400000e+01 : f32
    %469 = vector.broadcast %cst_107 : f32 to vector<16x1xf32>
    %470 = arith.divf %468, %469 : vector<16x1xf32>
    %471 = vector.broadcast %463 : vector<16x1xf32> to vector<16x64xf32>
    %472 = arith.subf %457, %471 : vector<16x64xf32>
    %cst_108 = arith.constant 9.99999974E-6 : f32
    %473 = vector.broadcast %cst_108 : f32 to vector<16x1xf32>
    %474 = arith.addf %470, %473 : vector<16x1xf32>
    %475 = math.rsqrt %474 : vector<16x1xf32>
    %476 = vector.broadcast %475 : vector<16x1xf32> to vector<16x64xf32>
    %477 = arith.mulf %472, %476 : vector<16x64xf32>
    %478 = vector.broadcast %458 : vector<1x64xf32> to vector<16x64xf32>
    %479 = arith.mulf %477, %478 : vector<16x64xf32>
    %480 = vector.broadcast %459 : vector<1x64xf32> to vector<16x64xf32>
    %481 = arith.addf %479, %480 : vector<16x64xf32>
    %c1_i32_109 = arith.constant 1 : i32
    %482 = tpu.dynamic_rotate %481 by %c1_i32_109 dim 0 : vector<16x64xf32>, i32 -> vector<16x64xf32>
    %483 = vector.shape_cast %482 : vector<16x64xf32> to vector<2x8x64xf32>
    %c0_i32_110 = arith.constant 0 : i32
    %484 = vector.broadcast %c0_i32_110 : i32 to vector<2x8x64xi32>
    %485 = arith.cmpi eq, %50, %484 : vector<2x8x64xi32>
    %c0_111 = arith.constant 0 : index
    %c0_112 = arith.constant 0 : index
    %c0_113 = arith.constant 0 : index
    %486 = vector.load %arg4[%c0_111, %c0_112, %c0_113] : memref<2x1x64xf32, #tpu.memory_space<vmem>>, vector<2x1x64xf32>
    %487 = vector.shape_cast %486 : vector<2x1x64xf32> to vector<2x1x64xf32>
    %488 = vector.broadcast %487 : vector<2x1x64xf32> to vector<2x8x64xf32>
    %489 = arith.select %485, %488, %483 : vector<2x8x64xi1>, vector<2x8x64xf32>
    %490 = vector.shape_cast %489 : vector<2x8x64xf32> to vector<16x64xf32>
    %491 = arith.truncf %481 : vector<16x64xf32> to vector<16x64xbf16>
    %c0_114 = arith.constant 0 : index
    %c0_115 = arith.constant 0 : index
    %492 = vector.load %arg18[%c0_114, %c0_115] : memref<64x192xbf16, #tpu.memory_space<vmem>>, vector<64x192xbf16>
    %cst_116 = arith.constant dense<0.000000e+00> : vector<16x192xf32>
    %493 = tpu.matmul %491, %492, %cst_116 {dimension_numbers = #tpu.dot_dimension_numbers<[1], [0], [0], [1], [0, 0, 1, 1], [], []>} : vector<16x64xbf16>, vector<64x192xbf16>, vector<16x192xf32> -> vector<16x192xf32>
    %494 = arith.truncf %490 : vector<16x64xf32> to vector<16x64xbf16>
    %c0_117 = arith.constant 0 : index
    %c0_118 = arith.constant 0 : index
    %495 = vector.load %arg19[%c0_117, %c0_118] : memref<64x192xbf16, #tpu.memory_space<vmem>>, vector<64x192xbf16>
    %cst_119 = arith.constant dense<0.000000e+00> : vector<16x192xf32>
    %496 = tpu.matmul %494, %495, %cst_119 {dimension_numbers = #tpu.dot_dimension_numbers<[1], [0], [0], [1], [0, 0, 1, 1], [], []>} : vector<16x64xbf16>, vector<64x192xbf16>, vector<16x192xf32> -> vector<16x192xf32>
    %497 = arith.addf %493, %496 : vector<16x192xf32>
    %498 = vector.extract_strided_slice %497 {offsets = [0, 0], sizes = [16, 128], strides = [1, 1]} : vector<16x192xf32> to vector<16x128xf32>
    %cst_120 = arith.constant 0.000000e+00 : f32
    %499 = vector.broadcast %cst_120 : f32 to vector<16x128xf32>
    %500 = arith.maximumf %498, %499 : vector<16x128xf32>
    %501 = arith.mulf %500, %500 : vector<16x128xf32>
    %502 = vector.extract_strided_slice %497 {offsets = [0, 128], sizes = [16, 64], strides = [1, 1]} : vector<16x192xf32> to vector<16x64xf32>
    %503 = arith.negf %502 : vector<16x64xf32>
    %504 = math.exp %503 : vector<16x64xf32>
    %cst_121 = arith.constant 1.000000e+00 : f32
    %505 = vector.broadcast %cst_121 : f32 to vector<16x64xf32>
    %506 = arith.addf %505, %504 : vector<16x64xf32>
    %507 = arith.divf %505, %506 : vector<16x64xf32>
    %508 = arith.truncf %501 : vector<16x128xf32> to vector<16x128xbf16>
    %c0_122 = arith.constant 0 : index
    %c0_123 = arith.constant 0 : index
    %509 = vector.load %arg20[%c0_122, %c0_123] : memref<128x64xbf16, #tpu.memory_space<vmem>>, vector<128x64xbf16>
    %cst_124 = arith.constant dense<0.000000e+00> : vector<16x64xf32>
    %510 = tpu.matmul %508, %509, %cst_124 {dimension_numbers = #tpu.dot_dimension_numbers<[1], [0], [0], [1], [0, 0, 1, 1], [], []>} : vector<16x128xbf16>, vector<128x64xbf16>, vector<16x64xf32> -> vector<16x64xf32>
    %511 = arith.mulf %507, %510 : vector<16x64xf32>
    %512 = arith.addf %457, %511 : vector<16x64xf32>
    %513 = vector.shape_cast %512 : vector<16x64xf32> to vector<2x8x64xf32>
    %c0_125 = arith.constant 0 : index
    %c0_126 = arith.constant 0 : index
    %c0_127 = arith.constant 0 : index
    %514 = vector.load %arg21[%c0_125, %c0_126, %c0_127] : memref<2x8x64xf32, #tpu.memory_space<vmem>>, vector<2x8x64xf32>
    tpu.vector_store %arg21[%c0_125, %c0_126, %c0_127], %513 {strides = array<i32>} : memref<2x8x64xf32, #tpu.memory_space<vmem>>, vector<2x8x64xf32>,
    %515 = vector.shape_cast %49 : vector<16x64xf32> to vector<2x8x64xf32>
    %516 = vector.extract_strided_slice %515 {offsets = [0, 7, 0], sizes = [2, 1, 64], strides = [1, 1, 1]} : vector<2x8x64xf32> to vector<2x1x64xf32>
    %c0_128 = arith.constant 0 : index
    %c0_129 = arith.constant 0 : index
    %c0_130 = arith.constant 0 : index
    %517 = vector.load %arg22[%c0_128, %c0_129, %c0_130] : memref<2x1x64xf32, #tpu.memory_space<vmem>>, vector<2x1x64xf32>
    tpu.vector_store %arg22[%c0_128, %c0_129, %c0_130], %516 {strides = array<i32>} : memref<2x1x64xf32, #tpu.memory_space<vmem>>, vector<2x1x64xf32>,
    %c0_131 = arith.constant 0 : index
    %c0_132 = arith.constant 0 : index
    %c0_133 = arith.constant 0 : index
    %c0_134 = arith.constant 0 : index
    %518 = vector.load %arg23[%c0_131, %c0_132, %c0_133, %c0_134] : memref<2x2x32x32xf32, #tpu.memory_space<vmem>>, vector<2x2x32x32xf32>
    tpu.vector_store %arg23[%c0_131, %c0_132, %c0_133, %c0_134], %444 {strides = array<i32>} : memref<2x2x32x32xf32, #tpu.memory_space<vmem>>, vector<2x2x32x32xf32>,
    %519 = vector.shape_cast %481 : vector<16x64xf32> to vector<2x8x64xf32>
    %520 = vector.extract_strided_slice %519 {offsets = [0, 7, 0], sizes = [2, 1, 64], strides = [1, 1, 1]} : vector<2x8x64xf32> to vector<2x1x64xf32>
    %c0_135 = arith.constant 0 : index
    %c0_136 = arith.constant 0 : index
    %c0_137 = arith.constant 0 : index
    %521 = vector.load %arg24[%c0_135, %c0_136, %c0_137] : memref<2x1x64xf32, #tpu.memory_space<vmem>>, vector<2x1x64xf32>
    tpu.vector_store %arg24[%c0_135, %c0_136, %c0_137], %520 {strides = array<i32>} : memref<2x1x64xf32, #tpu.memory_space<vmem>>, vector<2x1x64xf32>,
    return
  }
  func.func @transform_0(%arg0: i32) -> (i32, i32, i32) {
    %c0_i32 = arith.constant 0 : i32
    %c0_i32_0 = arith.constant 0 : i32
    %c0_i32_1 = arith.constant 0 : i32
    return %arg0, %c0_i32, %c0_i32_0 : i32, i32, i32
  }
  func.func @transform_1(%arg0: i32) -> (i32, i32, i32) {
    %c0_i32 = arith.constant 0 : i32
    %c0_i32_0 = arith.constant 0 : i32
    %c0_i32_1 = arith.constant 0 : i32
    return %arg0, %c0_i32, %c0_i32_0 : i32, i32, i32
  }
  func.func @transform_2(%arg0: i32) -> (i32, i32, i32, i32) {
    %c0_i32 = arith.constant 0 : i32
    %c0_i32_0 = arith.constant 0 : i32
    %c0_i32_1 = arith.constant 0 : i32
    %c0_i32_2 = arith.constant 0 : i32
    return %arg0, %c0_i32, %c0_i32_0, %c0_i32_1 : i32, i32, i32, i32
  }
  func.func @transform_3(%arg0: i32) -> (i32, i32, i32) {
    %c0_i32 = arith.constant 0 : i32
    %c0_i32_0 = arith.constant 0 : i32
    %c0_i32_1 = arith.constant 0 : i32
    return %arg0, %c0_i32, %c0_i32_0 : i32, i32, i32
  }
  func.func @transform_4(%arg0: i32) -> (i32, i32) {
    %c0_i32 = arith.constant 0 : i32
    %c0_i32_0 = arith.constant 0 : i32
    %c0_i32_1 = arith.constant 0 : i32
    return %c0_i32, %c0_i32_0 : i32, i32
  }
  func.func @transform_5(%arg0: i32) -> (i32, i32) {
    %c0_i32 = arith.constant 0 : i32
    %c0_i32_0 = arith.constant 0 : i32
    %c0_i32_1 = arith.constant 0 : i32
    return %c0_i32, %c0_i32_0 : i32, i32
  }
  func.func @transform_6(%arg0: i32) -> (i32, i32) {
    %c0_i32 = arith.constant 0 : i32
    %c0_i32_0 = arith.constant 0 : i32
    %c0_i32_1 = arith.constant 0 : i32
    return %c0_i32, %c0_i32_0 : i32, i32
  }
  func.func @transform_7(%arg0: i32) -> (i32, i32) {
    %c0_i32 = arith.constant 0 : i32
    %c0_i32_0 = arith.constant 0 : i32
    %c0_i32_1 = arith.constant 0 : i32
    return %c0_i32, %c0_i32_0 : i32, i32
  }
  func.func @transform_8(%arg0: i32) -> (i32, i32) {
    %c0_i32 = arith.constant 0 : i32
    %c0_i32_0 = arith.constant 0 : i32
    %c0_i32_1 = arith.constant 0 : i32
    return %c0_i32, %c0_i32_0 : i32, i32
  }
  func.func @transform_9(%arg0: i32) -> (i32, i32) {
    %c0_i32 = arith.constant 0 : i32
    %c0_i32_0 = arith.constant 0 : i32
    %c0_i32_1 = arith.constant 0 : i32
    return %c0_i32, %c0_i32_0 : i32, i32
  }
  func.func @transform_10(%arg0: i32) -> (i32, i32) {
    %c0_i32 = arith.constant 0 : i32
    %c0_i32_0 = arith.constant 0 : i32
    %c0_i32_1 = arith.constant 0 : i32
    return %c0_i32, %c0_i32_0 : i32, i32
  }
  func.func @transform_11(%arg0: i32) -> (i32, i32) {
    %c0_i32 = arith.constant 0 : i32
    %c0_i32_0 = arith.constant 0 : i32
    %c0_i32_1 = arith.constant 0 : i32
    return %c0_i32, %c0_i32_0 : i32, i32
  }
  func.func @transform_12(%arg0: i32) -> (i32, i32) {
    %c0_i32 = arith.constant 0 : i32
    %c0_i32_0 = arith.constant 0 : i32
    %c0_i32_1 = arith.constant 0 : i32
    return %c0_i32, %c0_i32_0 : i32, i32
  }
  func.func @transform_13(%arg0: i32) -> (i32, i32) {
    %c0_i32 = arith.constant 0 : i32
    %c0_i32_0 = arith.constant 0 : i32
    %c0_i32_1 = arith.constant 0 : i32
    return %c0_i32, %c0_i32_0 : i32, i32
  }
  func.func @transform_14(%arg0: i32) -> (i32, i32) {
    %c0_i32 = arith.constant 0 : i32
    %c0_i32_0 = arith.constant 0 : i32
    %c0_i32_1 = arith.constant 0 : i32
    return %c0_i32, %c0_i32_0 : i32, i32
  }
  func.func @transform_15(%arg0: i32) -> (i32, i32) {
    %c0_i32 = arith.constant 0 : i32
    %c0_i32_0 = arith.constant 0 : i32
    %c0_i32_1 = arith.constant 0 : i32
    return %c0_i32, %c0_i32_0 : i32, i32
  }
  func.func @transform_16(%arg0: i32) -> (i32, i32) {
    %c0_i32 = arith.constant 0 : i32
    %c0_i32_0 = arith.constant 0 : i32
    %c0_i32_1 = arith.constant 0 : i32
    return %c0_i32, %c0_i32_0 : i32, i32
  }
  func.func @transform_17(%arg0: i32) -> (i32, i32) {
    %c0_i32 = arith.constant 0 : i32
    %c0_i32_0 = arith.constant 0 : i32
    %c0_i32_1 = arith.constant 0 : i32
    return %c0_i32, %c0_i32_0 : i32, i32
  }
  func.func @transform_18(%arg0: i32) -> (i32, i32) {
    %c0_i32 = arith.constant 0 : i32
    %c0_i32_0 = arith.constant 0 : i32
    %c0_i32_1 = arith.constant 0 : i32
    return %c0_i32, %c0_i32_0 : i32, i32
  }
  func.func @transform_19(%arg0: i32) -> (i32, i32) {
    %c0_i32 = arith.constant 0 : i32
    %c0_i32_0 = arith.constant 0 : i32
    %c0_i32_1 = arith.constant 0 : i32
    return %c0_i32, %c0_i32_0 : i32, i32
  }
  func.func @transform_20(%arg0: i32) -> (i32, i32, i32) {
    %c0_i32 = arith.constant 0 : i32
    %c0_i32_0 = arith.constant 0 : i32
    %c0_i32_1 = arith.constant 0 : i32
    return %arg0, %c0_i32, %c0_i32_0 : i32, i32, i32
  }
  func.func @transform_21(%arg0: i32) -> (i32, i32, i32) {
    %c0_i32 = arith.constant 0 : i32
    %c0_i32_0 = arith.constant 0 : i32
    %c0_i32_1 = arith.constant 0 : i32
    return %arg0, %c0_i32, %c0_i32_0 : i32, i32, i32
  }
  func.func @transform_22(%arg0: i32) -> (i32, i32, i32, i32) {
    %c0_i32 = arith.constant 0 : i32
    %c0_i32_0 = arith.constant 0 : i32
    %c0_i32_1 = arith.constant 0 : i32
    %c0_i32_2 = arith.constant 0 : i32
    return %arg0, %c0_i32, %c0_i32_0, %c0_i32_1 : i32, i32, i32, i32
  }
  func.func @transform_23(%arg0: i32) -> (i32, i32, i32) {
    %c0_i32 = arith.constant 0 : i32
    %c0_i32_0 = arith.constant 0 : i32
    %c0_i32_1 = arith.constant 0 : i32
    return %arg0, %c0_i32, %c0_i32_0 : i32, i32, i32
  }
}

</mosaic_0001>

<llo_original>
// kernel: tpu_custom_call.1
$region0: #{tpu_custom_call.1}
  #allocation0 [shape = 'u32[]', space=smem, size = 0x4, offset = 0x4, fixed_abs, tag = 'smem constant byte address 0x4 - core index']
  #allocation1 [shape = 'u32[144,128]{1,0:T(1,128)}', space=vmem, size = 0x12000, scoped, tag = 'internal scratch']
  %s0 = inlined_call_operand.vmem [shape: f32[4,8,64], index: 0, kind: input, shape index: {}]
  %s1 = inlined_call_operand.hbm [shape: f32[4,1,64], index: 1, kind: input, shape index: {}, may-alias: {1,21}]
  %s2 = inlined_call_operand.hbm [shape: f32[4,2,32,32], index: 2, kind: input, shape index: {}, may-alias: {2,22}]
  %s3 = inlined_call_operand.hbm [shape: f32[4,1,64], index: 3, kind: input, shape index: {}, may-alias: {3,23}]
  %s4 = inlined_call_operand.vmem [shape: f32[1,64], index: 4, kind: input, shape index: {}]
  %s5 = inlined_call_operand.vmem [shape: f32[1,64], index: 5, kind: input, shape index: {}]
  %s6 = inlined_call_operand.vmem [shape: f32[1,64], index: 6, kind: input, shape index: {}]
  %s7 = inlined_call_operand.vmem [shape: f32[1,64], index: 7, kind: input, shape index: {}]
  %s8 = inlined_call_operand.vmem [shape: f32[1,64], index: 8, kind: input, shape index: {}]
  %s9 = inlined_call_operand.vmem [shape: f32[1,64], index: 9, kind: input, shape index: {}]
  %s10 = inlined_call_operand.vmem [shape: bf16[64,256], index: 10, kind: input, shape index: {}]
  %s11 = inlined_call_operand.vmem [shape: bf16[64,256], index: 11, kind: input, shape index: {}]
  %s12 = inlined_call_operand.vmem [shape: f32[2,32], index: 12, kind: input, shape index: {}]
  %s13 = inlined_call_operand.vmem [shape: f32[2,32], index: 13, kind: input, shape index: {}]
  %s14 = inlined_call_operand.vmem [shape: bf16[64,64], index: 14, kind: input, shape index: {}]
  %s15 = inlined_call_operand.vmem [shape: f32[1,64], index: 15, kind: input, shape index: {}]
  %s16 = inlined_call_operand.vmem [shape: f32[1,64], index: 16, kind: input, shape index: {}]
  %s17 = inlined_call_operand.vmem [shape: bf16[64,192], index: 17, kind: input, shape index: {}]
  %s18 = inlined_call_operand.vmem [shape: bf16[64,192], index: 18, kind: input, shape index: {}]
  %s19 = inlined_call_operand.vmem [shape: bf16[128,64], index: 19, kind: input, shape index: {}]
  %s20 = inlined_call_operand.hbm [shape: f32[4,8,64], index: 20, kind: output, shape index: {0}]
  %s21 = inlined_call_operand.hbm [shape: f32[4,1,64], index: 21, kind: output, shape index: {1}, may-alias: {1,21}]
  %s22 = inlined_call_operand.hbm [shape: f32[4,2,32,32], index: 22, kind: output, shape index: {2}, may-alias: {2,22}]
  %s23 = inlined_call_operand.hbm [shape: f32[4,1,64], index: 23, kind: output, shape index: {3}, may-alias: {3,23}]
  %24 = xla_tuple %s20, %s21, %s22, %s23
  %s25 = sld [smem:[#allocation0]]
  $region149: #{tpu_custom_call.1} parent=0
    _
  %s27 = ssub.s32 1, %s25
  %s28 = scalar_select 0, %s27, %s25
  $region1: #{tpu_custom_call.1} parent=0
    #allocation2 [shape = 'u8[2048]{0}', space=vmem, size = 0x800, scoped, tag = 'input window, operand 1']
    #allocation3 [shape = 's32[2]{0}', space=sflag, size = 0x8, scoped, tag = 'scoped memory for tpu_custom_call.1']
    #allocation4 [shape = 's32[2]{0}', space=sflag, size = 0x8, scoped, tag = 'scoped memory for tpu_custom_call.1']
    #allocation5 [shape = 'u8[131072]{0}', space=vmem, size = 0x20000, scoped, tag = 'input window, operand 2']
    #allocation6 [shape = 's32[2]{0}', space=sflag, size = 0x8, scoped, tag = 'scoped memory for tpu_custom_call.1']
    #allocation7 [shape = 'u8[2048]{0}', space=vmem, size = 0x800, scoped, tag = 'input window, operand 3']
    #allocation8 [shape = 'u8[16384]{0}', space=vmem, size = 0x4000, scoped, tag = 'output window, operand 0']
    #allocation9 [shape = 'u8[2048]{0}', space=vmem, size = 0x800, scoped, tag = 'output window, operand 1']
    #allocation10 [shape = 's32[2]{0}', space=sflag, size = 0x8, scoped, tag = 'scoped memory for tpu_custom_call.1']
    #allocation11 [shape = 'u8[131072]{0}', space=vmem, size = 0x20000, scoped, tag = 'output window, operand 2']
    #allocation12 [shape = 'u8[2048]{0}', space=vmem, size = 0x800, scoped, tag = 'output window, operand 3']
    #allocation13 [shape = 's32[2]{0}', space=sflag, size = 0x8, scoped, tag = 'scoped memory for tpu_custom_call.1']
    %29 = vsyncpa [#allocation3], 0
    %s30 = scalar_lea.sflag [#allocation3], 1
    %31 = vsyncpa %s30, 0
    %32 = vsyncpa [#allocation6], 0
    %s33 = scalar_lea.sflag [#allocation6], 1
    %34 = vsyncpa %s33, 0
    %35 = vsyncpa [#allocation4], 0
    %s36 = scalar_lea.sflag [#allocation4], 1
    %37 = vsyncpa %s36, 0
    %38 = vsyncpa [#allocation10], 0
    %s39 = scalar_lea.sflag [#allocation10], 1
    %40 = vsyncpa %s39, 0
    %41 = vsyncpa [#allocation13], 0
    %s42 = scalar_lea.sflag [#allocation13], 1
    %43 = vsyncpa %s42, 0
    loop: start=0, step=1, limit=4
    $region2: #{tpu_custom_call.1} parent=1 // loop_pre_header
      _
    $region3: #{tpu_custom_call.1} parent=1 // loop_header
      %s45 = sphi 0, %s49
      %p46 = scmp.ge.s32.totalorder %s45, 4
      %s55 = sphi 0, %s57
      %s58 = sphi 0, %s55
      %s59 = sphi 0, %s58
      %s75 = sphi 0, %s59
      %s81 = sphi 0, %s83
      %s84 = sphi 0, %s81
      %s85 = sphi 0, %s84
      %s101 = sphi 0, %s85
      %s107 = sphi 0, %s109
      %s110 = sphi 0, %s107
      %s111 = sphi 0, %s110
      %s127 = sphi 0, %s111
      %s133 = sphi 0, %s135
      %s136 = sphi 0, %s133
      %s137 = sphi 0, %s136
      %s153 = sphi 0, %s137
      %s157 = sphi 0, %s157
      %s159 = sphi 0, %s157
      %s160 = sphi 0, %s159
      %s174 = sphi 0, %s160
      %s178 = sphi 0, %s178
      %s180 = sphi 0, %s178
      %s181 = sphi 0, %s180
      %s195 = sphi 0, %s181
      %s199 = sphi 0, %s199
      %s201 = sphi 0, %s199
      %s202 = sphi 0, %s201
      %s216 = sphi 0, %s202
      %s220 = sphi 0, %s220
      %s222 = sphi 0, %s220
      %s223 = sphi 0, %s222
      %s237 = sphi 0, %s223
      %s241 = sphi 0, %s241
      %s243 = sphi 0, %s241
      %s244 = sphi 0, %s243
      %s258 = sphi 0, %s244
      %s262 = sphi 0, %s262
      %s264 = sphi 0, %s262
      %s265 = sphi 0, %s264
      %s279 = sphi 0, %s265
      %s283 = sphi 0, %s283
      %s285 = sphi 0, %s283
      %s286 = sphi 0, %s285
      %s300 = sphi 0, %s286
      %s304 = sphi 0, %s304
      %s306 = sphi 0, %s304
      %s307 = sphi 0, %s306
      %s321 = sphi 0, %s307
      %s325 = sphi 0, %s325
      %s327 = sphi 0, %s325
      %s328 = sphi 0, %s327
      %s342 = sphi 0, %s328
      %s346 = sphi 0, %s346
      %s348 = sphi 0, %s346
      %s349 = sphi 0, %s348
      %s363 = sphi 0, %s349
      %s367 = sphi 0, %s367
      %s369 = sphi 0, %s367
      %s370 = sphi 0, %s369
      %s384 = sphi 0, %s370
      %s388 = sphi 0, %s388
      %s390 = sphi 0, %s388
      %s391 = sphi 0, %s390
      %s405 = sphi 0, %s391
      %s409 = sphi 0, %s409
      %s411 = sphi 0, %s409
      %s412 = sphi 0, %s411
      %s426 = sphi 0, %s412
      %s430 = sphi 0, %s430
      %s432 = sphi 0, %s430
      %s433 = sphi 0, %s432
      %s447 = sphi 0, %s433
      %s451 = sphi 0, %s451
      %s453 = sphi 0, %s451
      %s454 = sphi 0, %s453
      %s468 = sphi 0, %s454
      %s472 = sphi 0, %s472
      %s474 = sphi 0, %s472
      %s475 = sphi 0, %s474
      %s489 = sphi 0, %s475
      %s495 = sphi 0, %s497
      %s498 = sphi 0, %s495
      %s499 = sphi 0, %s498
      %s515 = sphi 0, %s499
      %s521 = sphi 0, %s523
      %s524 = sphi 0, %s521
      %s525 = sphi 0, %s524
      %s541 = sphi 0, %s525
      %s547 = sphi 0, %s549
      %s550 = sphi 0, %s547
      %s551 = sphi 0, %s550
      %s567 = sphi 0, %s551
      %s573 = sphi 0, %s575
      %s576 = sphi 0, %s573
      %s577 = sphi 0, %s576
      %s593 = sphi 0, %s577
    $region4: #{tpu_custom_call.1} parent=1 // loop_header_branch
      %48 = sbr.rel (%p46) target = $region8
    $region5: #{tpu_custom_call.1} parent=1 // loop_body
      %s50 = ssub.s32 %s45, 1
      %s51 = ssub.s32 %s45, 2
      %s52 = sadd.s32 %s45, 1
      %s53 = ssub.s32 %s45, %s52
      %p54 = scmp.eq.s32.totalorder %s53, 0
      %s56 = sadd.s32 %s55, 1
      %s57 = scalar_select %p54, %s55, %s56
      %p60 = pneg %p54
      %p61 = scmp.eq.s32.totalorder %s45, 1
      %p62 = por %p60, %p61
      %p63 = scmp.ne.s32.totalorder %s55, %s58
      %p64 = scmp.eq.s32.totalorder %s45, 0
      %p65 = por %p63, %p64
      %p66 = scmp.ne.s32.totalorder %s55, %s58
      %p67 = scmp.eq.s32.totalorder %s50, 1
      %p68 = por %p66, %p67
      %p69 = scmp.ne.s32.totalorder %s58, %s59
      %p70 = scmp.eq.s32.totalorder %s50, 0
      %p71 = por %p69, %p70
      %p72 = scmp.ne.s32.totalorder %s58, %s59
      %p73 = scmp.eq.s32.totalorder %s51, 1
      %p74 = por %p72, %p73
      %p76 = scmp.ne.s32.totalorder %s59, %s75
      %p77 = scmp.eq.s32.totalorder %s51, 0
      %p78 = por %p76, %p77
      %s79 = ssub.s32 %s45, %s52
      %p80 = scmp.eq.s32.totalorder %s79, 0
      %s82 = sadd.s32 %s81, 1
      %s83 = scalar_select %p80, %s81, %s82
      %p86 = pneg %p80
      %p87 = scmp.eq.s32.totalorder %s45, 1
      %p88 = por %p86, %p87
      %p89 = scmp.ne.s32.totalorder %s81, %s84
      %p90 = scmp.eq.s32.totalorder %s45, 0
      %p91 = por %p89, %p90
      %p92 = scmp.ne.s32.totalorder %s81, %s84
      %p93 = scmp.eq.s32.totalorder %s50, 1
      %p94 = por %p92, %p93
      %p95 = scmp.ne.s32.totalorder %s84, %s85
      %p96 = scmp.eq.s32.totalorder %s50, 0
      %p97 = por %p95, %p96
      %p98 = scmp.ne.s32.totalorder %s84, %s85
      %p99 = scmp.eq.s32.totalorder %s51, 1
      %p100 = por %p98, %p99
      %p102 = scmp.ne.s32.totalorder %s85, %s101
      %p103 = scmp.eq.s32.totalorder %s51, 0
      %p104 = por %p102, %p103
      %s105 = ssub.s32 %s45, %s52
      %p106 = scmp.eq.s32.totalorder %s105, 0
      %s108 = sadd.s32 %s107, 1
      %s109 = scalar_select %p106, %s107, %s108
      %p112 = pneg %p106
      %p113 = scmp.eq.s32.totalorder %s45, 1
      %p114 = por %p112, %p113
      %p115 = scmp.ne.s32.totalorder %s107, %s110
      %p116 = scmp.eq.s32.totalorder %s45, 0
      %p117 = por %p115, %p116
      %p118 = scmp.ne.s32.totalorder %s107, %s110
      %p119 = scmp.eq.s32.totalorder %s50, 1
      %p120 = por %p118, %p119
      %p121 = scmp.ne.s32.totalorder %s110, %s111
      %p122 = scmp.eq.s32.totalorder %s50, 0
      %p123 = por %p121, %p122
      %p124 = scmp.ne.s32.totalorder %s110, %s111
      %p125 = scmp.eq.s32.totalorder %s51, 1
      %p126 = por %p124, %p125
      %p128 = scmp.ne.s32.totalorder %s111, %s127
      %p129 = scmp.eq.s32.totalorder %s51, 0
      %p130 = por %p128, %p129
      %s131 = ssub.s32 %s45, %s52
      %p132 = scmp.eq.s32.totalorder %s131, 0
      %s134 = sadd.s32 %s133, 1
      %s135 = scalar_select %p132, %s133, %s134
      %p138 = pneg %p132
      %p139 = scmp.eq.s32.totalorder %s45, 1
      %p140 = por %p138, %p139
      %p141 = scmp.ne.s32.totalorder %s133, %s136
      %p142 = scmp.eq.s32.totalorder %s45, 0
      %p143 = por %p141, %p142
      %p144 = scmp.ne.s32.totalorder %s133, %s136
      %p145 = scmp.eq.s32.totalorder %s50, 1
      %p146 = por %p144, %p145
      %p147 = scmp.ne.s32.totalorder %s136, %s137
      %p148 = scmp.eq.s32.totalorder %s50, 0
      %p149 = por %p147, %p148
      %p150 = scmp.ne.s32.totalorder %s136, %s137
      %p151 = scmp.eq.s32.totalorder %s51, 1
      %p152 = por %p150, %p151
      %p154 = scmp.ne.s32.totalorder %s137, %s153
      %p155 = scmp.eq.s32.totalorder %s51, 0
      %p156 = por %p154, %p155
      %s158 = sadd.s32 %s157, 1
      %p161 = scmp.eq.s32.totalorder %s45, 1
      %p162 = scmp.ne.s32.totalorder %s157, %s159
      %p163 = scmp.eq.s32.totalorder %s45, 0
      %p164 = por %p162, %p163
      %p165 = scmp.ne.s32.totalorder %s157, %s159
      %p166 = scmp.eq.s32.totalorder %s50, 1
      %p167 = por %p165, %p166
      %p168 = scmp.ne.s32.totalorder %s159, %s160
      %p169 = scmp.eq.s32.totalorder %s50, 0
      %p170 = por %p168, %p169
      %p171 = scmp.ne.s32.totalorder %s159, %s160
      %p172 = scmp.eq.s32.totalorder %s51, 1
      %p173 = por %p171, %p172
      %p175 = scmp.ne.s32.totalorder %s160, %s174
      %p176 = scmp.eq.s32.totalorder %s51, 0
      %p177 = por %p175, %p176
      %s179 = sadd.s32 %s178, 1
      %p182 = scmp.eq.s32.totalorder %s45, 1
      %p183 = scmp.ne.s32.totalorder %s178, %s180
      %p184 = scmp.eq.s32.totalorder %s45, 0
      %p185 = por %p183, %p184
      %p186 = scmp.ne.s32.totalorder %s178, %s180
      %p187 = scmp.eq.s32.totalorder %s50, 1
      %p188 = por %p186, %p187
      %p189 = scmp.ne.s32.totalorder %s180, %s181
      %p190 = scmp.eq.s32.totalorder %s50, 0
      %p191 = por %p189, %p190
      %p192 = scmp.ne.s32.totalorder %s180, %s181
      %p193 = scmp.eq.s32.totalorder %s51, 1
      %p194 = por %p192, %p193
      %p196 = scmp.ne.s32.totalorder %s181, %s195
      %p197 = scmp.eq.s32.totalorder %s51, 0
      %p198 = por %p196, %p197
      %s200 = sadd.s32 %s199, 1
      %p203 = scmp.eq.s32.totalorder %s45, 1
      %p204 = scmp.ne.s32.totalorder %s199, %s201
      %p205 = scmp.eq.s32.totalorder %s45, 0
      %p206 = por %p204, %p205
      %p207 = scmp.ne.s32.totalorder %s199, %s201
      %p208 = scmp.eq.s32.totalorder %s50, 1
      %p209 = por %p207, %p208
      %p210 = scmp.ne.s32.totalorder %s201, %s202
      %p211 = scmp.eq.s32.totalorder %s50, 0
      %p212 = por %p210, %p211
      %p213 = scmp.ne.s32.totalorder %s201, %s202
      %p214 = scmp.eq.s32.totalorder %s51, 1
      %p215 = por %p213, %p214
      %p217 = scmp.ne.s32.totalorder %s202, %s216
      %p218 = scmp.eq.s32.totalorder %s51, 0
      %p219 = por %p217, %p218
      %s221 = sadd.s32 %s220, 1
      %p224 = scmp.eq.s32.totalorder %s45, 1
      %p225 = scmp.ne.s32.totalorder %s220, %s222
      %p226 = scmp.eq.s32.totalorder %s45, 0
      %p227 = por %p225, %p226
      %p228 = scmp.ne.s32.totalorder %s220, %s222
      %p229 = scmp.eq.s32.totalorder %s50, 1
      %p230 = por %p228, %p229
      %p231 = scmp.ne.s32.totalorder %s222, %s223
      %p232 = scmp.eq.s32.totalorder %s50, 0
      %p233 = por %p231, %p232
      %p234 = scmp.ne.s32.totalorder %s222, %s223
      %p235 = scmp.eq.s32.totalorder %s51, 1
      %p236 = por %p234, %p235
      %p238 = scmp.ne.s32.totalorder %s223, %s237
      %p239 = scmp.eq.s32.totalorder %s51, 0
      %p240 = por %p238, %p239
      %s242 = sadd.s32 %s241, 1
      %p245 = scmp.eq.s32.totalorder %s45, 1
      %p246 = scmp.ne.s32.totalorder %s241, %s243
      %p247 = scmp.eq.s32.totalorder %s45, 0
      %p248 = por %p246, %p247
      %p249 = scmp.ne.s32.totalorder %s241, %s243
      %p250 = scmp.eq.s32.totalorder %s50, 1
      %p251 = por %p249, %p250
      %p252 = scmp.ne.s32.totalorder %s243, %s244
      %p253 = scmp.eq.s32.totalorder %s50, 0
      %p254 = por %p252, %p253
      %p255 = scmp.ne.s32.totalorder %s243, %s244
      %p256 = scmp.eq.s32.totalorder %s51, 1
      %p257 = por %p255, %p256
      %p259 = scmp.ne.s32.totalorder %s244, %s258
      %p260 = scmp.eq.s32.totalorder %s51, 0
      %p261 = por %p259, %p260
      %s263 = sadd.s32 %s262, 1
      %p266 = scmp.eq.s32.totalorder %s45, 1
      %p267 = scmp.ne.s32.totalorder %s262, %s264
      %p268 = scmp.eq.s32.totalorder %s45, 0
      %p269 = por %p267, %p268
      %p270 = scmp.ne.s32.totalorder %s262, %s264
      %p271 = scmp.eq.s32.totalorder %s50, 1
      %p272 = por %p270, %p271
      %p273 = scmp.ne.s32.totalorder %s264, %s265
      %p274 = scmp.eq.s32.totalorder %s50, 0
      %p275 = por %p273, %p274
      %p276 = scmp.ne.s32.totalorder %s264, %s265
      %p277 = scmp.eq.s32.totalorder %s51, 1
      %p278 = por %p276, %p277
      %p280 = scmp.ne.s32.totalorder %s265, %s279
      %p281 = scmp.eq.s32.totalorder %s51, 0
      %p282 = por %p280, %p281
      %s284 = sadd.s32 %s283, 1
      %p287 = scmp.eq.s32.totalorder %s45, 1
      %p288 = scmp.ne.s32.totalorder %s283, %s285
      %p289 = scmp.eq.s32.totalorder %s45, 0
      %p290 = por %p288, %p289
      %p291 = scmp.ne.s32.totalorder %s283, %s285
      %p292 = scmp.eq.s32.totalorder %s50, 1
      %p293 = por %p291, %p292
      %p294 = scmp.ne.s32.totalorder %s285, %s286
      %p295 = scmp.eq.s32.totalorder %s50, 0
      %p296 = por %p294, %p295
      %p297 = scmp.ne.s32.totalorder %s285, %s286
      %p298 = scmp.eq.s32.totalorder %s51, 1
      %p299 = por %p297, %p298
      %p301 = scmp.ne.s32.totalorder %s286, %s300
      %p302 = scmp.eq.s32.totalorder %s51, 0
      %p303 = por %p301, %p302
      %s305 = sadd.s32 %s304, 1
      %p308 = scmp.eq.s32.totalorder %s45, 1
      %p309 = scmp.ne.s32.totalorder %s304, %s306
      %p310 = scmp.eq.s32.totalorder %s45, 0
      %p311 = por %p309, %p310
      %p312 = scmp.ne.s32.totalorder %s304, %s306
      %p313 = scmp.eq.s32.totalorder %s50, 1
      %p314 = por %p312, %p313
      %p315 = scmp.ne.s32.totalorder %s306, %s307
      %p316 = scmp.eq.s32.totalorder %s50, 0
      %p317 = por %p315, %p316
      %p318 = scmp.ne.s32.totalorder %s306, %s307
      %p319 = scmp.eq.s32.totalorder %s51, 1
      %p320 = por %p318, %p319
      %p322 = scmp.ne.s32.totalorder %s307, %s321
      %p323 = scmp.eq.s32.totalorder %s51, 0
      %p324 = por %p322, %p323
      %s326 = sadd.s32 %s325, 1
      %p329 = scmp.eq.s32.totalorder %s45, 1
      %p330 = scmp.ne.s32.totalorder %s325, %s327
      %p331 = scmp.eq.s32.totalorder %s45, 0
      %p332 = por %p330, %p331
      %p333 = scmp.ne.s32.totalorder %s325, %s327
      %p334 = scmp.eq.s32.totalorder %s50, 1
      %p335 = por %p333, %p334
      %p336 = scmp.ne.s32.totalorder %s327, %s328
      %p337 = scmp.eq.s32.totalorder %s50, 0
      %p338 = por %p336, %p337
      %p339 = scmp.ne.s32.totalorder %s327, %s328
      %p340 = scmp.eq.s32.totalorder %s51, 1
      %p341 = por %p339, %p340
      %p343 = scmp.ne.s32.totalorder %s328, %s342
      %p344 = scmp.eq.s32.totalorder %s51, 0
      %p345 = por %p343, %p344
      %s347 = sadd.s32 %s346, 1
      %p350 = scmp.eq.s32.totalorder %s45, 1
      %p351 = scmp.ne.s32.totalorder %s346, %s348
      %p352 = scmp.eq.s32.totalorder %s45, 0
      %p353 = por %p351, %p352
      %p354 = scmp.ne.s32.totalorder %s346, %s348
      %p355 = scmp.eq.s32.totalorder %s50, 1
      %p356 = por %p354, %p355
      %p357 = scmp.ne.s32.totalorder %s348, %s349
      %p358 = scmp.eq.s32.totalorder %s50, 0
      %p359 = por %p357, %p358
      %p360 = scmp.ne.s32.totalorder %s348, %s349
      %p361 = scmp.eq.s32.totalorder %s51, 1
      %p362 = por %p360, %p361
      %p364 = scmp.ne.s32.totalorder %s349, %s363
      %p365 = scmp.eq.s32.totalorder %s51, 0
      %p366 = por %p364, %p365
      %s368 = sadd.s32 %s367, 1
      %p371 = scmp.eq.s32.totalorder %s45, 1
      %p372 = scmp.ne.s32.totalorder %s367, %s369
      %p373 = scmp.eq.s32.totalorder %s45, 0
      %p374 = por %p372, %p373
      %p375 = scmp.ne.s32.totalorder %s367, %s369
      %p376 = scmp.eq.s32.totalorder %s50, 1
      %p377 = por %p375, %p376
      %p378 = scmp.ne.s32.totalorder %s369, %s370
      %p379 = scmp.eq.s32.totalorder %s50, 0
      %p380 = por %p378, %p379
      %p381 = scmp.ne.s32.totalorder %s369, %s370
      %p382 = scmp.eq.s32.totalorder %s51, 1
      %p383 = por %p381, %p382
      %p385 = scmp.ne.s32.totalorder %s370, %s384
      %p386 = scmp.eq.s32.totalorder %s51, 0
      %p387 = por %p385, %p386
      %s389 = sadd.s32 %s388, 1
      %p392 = scmp.eq.s32.totalorder %s45, 1
      %p393 = scmp.ne.s32.totalorder %s388, %s390
      %p394 = scmp.eq.s32.totalorder %s45, 0
      %p395 = por %p393, %p394
      %p396 = scmp.ne.s32.totalorder %s388, %s390
      %p397 = scmp.eq.s32.totalorder %s50, 1
      %p398 = por %p396, %p397
      %p399 = scmp.ne.s32.totalorder %s390, %s391
      %p400 = scmp.eq.s32.totalorder %s50, 0
      %p401 = por %p399, %p400
      %p402 = scmp.ne.s32.totalorder %s390, %s391
      %p403 = scmp.eq.s32.totalorder %s51, 1
      %p404 = por %p402, %p403
      %p406 = scmp.ne.s32.totalorder %s391, %s405
      %p407 = scmp.eq.s32.totalorder %s51, 0
      %p408 = por %p406, %p407
      %s410 = sadd.s32 %s409, 1
      %p413 = scmp.eq.s32.totalorder %s45, 1
      %p414 = scmp.ne.s32.totalorder %s409, %s411
      %p415 = scmp.eq.s32.totalorder %s45, 0
      %p416 = por %p414, %p415
      %p417 = scmp.ne.s32.totalorder %s409, %s411
      %p418 = scmp.eq.s32.totalorder %s50, 1
      %p419 = por %p417, %p418
      %p420 = scmp.ne.s32.totalorder %s411, %s412
      %p421 = scmp.eq.s32.totalorder %s50, 0
      %p422 = por %p420, %p421
      %p423 = scmp.ne.s32.totalorder %s411, %s412
      %p424 = scmp.eq.s32.totalorder %s51, 1
      %p425 = por %p423, %p424
      %p427 = scmp.ne.s32.totalorder %s412, %s426
      %p428 = scmp.eq.s32.totalorder %s51, 0
      %p429 = por %p427, %p428
      %s431 = sadd.s32 %s430, 1
      %p434 = scmp.eq.s32.totalorder %s45, 1
      %p435 = scmp.ne.s32.totalorder %s430, %s432
      %p436 = scmp.eq.s32.totalorder %s45, 0
      %p437 = por %p435, %p436
      %p438 = scmp.ne.s32.totalorder %s430, %s432
      %p439 = scmp.eq.s32.totalorder %s50, 1
      %p440 = por %p438, %p439
      %p441 = scmp.ne.s32.totalorder %s432, %s433
      %p442 = scmp.eq.s32.totalorder %s50, 0
      %p443 = por %p441, %p442
      %p444 = scmp.ne.s32.totalorder %s432, %s433
      %p445 = scmp.eq.s32.totalorder %s51, 1
      %p446 = por %p444, %p445
      %p448 = scmp.ne.s32.totalorder %s433, %s447
      %p449 = scmp.eq.s32.totalorder %s51, 0
      %p450 = por %p448, %p449
      %s452 = sadd.s32 %s451, 1
      %p455 = scmp.eq.s32.totalorder %s45, 1
      %p456 = scmp.ne.s32.totalorder %s451, %s453
      %p457 = scmp.eq.s32.totalorder %s45, 0
      %p458 = por %p456, %p457
      %p459 = scmp.ne.s32.totalorder %s451, %s453
      %p460 = scmp.eq.s32.totalorder %s50, 1
      %p461 = por %p459, %p460
      %p462 = scmp.ne.s32.totalorder %s453, %s454
      %p463 = scmp.eq.s32.totalorder %s50, 0
      %p464 = por %p462, %p463
      %p465 = scmp.ne.s32.totalorder %s453, %s454
      %p466 = scmp.eq.s32.totalorder %s51, 1
      %p467 = por %p465, %p466
      %p469 = scmp.ne.s32.totalorder %s454, %s468
      %p470 = scmp.eq.s32.totalorder %s51, 0
      %p471 = por %p469, %p470
      %s473 = sadd.s32 %s472, 1
      %p476 = scmp.eq.s32.totalorder %s45, 1
      %p477 = scmp.ne.s32.totalorder %s472, %s474
      %p478 = scmp.eq.s32.totalorder %s45, 0
      %p479 = por %p477, %p478
      %p480 = scmp.ne.s32.totalorder %s472, %s474
      %p481 = scmp.eq.s32.totalorder %s50, 1
      %p482 = por %p480, %p481
      %p483 = scmp.ne.s32.totalorder %s474, %s475
      %p484 = scmp.eq.s32.totalorder %s50, 0
      %p485 = por %p483, %p484
      %p486 = scmp.ne.s32.totalorder %s474, %s475
      %p487 = scmp.eq.s32.totalorder %s51, 1
      %p488 = por %p486, %p487
      %p490 = scmp.ne.s32.totalorder %s475, %s489
      %p491 = scmp.eq.s32.totalorder %s51, 0
      %p492 = por %p490, %p491
      %s493 = ssub.s32 %s45, %s52
      %p494 = scmp.eq.s32.totalorder %s493, 0
      %s496 = sadd.s32 %s495, 1
      %s497 = scalar_select %p494, %s495, %s496
      %p500 = pneg %p494
      %p501 = scmp.eq.s32.totalorder %s45, 1
      %p502 = por %p500, %p501
      %p503 = scmp.ne.s32.totalorder %s495, %s498
      %p504 = scmp.eq.s32.totalorder %s45, 0
      %p505 = por %p503, %p504
      %p506 = scmp.ne.s32.totalorder %s495, %s498
      %p507 = scmp.eq.s32.totalorder %s50, 1
      %p508 = por %p506, %p507
      %p509 = scmp.ne.s32.totalorder %s498, %s499
      %p510 = scmp.eq.s32.totalorder %s50, 0
      %p511 = por %p509, %p510
      %p512 = scmp.ne.s32.totalorder %s498, %s499
      %p513 = scmp.eq.s32.totalorder %s51, 1
      %p514 = por %p512, %p513
      %p516 = scmp.ne.s32.totalorder %s499, %s515
      %p517 = scmp.eq.s32.totalorder %s51, 0
      %p518 = por %p516, %p517
      %s519 = ssub.s32 %s45, %s52
      %p520 = scmp.eq.s32.totalorder %s519, 0
      %s522 = sadd.s32 %s521, 1
      %s523 = scalar_select %p520, %s521, %s522
      %p526 = pneg %p520
      %p527 = scmp.eq.s32.totalorder %s45, 1
      %p528 = por %p526, %p527
      %p529 = scmp.ne.s32.totalorder %s521, %s524
      %p530 = scmp.eq.s32.totalorder %s45, 0
      %p531 = por %p529, %p530
      %p532 = scmp.ne.s32.totalorder %s521, %s524
      %p533 = scmp.eq.s32.totalorder %s50, 1
      %p534 = por %p532, %p533
      %p535 = scmp.ne.s32.totalorder %s524, %s525
      %p536 = scmp.eq.s32.totalorder %s50, 0
      %p537 = por %p535, %p536
      %p538 = scmp.ne.s32.totalorder %s524, %s525
      %p539 = scmp.eq.s32.totalorder %s51, 1
      %p540 = por %p538, %p539
      %p542 = scmp.ne.s32.totalorder %s525, %s541
      %p543 = scmp.eq.s32.totalorder %s51, 0
      %p544 = por %p542, %p543
      %s545 = ssub.s32 %s45, %s52
      %p546 = scmp.eq.s32.totalorder %s545, 0
      %s548 = sadd.s32 %s547, 1
      %s549 = scalar_select %p546, %s547, %s548
      %p552 = pneg %p546
      %p553 = scmp.eq.s32.totalorder %s45, 1
      %p554 = por %p552, %p553
      %p555 = scmp.ne.s32.totalorder %s547, %s550
      %p556 = scmp.eq.s32.totalorder %s45, 0
      %p557 = por %p555, %p556
      %p558 = scmp.ne.s32.totalorder %s547, %s550
      %p559 = scmp.eq.s32.totalorder %s50, 1
      %p560 = por %p558, %p559
      %p561 = scmp.ne.s32.totalorder %s550, %s551
      %p562 = scmp.eq.s32.totalorder %s50, 0
      %p563 = por %p561, %p562
      %p564 = scmp.ne.s32.totalorder %s550, %s551
      %p565 = scmp.eq.s32.totalorder %s51, 1
      %p566 = por %p564, %p565
      %p568 = scmp.ne.s32.totalorder %s551, %s567
      %p569 = scmp.eq.s32.totalorder %s51, 0
      %p570 = por %p568, %p569
      %s571 = ssub.s32 %s45, %s52
      %p572 = scmp.eq.s32.totalorder %s571, 0
      %s574 = sadd.s32 %s573, 1
      %s575 = scalar_select %p572, %s573, %s574
      %p578 = pneg %p572
      %p579 = scmp.eq.s32.totalorder %s45, 1
      %p580 = por %p578, %p579
      %p581 = scmp.ne.s32.totalorder %s573, %s576
      %p582 = scmp.eq.s32.totalorder %s45, 0
      %p583 = por %p581, %p582
      %p584 = scmp.ne.s32.totalorder %s573, %s576
      %p585 = scmp.eq.s32.totalorder %s50, 1
      %p586 = por %p584, %p585
      %p587 = scmp.ne.s32.totalorder %s576, %s577
      %p588 = scmp.eq.s32.totalorder %s50, 0
      %p589 = por %p587, %p588
      %p590 = scmp.ne.s32.totalorder %s576, %s577
      %p591 = scmp.eq.s32.totalorder %s51, 1
      %p592 = por %p590, %p591
      %p594 = scmp.ne.s32.totalorder %s577, %s593
      %p595 = scmp.eq.s32.totalorder %s51, 0
      %p596 = por %p594, %p595
      %p597 = scmp.le.s32.totalorder 1, %s45
      %p598 = scmp.lt.s32.totalorder %s45, 3
      %p599 = pnand %p597, %p598
      %p600 = pneg %p599
      // Predicated region
      $region9: #{tpu_custom_call.1} parent=5 // pred_check
        _
      $region10: #{tpu_custom_call.1} parent=5 // pred_check_branch
        %602 = sbr.rel (%p599) target = $region12
      $region11: #{tpu_custom_call.1} parent=5 // pred_region
        %s603 = ssub.s32 %s45, 1
        // Predicated region
        $region13: #{tpu_custom_call.1} parent=11 // pred_check
          %p604 = pneg %p170
        $region14: #{tpu_custom_call.1} parent=11 // pred_check_branch
          %606 = sbr.rel (%p604) target = $region16
        $region15: #{tpu_custom_call.1} parent=11 // pred_region
          _
        $region16: #{tpu_custom_call.1} parent=11 // pred_fallthru
          _
        // Predicated region
        $region17: #{tpu_custom_call.1} parent=11 // pred_check
          %p607 = pneg %p191
        $region18: #{tpu_custom_call.1} parent=11 // pred_check_branch
          %609 = sbr.rel (%p607) target = $region20
        $region19: #{tpu_custom_call.1} parent=11 // pred_region
          _
        $region20: #{tpu_custom_call.1} parent=11 // pred_fallthru
          _
        // Predicated region
        $region21: #{tpu_custom_call.1} parent=11 // pred_check
          %p610 = pneg %p212
        $region22: #{tpu_custom_call.1} parent=11 // pred_check_branch
          %612 = sbr.rel (%p610) target = $region24
        $region23: #{tpu_custom_call.1} parent=11 // pred_region
          _
        $region24: #{tpu_custom_call.1} parent=11 // pred_fallthru
          _
        // Predicated region
        $region25: #{tpu_custom_call.1} parent=11 // pred_check
          %p613 = pneg %p233
        $region26: #{tpu_custom_call.1} parent=11 // pred_check_branch
          %615 = sbr.rel (%p613) target = $region28
        $region27: #{tpu_custom_call.1} parent=11 // pred_region
          _
        $region28: #{tpu_custom_call.1} parent=11 // pred_fallthru
          _
        // Predicated region
        $region29: #{tpu_custom_call.1} parent=11 // pred_check
          %p616 = pneg %p254
        $region30: #{tpu_custom_call.1} parent=11 // pred_check_branch
          %618 = sbr.rel (%p616) target = $region32
        $region31: #{tpu_custom_call.1} parent=11 // pred_region
          _
        $region32: #{tpu_custom_call.1} parent=11 // pred_fallthru
          _
        // Predicated region
        $region33: #{tpu_custom_call.1} parent=11 // pred_check
          %p619 = pneg %p275
        $region34: #{tpu_custom_call.1} parent=11 // pred_check_branch
          %621 = sbr.rel (%p619) target = $region36
        $region35: #{tpu_custom_call.1} parent=11 // pred_region
          _
        $region36: #{tpu_custom_call.1} parent=11 // pred_fallthru
          _
        // Predicated region
        $region37: #{tpu_custom_call.1} parent=11 // pred_check
          %p622 = pneg %p296
        $region38: #{tpu_custom_call.1} parent=11 // pred_check_branch
          %624 = sbr.rel (%p622) target = $region40
        $region39: #{tpu_custom_call.1} parent=11 // pred_region
          _
        $region40: #{tpu_custom_call.1} parent=11 // pred_fallthru
          _
        // Predicated region
        $region41: #{tpu_custom_call.1} parent=11 // pred_check
          %p625 = pneg %p317
        $region42: #{tpu_custom_call.1} parent=11 // pred_check_branch
          %627 = sbr.rel (%p625) target = $region44
        $region43: #{tpu_custom_call.1} parent=11 // pred_region
          _
        $region44: #{tpu_custom_call.1} parent=11 // pred_fallthru
          _
        // Predicated region
        $region45: #{tpu_custom_call.1} parent=11 // pred_check
          %p628 = pneg %p338
        $region46: #{tpu_custom_call.1} parent=11 // pred_check_branch
          %630 = sbr.rel (%p628) target = $region48
        $region47: #{tpu_custom_call.1} parent=11 // pred_region
          _
        $region48: #{tpu_custom_call.1} parent=11 // pred_fallthru
          _
        // Predicated region
        $region49: #{tpu_custom_call.1} parent=11 // pred_check
          %p631 = pneg %p359
        $region50: #{tpu_custom_call.1} parent=11 // pred_check_branch
          %633 = sbr.rel (%p631) target = $region52
        $region51: #{tpu_custom_call.1} parent=11 // pred_region
          _
        $region52: #{tpu_custom_call.1} parent=11 // pred_fallthru
          _
        // Predicated region
        $region53: #{tpu_custom_call.1} parent=11 // pred_check
          %p634 = pneg %p380
        $region54: #{tpu_custom_call.1} parent=11 // pred_check_branch
          %636 = sbr.rel (%p634) target = $region56
        $region55: #{tpu_custom_call.1} parent=11 // pred_region
          _
        $region56: #{tpu_custom_call.1} parent=11 // pred_fallthru
          _
        // Predicated region
        $region57: #{tpu_custom_call.1} parent=11 // pred_check
          %p637 = pneg %p401
        $region58: #{tpu_custom_call.1} parent=11 // pred_check_branch
          %639 = sbr.rel (%p637) target = $region60
        $region59: #{tpu_custom_call.1} parent=11 // pred_region
          _
        $region60: #{tpu_custom_call.1} parent=11 // pred_fallthru
          _
        // Predicated region
        $region61: #{tpu_custom_call.1} parent=11 // pred_check
          %p640 = pneg %p422
        $region62: #{tpu_custom_call.1} parent=11 // pred_check_branch
          %642 = sbr.rel (%p640) target = $region64
        $region63: #{tpu_custom_call.1} parent=11 // pred_region
          _
        $region64: #{tpu_custom_call.1} parent=11 // pred_fallthru
          _
        // Predicated region
        $region65: #{tpu_custom_call.1} parent=11 // pred_check
          %p643 = pneg %p443
        $region66: #{tpu_custom_call.1} parent=11 // pred_check_branch
          %645 = sbr.rel (%p643) target = $region68
        $region67: #{tpu_custom_call.1} parent=11 // pred_region
          _
        $region68: #{tpu_custom_call.1} parent=11 // pred_fallthru
          _
        // Predicated region
        $region69: #{tpu_custom_call.1} parent=11 // pred_check
          %p646 = pneg %p464
        $region70: #{tpu_custom_call.1} parent=11 // pred_check_branch
          %648 = sbr.rel (%p646) target = $region72
        $region71: #{tpu_custom_call.1} parent=11 // pred_region
          _
        $region72: #{tpu_custom_call.1} parent=11 // pred_fallthru
          _
        // Predicated region
        $region73: #{tpu_custom_call.1} parent=11 // pred_check
          %p649 = pneg %p485
        $region74: #{tpu_custom_call.1} parent=11 // pred_check_branch
          %651 = sbr.rel (%p649) target = $region76
        $region75: #{tpu_custom_call.1} parent=11 // pred_region
          _
        $region76: #{tpu_custom_call.1} parent=11 // pred_fallthru
          _
      $region12: #{tpu_custom_call.1} parent=5 // pred_fallthru
        _
      %p652 = scmp.lt.s32.totalorder %s45, 2
      // Predicated region
      $region77: #{tpu_custom_call.1} parent=5 // pred_check
        %p653 = pneg %p652
      $region78: #{tpu_custom_call.1} parent=5 // pred_check_branch
        %655 = sbr.rel (%p653) target = $region80
      $region79: #{tpu_custom_call.1} parent=5 // pred_region
        // Predicated region
        $region81: #{tpu_custom_call.1} parent=79 // pred_check
          %p656 = pneg %p65
        $region82: #{tpu_custom_call.1} parent=79 // pred_check_branch
          %658 = sbr.rel (%p656) target = $region84
        $region83: #{tpu_custom_call.1} parent=79 // pred_region
          %s659 = smul.u32 2, %s45
          %p660 = scmp.lt.s32.totalorder %s659, 3
          %s661 = scalar_select %p660, %s659, 3
          %s662 = smul.addr %s661, 8
          %s663 = scalar_lea.vmem %s0, %s662
          %s664 = smul.u32 2, %s45
        $region84: #{tpu_custom_call.1} parent=79 // pred_fallthru
          _
        // Predicated region
        $region85: #{tpu_custom_call.1} parent=79 // pred_check
          %p665 = pneg %p91
        $region86: #{tpu_custom_call.1} parent=79 // pred_check_branch
          %667 = sbr.rel (%p665) target = $region88
        $region87: #{tpu_custom_call.1} parent=79 // pred_region
          %s668 = sand.u32 %s81, 1
          %s669 = scalar_lea.sflag [#allocation3], %s668
          %s670 = sand.u32 %s81, 1
          %s671 = smul.addr %s670, 2
          %s672 = scalar_lea.vmem [#allocation2], %s671
          %s673 = smul.u32 2, %s45
          %s675 = ssub.s32 32, 32
          %676 = vsyncadd %s669, %s675
          %s677 = smul.addr %s673, 16
          %s678 = scalar_lea.hbm %s1, %s677
          %s679 = sshll.u32 %s672, 4
          %s680 = int_to_ptr.vmem [resolvable:$true] %s679
          %685 = dma.hbm_to_vmem [thread:$0]  %s678, 32, %s680, %s669, 16, 16, 1
        $region88: #{tpu_custom_call.1} parent=79 // pred_fallthru
          _
        // Predicated region
        $region89: #{tpu_custom_call.1} parent=79 // pred_check
          %p686 = pneg %p117
        $region90: #{tpu_custom_call.1} parent=79 // pred_check_branch
          %688 = sbr.rel (%p686) target = $region92
        $region91: #{tpu_custom_call.1} parent=79 // pred_region
          %s689 = sand.u32 %s45, 1
          %s690 = scalar_lea.sflag [#allocation6], %s689
          %s691 = sand.u32 %s107, 1
          %s692 = smul.addr %s691, 128
          %s693 = scalar_lea.vmem [#allocation5], %s692
          %s694 = smul.u32 2, %s45
          %s696 = ssub.s32 2048, 2048
          %697 = vsyncadd %s690, %s696
          %s698 = smul.addr %s694, 8
          %s699 = smul.addr %s698, 128
          %s700 = scalar_lea.hbm %s2, %s699
          %s701 = sshll.u32 %s693, 4
          %s702 = int_to_ptr.vmem [resolvable:$true] %s701
          %707 = dma.hbm_to_vmem [thread:$0]  %s700, 2048, %s702, %s690, 128, 128, 8
        $region92: #{tpu_custom_call.1} parent=79 // pred_fallthru
          _
        // Predicated region
        $region93: #{tpu_custom_call.1} parent=79 // pred_check
          %p708 = pneg %p143
        $region94: #{tpu_custom_call.1} parent=79 // pred_check_branch
          %710 = sbr.rel (%p708) target = $region96
        $region95: #{tpu_custom_call.1} parent=79 // pred_region
          %s711 = sand.u32 %s45, 1
          %s712 = scalar_lea.sflag [#allocation6], %s711
          %s713 = sand.u32 %s133, 1
          %s714 = smul.addr %s713, 2
          %s715 = scalar_lea.vmem [#allocation7], %s714
          %s716 = smul.u32 2, %s45
          %s718 = ssub.s32 32, 32
          %719 = vsyncadd %s712, %s718
          %s720 = smul.addr %s716, 16
          %s721 = scalar_lea.hbm %s3, %s720
          %s722 = sshll.u32 %s715, 4
          %s723 = int_to_ptr.vmem [resolvable:$true] %s722
          %728 = dma.hbm_to_vmem [thread:$0]  %s721, 32, %s723, %s712, 16, 16, 1
        $region96: #{tpu_custom_call.1} parent=79 // pred_fallthru
          _
      $region80: #{tpu_custom_call.1} parent=5 // pred_fallthru
        _
      %p729 = scmp.le.s32.totalorder 1, %s45
      %p730 = scmp.lt.s32.totalorder %s45, 3
      %p731 = pnand %p729, %p730
      %p732 = pneg %p731
      // Predicated region
      $region97: #{tpu_custom_call.1} parent=5 // pred_check
        _
      $region98: #{tpu_custom_call.1} parent=5 // pred_check_branch
        %734 = sbr.rel (%p731) target = $region100
      $region99: #{tpu_custom_call.1} parent=5 // pred_region
        %s735 = ssub.s32 %s45, 1
        %s736 = sand.u32 %s84, 1
        %s737 = scalar_lea.sflag [#allocation3], %s736
        %s738 = sand.u32 %s84, 1
        %s739 = smul.addr %s738, 2
        %s740 = scalar_lea.vmem [#allocation2], %s739
        // Predicated region
        $region101: #{tpu_custom_call.1} parent=99 // pred_check
          %p741 = pneg %p97
        $region102: #{tpu_custom_call.1} parent=99 // pred_check_branch
          %743 = sbr.rel (%p741) target = $region104
        $region103: #{tpu_custom_call.1} parent=99 // pred_region
          %744 = dma.done %s737, 32
        $region104: #{tpu_custom_call.1} parent=99 // pred_fallthru
          _
        %s745 = sand.u32 %s50, 1
        %s746 = scalar_lea.sflag [#allocation6], %s745
        %s747 = sand.u32 %s110, 1
        %s748 = smul.addr %s747, 128
        %s749 = scalar_lea.vmem [#allocation5], %s748
        // Predicated region
        $region105: #{tpu_custom_call.1} parent=99 // pred_check
          %p750 = pneg %p123
        $region106: #{tpu_custom_call.1} parent=99 // pred_check_branch
          %752 = sbr.rel (%p750) target = $region108
        $region107: #{tpu_custom_call.1} parent=99 // pred_region
          %753 = dma.done %s746, 2048
        $region108: #{tpu_custom_call.1} parent=99 // pred_fallthru
          _
        %s754 = sand.u32 %s50, 1
        %s755 = scalar_lea.sflag [#allocation6], %s754
        %s756 = sand.u32 %s136, 1
        %s757 = smul.addr %s756, 2
        %s758 = scalar_lea.vmem [#allocation7], %s757
        // Predicated region
        $region109: #{tpu_custom_call.1} parent=99 // pred_check
          %p759 = pneg %p149
        $region110: #{tpu_custom_call.1} parent=99 // pred_check_branch
          %761 = sbr.rel (%p759) target = $region112
        $region111: #{tpu_custom_call.1} parent=99 // pred_region
          %762 = dma.done %s755, 32
        $region112: #{tpu_custom_call.1} parent=99 // pred_fallthru
          _
        %s763 = smul.u32 2, %s50
        %p764 = scmp.lt.s32.totalorder %s763, 3
        %s765 = scalar_select %p764, %s763, 3
        %s766 = smul.addr %s765, 8
        %s767 = scalar_lea.vmem %s0, %s766
        %p768 = pneg %p71
        %p769 = pneg %p68
        %s770 = sand.u32 %s84, 1
        %s771 = scalar_lea.sflag [#allocation3], %s770
        %s772 = sand.u32 %s84, 1
        %s773 = smul.addr %s772, 2
        %s774 = scalar_lea.vmem [#allocation2], %s773
        %p775 = pneg %p97
        %p776 = pneg %p94
        %s777 = sand.u32 %s50, 1
        %s778 = scalar_lea.sflag [#allocation6], %s777
        %s779 = sand.u32 %s110, 1
        %s780 = smul.addr %s779, 128
        %s781 = scalar_lea.vmem [#allocation5], %s780
        %p782 = pneg %p123
        %p783 = pneg %p120
        %s784 = sand.u32 %s50, 1
        %s785 = scalar_lea.sflag [#allocation6], %s784
        %s786 = sand.u32 %s136, 1
        %s787 = smul.addr %s786, 2
        %s788 = scalar_lea.vmem [#allocation7], %s787
        %p789 = pneg %p149
        %p790 = pneg %p146
        %p791 = pneg %p170
        %p792 = pneg %p167
        %p793 = pneg %p191
        %p794 = pneg %p188
        %p795 = pneg %p212
        %p796 = pneg %p209
        %p797 = pneg %p233
        %p798 = pneg %p230
        %p799 = pneg %p254
        %p800 = pneg %p251
        %p801 = pneg %p275
        %p802 = pneg %p272
        %p803 = pneg %p296
        %p804 = pneg %p293
        %p805 = pneg %p317
        %p806 = pneg %p314
        %p807 = pneg %p338
        %p808 = pneg %p335
        %p809 = pneg %p359
        %p810 = pneg %p356
        %p811 = pneg %p380
        %p812 = pneg %p377
        %p813 = pneg %p401
        %p814 = pneg %p398
        %p815 = pneg %p422
        %p816 = pneg %p419
        %p817 = pneg %p443
        %p818 = pneg %p440
        %p819 = pneg %p464
        %p820 = pneg %p461
        %p821 = pneg %p485
        %p822 = pneg %p482
        %p823 = pneg %p511
        %p824 = pneg %p508
        %s825 = sand.u32 %s498, 1
        %s826 = scalar_lea.sflag [#allocation4], %s825
        %s827 = sand.u32 %s498, 1
        %s828 = smul.addr %s827, 16
        %s829 = scalar_lea.vmem [#allocation8], %s828
        %p830 = pneg %p537
        %p831 = pneg %p534
        %s832 = sand.u32 %s50, 1
        %s833 = scalar_lea.sflag [#allocation10], %s832
        %s834 = sand.u32 %s524, 1
        %s835 = smul.addr %s834, 2
        %s836 = scalar_lea.vmem [#allocation9], %s835
        %p837 = pneg %p563
        %p838 = pneg %p560
        %s839 = sand.u32 %s50, 1
        %s840 = scalar_lea.sflag [#allocation10], %s839
        %s841 = sand.u32 %s550, 1
        %s842 = smul.addr %s841, 128
        %s843 = scalar_lea.vmem [#allocation11], %s842
        %p844 = pneg %p589
        %p845 = pneg %p586
        %s846 = sand.u32 %s576, 1
        %s847 = scalar_lea.sflag [#allocation13], %s846
        %s848 = sand.u32 %s576, 1
        %s849 = smul.addr %s848, 2
        %s850 = scalar_lea.vmem [#allocation12], %s849
        %s851 = smul.u32 2, %s50
        %p852 = scmp.lt.s32.totalorder %s851, 3
        %s853 = scalar_select %p852, %s851, 3
        %s854 = smul.addr %s853, 8
        %s855 = scalar_lea.vmem %s0, %s854
        %s856 = smul.u32 2, %s50
        %s857 = smul.u32 2, %s50
        %s858 = smul.u32 2, %s50
        %s859 = smul.u32 2, %s50
        %s860 = smul.u32 2, %s50
        %s861 = smul.u32 2, %s50
        %s862 = smul.u32 2, %s50
        %s863 = smul.u32 2, %s50
        %v865 = vld [vmem:[%s855] sm:$0xff]
        %v866 = vld [vmem:[%s855 + $0x8] sm:$0xff]
        %v867 = vld [vmem:[%s4] sm:$0x1]
        %v868 = vld [vmem:[%s5] sm:$0x1]
        %vm869 = vcmask 523264
        %v870 = vsel %vm869, %v865, 0.0
        %871 = vadd.xlane.f32.xlu0 %v870
        %v872 = vpop.xlane.xlu0 %871
        %v873 = vsel %vm869, %v866, 0.0
        %874 = vadd.xlane.f32.xlu0 %v873
        %v875 = vpop.xlane.xlu0 %874
        %v876 = vrcp.pop 64.0
        %v877 = vmul.f32 %v872, %v876
        %v878 = vmul.f32 %v875, %v876
        %v879 = vsub.f32 %v865, %v877
        %v880 = vsub.f32 %v866, %v878
        %v881 = vmul.f32 %v879, %v879
        %v882 = vmul.f32 %v880, %v880
        %v883 = vsel %vm869, %v881, 0.0
        %884 = vadd.xlane.f32.xlu0 %v883
        %v885 = vpop.xlane.xlu0 %884
        %v886 = vsel %vm869, %v882, 0.0
        %887 = vadd.xlane.f32.xlu0 %v886
        %v888 = vpop.xlane.xlu0 %887
        %v889 = vmul.f32 %v885, %v876
        %v890 = vmul.f32 %v888, %v876
        %v891 = vadd.f32 %v889, 1e-05
        %v892 = vadd.f32 %v890, 1e-05
        %v893 = vrsqrt.pop %v891
        %v894 = vrsqrt.pop %v892
        %v895 = vmul.f32 %v879, %v893
        %v896 = vmul.f32 %v880, %v894
        %v898 = vlaneseq
        %v899 = vshrl.u32 %v898, 7
        %v900 = vsub.s32 0, %v899
        %v901 = vrot.slane %v867, %v900
        %v903 = vmul.f32 %v895, %v901
        %v904 = vmul.f32 %v896, %v901
        %v906 = vlaneseq
        %v907 = vshrl.u32 %v906, 7
        %v908 = vsub.s32 0, %v907
        %v909 = vrot.slane %v868, %v908
        %v911 = vadd.f32 %v903, %v909
        %v912 = vadd.f32 %v904, %v909
        %v913 = vld [vmem:[%s6] sm:$0x1]
        %v914 = vld [vmem:[%s7] sm:$0x1]
        %v915 = vsel %vm869, %v911, 0.0
        %916 = vadd.xlane.f32.xlu0 %v915
        %v917 = vpop.xlane.xlu0 %916
        %v918 = vsel %vm869, %v912, 0.0
        %919 = vadd.xlane.f32.xlu0 %v918
        %v920 = vpop.xlane.xlu0 %919
        %v921 = vmul.f32 %v917, %v876
        %v922 = vmul.f32 %v920, %v876
        %v923 = vsub.f32 %v911, %v921
        %v924 = vsub.f32 %v912, %v922
        %v925 = vmul.f32 %v923, %v923
        %v926 = vmul.f32 %v924, %v924
        %v927 = vsel %vm869, %v925, 0.0
        %928 = vadd.xlane.f32.xlu0 %v927
        %v929 = vpop.xlane.xlu0 %928
        %v930 = vsel %vm869, %v926, 0.0
        %931 = vadd.xlane.f32.xlu0 %v930
        %v932 = vpop.xlane.xlu0 %931
        %v933 = vmul.f32 %v929, %v876
        %v934 = vmul.f32 %v932, %v876
        %v935 = vadd.f32 %v933, 1e-05
        %v936 = vadd.f32 %v934, 1e-05
        %v937 = vrsqrt.pop %v935
        %v938 = vrsqrt.pop %v936
        %v939 = vmul.f32 %v923, %v937
        %v940 = vmul.f32 %v924, %v938
        %v942 = vlaneseq
        %v943 = vshrl.u32 %v942, 7
        %v944 = vsub.s32 0, %v943
        %v945 = vrot.slane %v913, %v944
        %v947 = vmul.f32 %v939, %v945
        %v948 = vmul.f32 %v940, %v945
        %v950 = vlaneseq
        %v951 = vshrl.u32 %v950, 7
        %v952 = vsub.s32 0, %v951
        %v953 = vrot.slane %v914, %v952
        %v955 = vadd.f32 %v947, %v953
        %v956 = vadd.f32 %v948, %v953
        %v957 = vlaneseq
        %v958 = vshrl.u32 %v957, 7
        %v959 = vrot.slane %v955, 7
        %v960 = vrot.slane %v956, 7
        %vm961 = vcmp.lt.s32.totalorder %v958, 1
        %v962 = vsel %vm961, %v959, %v960
        %v963 = vsel %vm961, %v960, %v959
        %vm964 = vcmp.eq.s32.totalorder %v958, 0
        %v965 = vld [vmem:[%s740] sm:$0x1]
        %v966 = vld [vmem:[%s740 + $0x1] sm:$0x1]
        %v969 = vlaneseq
        %v970 = vshrl.u32 %v969, 7
        %v971 = vsub.s32 0, %v970
        %v972 = vrot.slane %v965, %v971
        %v973 = vlaneseq
        %v974 = vshrl.u32 %v973, 7
        %v975 = vsub.s32 0, %v974
        %v976 = vrot.slane %v966, %v975
        %v979 = vsel %vm964, %v972, %v963
        %v980 = vsel %vm964, %v976, %v962
        %v981 = vpack.c.bf16 %v956, %v955
        %v982 = vld [vmem:[%s10] sm:$0xff]
        %v983 = vld [vmem:[%s10 + $0x8] sm:$0xff]
        %v984 = vld [vmem:[%s10 + $0x10] sm:$0xff]
        %v985 = vld [vmem:[%s10 + $0x18] sm:$0xff]
        %v986 = vld [vmem:[%s10 + $0x20] sm:$0xff]
        %v987 = vld [vmem:[%s10 + $0x28] sm:$0xff]
        %v988 = vld [vmem:[%s10 + $0x30] sm:$0xff]
        %v989 = vld [vmem:[%s10 + $0x38] sm:$0xff]
        %v990 = vpack.c.bf16 %v980, %v979
        %v991 = vld [vmem:[%s11] sm:$0xff]
        %v992 = vld [vmem:[%s11 + $0x8] sm:$0xff]
        %v993 = vld [vmem:[%s11 + $0x10] sm:$0xff]
        %v994 = vld [vmem:[%s11 + $0x18] sm:$0xff]
        %v995 = vld [vmem:[%s11 + $0x20] sm:$0xff]
        %v996 = vld [vmem:[%s11 + $0x28] sm:$0xff]
        %v997 = vld [vmem:[%s11 + $0x30] sm:$0xff]
        %v998 = vld [vmem:[%s11 + $0x38] sm:$0xff]
        %v1007 = vunpack.c.l.b16 %v991
        %v1008 = vunpack.c.h.b16 %v991
        %v1009 = vunpack.c.l.b16 %v992
        %v1010 = vunpack.c.h.b16 %v992
        %v1011 = vunpack.c.l.b16 %v993
        %v1012 = vunpack.c.h.b16 %v993
        %v1013 = vunpack.c.l.b16 %v994
        %v1014 = vunpack.c.h.b16 %v994
        %v1015 = vunpack.c.l.b16 %v995
        %v1016 = vunpack.c.h.b16 %v995
        %v1017 = vunpack.c.l.b16 %v996
        %v1018 = vunpack.c.h.b16 %v996
        %v1019 = vunpack.c.l.b16 %v997
        %v1020 = vunpack.c.h.b16 %v997
        %v1021 = vunpack.c.l.b16 %v998
        %v1022 = vunpack.c.h.b16 %v998
        %v1023 = vpack.c.b16 %v1009, %v1007
        %v1024 = vpack.c.b16 %v1010, %v1008
        %v1025 = vpack.c.b16 %v1013, %v1011
        %v1026 = vpack.c.b16 %v1014, %v1012
        %v1027 = vpack.c.b16 %v1017, %v1015
        %v1028 = vpack.c.b16 %v1018, %v1016
        %v1029 = vpack.c.b16 %v1021, %v1019
        %v1030 = vpack.c.b16 %v1022, %v1020
        %v1040 = vsel %vm869, %v990, 0
        %1042 = vmatprep.subr.bf16.mxu0 0
        %1043 = vmatpush1.bf16.msra.mxu0 0
        %1044 = vmatprep.subr.bf16.mxu0 0
        %1045 = vmatpush1.bf16.msra.mxu0 0
        %1046 = vmatprep.subr.bf16.mxu0 0
        %1047 = vmatpush1.bf16.msra.mxu0 0
        %1048 = vmatprep.subr.bf16.mxu0 0
        %1049 = vmatpush1.bf16.msra.mxu0 0
        %1050 = vmatprep.subr.bf16.mxu0 %v1030
        %1051 = vmatpush1.bf16.msra.mxu0 %v1029
        %1052 = vmatprep.subr.bf16.mxu0 %v1028
        %1053 = vmatpush1.bf16.msra.mxu0 %v1027
        %1054 = vmatprep.subr.bf16.mxu0 %v1026
        %1055 = vmatpush1.bf16.msra.mxu0 %v1025
        %1056 = vmatprep.subr.bf16.mxu0 %v1024
        %1057 = vmatpush1.bf16.msra.mxu0 %v1023
        %1058 = vmatprep.subr.bf16.mxu0 0
        %1059 = vmatpush2.bf16.msra.mxu0 0
        %1060 = vmatprep.subr.bf16.mxu0 0
        %1061 = vmatpush2.bf16.msra.mxu0 0
        %1062 = vmatprep.subr.bf16.mxu0 0
        %1063 = vmatpush2.bf16.msra.mxu0 0
        %1064 = vmatprep.subr.bf16.mxu0 0
        %1065 = vmatpush2.bf16.msra.mxu0 0
        %1066 = vmatprep.subr.bf16.mxu0 0
        %1067 = vmatpush2.bf16.msra.mxu0 0
        %1068 = vmatprep.subr.bf16.mxu0 0
        %1069 = vmatpush2.bf16.msra.mxu0 0
        %1070 = vmatprep.subr.bf16.mxu0 0
        %1071 = vmatpush2.bf16.msra.mxu0 0
        %1072 = vmatprep.subr.bf16.mxu0 0
        %1073 = vmatpush2.bf16.msra.mxu0 0
        %1074 = vmatprep.mubr.bf16.mxu0 0
        %1075 = vmatmul.mubr.bf16.gmra.mxu0 %v1040
        %v1076 = vpop.f32.mrf.mxu0
        %v1077 = vadd.f32 0.0, %v1076
        %v1078 = vpop.f32.mrf.mxu0
        %v1079 = vadd.f32 0.0, %v1078
        %v1080 = vpop.f32.mrf.mxu0
        %v1081 = vadd.f32 0.0, %v1080
        %v1082 = vpop.f32.mrf.mxu0
        %v1083 = vadd.f32 0.0, %v1082
        %1084 = vdwg.mxu0
        %v1093 = vunpack.c.l.b16 %v982
        %v1094 = vunpack.c.h.b16 %v982
        %v1095 = vunpack.c.l.b16 %v983
        %v1096 = vunpack.c.h.b16 %v983
        %v1097 = vunpack.c.l.b16 %v984
        %v1098 = vunpack.c.h.b16 %v984
        %v1099 = vunpack.c.l.b16 %v985
        %v1100 = vunpack.c.h.b16 %v985
        %v1101 = vunpack.c.l.b16 %v986
        %v1102 = vunpack.c.h.b16 %v986
        %v1103 = vunpack.c.l.b16 %v987
        %v1104 = vunpack.c.h.b16 %v987
        %v1105 = vunpack.c.l.b16 %v988
        %v1106 = vunpack.c.h.b16 %v988
        %v1107 = vunpack.c.l.b16 %v989
        %v1108 = vunpack.c.h.b16 %v989
        %v1109 = vpack.c.b16 %v1095, %v1093
        %v1110 = vpack.c.b16 %v1096, %v1094
        %v1111 = vpack.c.b16 %v1099, %v1097
        %v1112 = vpack.c.b16 %v1100, %v1098
        %v1113 = vpack.c.b16 %v1103, %v1101
        %v1114 = vpack.c.b16 %v1104, %v1102
        %v1115 = vpack.c.b16 %v1107, %v1105
        %v1116 = vpack.c.b16 %v1108, %v1106
        %v1126 = vsel %vm869, %v981, 0
        %1128 = vmatprep.subr.bf16.mxu0 0
        %1129 = vmatpush1.bf16.msra.mxu0 0
        %1130 = vmatprep.subr.bf16.mxu0 0
        %1131 = vmatpush1.bf16.msra.mxu0 0
        %1132 = vmatprep.subr.bf16.mxu0 0
        %1133 = vmatpush1.bf16.msra.mxu0 0
        %1134 = vmatprep.subr.bf16.mxu0 0
        %1135 = vmatpush1.bf16.msra.mxu0 0
        %1136 = vmatprep.subr.bf16.mxu0 %v1116
        %1137 = vmatpush1.bf16.msra.mxu0 %v1115
        %1138 = vmatprep.subr.bf16.mxu0 %v1114
        %1139 = vmatpush1.bf16.msra.mxu0 %v1113
        %1140 = vmatprep.subr.bf16.mxu0 %v1112
        %1141 = vmatpush1.bf16.msra.mxu0 %v1111
        %1142 = vmatprep.subr.bf16.mxu0 %v1110
        %1143 = vmatpush1.bf16.msra.mxu0 %v1109
        %1144 = vmatprep.subr.bf16.mxu0 0
        %1145 = vmatpush2.bf16.msra.mxu0 0
        %1146 = vmatprep.subr.bf16.mxu0 0
        %1147 = vmatpush2.bf16.msra.mxu0 0
        %1148 = vmatprep.subr.bf16.mxu0 0
        %1149 = vmatpush2.bf16.msra.mxu0 0
        %1150 = vmatprep.subr.bf16.mxu0 0
        %1151 = vmatpush2.bf16.msra.mxu0 0
        %1152 = vmatprep.subr.bf16.mxu0 0
        %1153 = vmatpush2.bf16.msra.mxu0 0
        %1154 = vmatprep.subr.bf16.mxu0 0
        %1155 = vmatpush2.bf16.msra.mxu0 0
        %1156 = vmatprep.subr.bf16.mxu0 0
        %1157 = vmatpush2.bf16.msra.mxu0 0
        %1158 = vmatprep.subr.bf16.mxu0 0
        %1159 = vmatpush2.bf16.msra.mxu0 0
        %1160 = vmatprep.mubr.bf16.mxu0 0
        %1161 = vmatmul.mubr.bf16.gmra.mxu0 %v1126
        %v1162 = vpop.f32.mrf.mxu0
        %v1163 = vadd.f32 %v1077, %v1162
        %v1164 = vpop.f32.mrf.mxu0
        %v1165 = vadd.f32 %v1079, %v1164
        %v1166 = vpop.f32.mrf.mxu0
        %v1167 = vadd.f32 %v1081, %v1166
        %v1168 = vpop.f32.mrf.mxu0
        %v1169 = vadd.f32 %v1083, %v1168
        %1170 = vdwg.mxu0
        %v1171 = vxor.u32 %v1165, 2147483648
        %v1172 = vxor.u32 %v1169, 2147483648
        %v1173 = vmul.f32 %v1171, 1.442695
        %v1174 = vpow.pop %v1173
        %v1175 = vmul.f32 %v1172, 1.442695
        %v1176 = vpow.pop %v1175
        %v1177 = vadd.f32 %v1174, 1.0
        %v1178 = vadd.f32 %v1176, 1.0
        %v1179 = vrcp.pop %v1177
        %v1180 = vmul.f32 1.0, %v1179
        %v1181 = vrcp.pop %v1178
        %v1182 = vmul.f32 1.0, %v1181
        %v1183 = vmul.f32 %v1165, %v1180
        %v1184 = vmul.f32 %v1169, %v1182
        %1187 = vrot.lane.b32.xlu0 %v1163, 96
        %v1188 = vpop.permute.xlu0 %1187
        %1189 = vrot.lane.b32.xlu0 %v1167, 96
        %v1190 = vpop.permute.xlu0 %1189
        %v1193 = vcombine.high %v1163, 0.0
        %v1195 = vunpack.c.l.s4 1983009808
        %v1196 = vunpack.c.0.s8 %v1195
        %v1197 = vlaneseq
        %v1198 = vshrl.u32 %v1197, 7
        %v1199 = vsub.s32 %v1196, %v1198
        %v1200 = vrot.slane %v1163, %v1199
        %v1202 = vunpack.c.l.s4 1983009808
        %v1203 = vunpack.c.0.s8 %v1202
        %v1204 = vlaneseq
        %v1205 = vshrl.u32 %v1204, 7
        %v1206 = vsub.s32 %v1203, %v1205
        %v1207 = vrot.slane %v1193, %v1206
        %v1208 = vcombine.high %v1188, 0.0
        %v1210 = vunpack.c.l.s4 1983009808
        %v1211 = vunpack.c.0.s8 %v1210
        %v1212 = vlaneseq
        %v1213 = vshrl.u32 %v1212, 7
        %v1214 = vsub.s32 %v1211, %v1213
        %v1215 = vrot.slane %v1188, %v1214
        %v1217 = vunpack.c.l.s4 1983009808
        %v1218 = vunpack.c.0.s8 %v1217
        %v1219 = vlaneseq
        %v1220 = vshrl.u32 %v1219, 7
        %v1221 = vsub.s32 %v1218, %v1220
        %v1222 = vrot.slane %v1208, %v1221
        %v1223 = vcombine.low %v1200, %v1215
        %v1224 = vcombine.high %v1200, %v1215
        %v1226 = vunpack.c.l.s4 1934713408
        %v1227 = vunpack.c.0.s8 %v1226
        %v1228 = vlaneseq
        %v1229 = vshrl.u32 %v1228, 7
        %v1230 = vsub.s32 %v1227, %v1229
        %v1231 = vrot.slane %v1223, %v1230
        %v1233 = vunpack.c.l.s4 1934713408
        %v1234 = vunpack.c.0.s8 %v1233
        %v1235 = vlaneseq
        %v1236 = vshrl.u32 %v1235, 7
        %v1237 = vsub.s32 %v1234, %v1236
        %v1238 = vrot.slane %v1224, %v1237
        %v1239 = vcombine.low %v1207, %v1222
        %v1240 = vcombine.high %v1207, %v1222
        %v1242 = vunpack.c.l.s4 1934713408
        %v1243 = vunpack.c.0.s8 %v1242
        %v1244 = vlaneseq
        %v1245 = vshrl.u32 %v1244, 7
        %v1246 = vsub.s32 %v1243, %v1245
        %v1247 = vrot.slane %v1239, %v1246
        %v1249 = vunpack.c.l.s4 1934713408
        %v1250 = vunpack.c.0.s8 %v1249
        %v1251 = vlaneseq
        %v1252 = vshrl.u32 %v1251, 7
        %v1253 = vsub.s32 %v1250, %v1252
        %v1254 = vrot.slane %v1240, %v1253
        %v1255 = vcombine.high %v1231, 0.0
        %v1256 = vcombine.high %v1238, 0.0
        %v1257 = vcombine.high %v1247, 0.0
        %v1258 = vcombine.high %v1254, 0.0
        %v1259 = vcombine.high %v1167, 0.0
        %v1261 = vunpack.c.l.s4 1983009808
        %v1262 = vunpack.c.0.s8 %v1261
        %v1263 = vlaneseq
        %v1264 = vshrl.u32 %v1263, 7
        %v1265 = vsub.s32 %v1262, %v1264
        %v1266 = vrot.slane %v1167, %v1265
        %v1268 = vunpack.c.l.s4 1983009808
        %v1269 = vunpack.c.0.s8 %v1268
        %v1270 = vlaneseq
        %v1271 = vshrl.u32 %v1270, 7
        %v1272 = vsub.s32 %v1269, %v1271
        %v1273 = vrot.slane %v1259, %v1272
        %v1274 = vcombine.high %v1190, 0.0
        %v1276 = vunpack.c.l.s4 1983009808
        %v1277 = vunpack.c.0.s8 %v1276
        %v1278 = vlaneseq
        %v1279 = vshrl.u32 %v1278, 7
        %v1280 = vsub.s32 %v1277, %v1279
        %v1281 = vrot.slane %v1190, %v1280
        %v1283 = vunpack.c.l.s4 1983009808
        %v1284 = vunpack.c.0.s8 %v1283
        %v1285 = vlaneseq
        %v1286 = vshrl.u32 %v1285, 7
        %v1287 = vsub.s32 %v1284, %v1286
        %v1288 = vrot.slane %v1274, %v1287
        %v1289 = vcombine.low %v1266, %v1281
        %v1290 = vcombine.high %v1266, %v1281
        %v1292 = vunpack.c.l.s4 1934713408
        %v1293 = vunpack.c.0.s8 %v1292
        %v1294 = vlaneseq
        %v1295 = vshrl.u32 %v1294, 7
        %v1296 = vsub.s32 %v1293, %v1295
        %v1297 = vrot.slane %v1289, %v1296
        %v1299 = vunpack.c.l.s4 1934713408
        %v1300 = vunpack.c.0.s8 %v1299
        %v1301 = vlaneseq
        %v1302 = vshrl.u32 %v1301, 7
        %v1303 = vsub.s32 %v1300, %v1302
        %v1304 = vrot.slane %v1290, %v1303
        %v1305 = vcombine.low %v1273, %v1288
        %v1306 = vcombine.high %v1273, %v1288
        %v1308 = vunpack.c.l.s4 1934713408
        %v1309 = vunpack.c.0.s8 %v1308
        %v1310 = vlaneseq
        %v1311 = vshrl.u32 %v1310, 7
        %v1312 = vsub.s32 %v1309, %v1311
        %v1313 = vrot.slane %v1305, %v1312
        %v1315 = vunpack.c.l.s4 1934713408
        %v1316 = vunpack.c.0.s8 %v1315
        %v1317 = vlaneseq
        %v1318 = vshrl.u32 %v1317, 7
        %v1319 = vsub.s32 %v1316, %v1318
        %v1320 = vrot.slane %v1306, %v1319
        %v1321 = vcombine.high %v1297, 0.0
        %v1322 = vcombine.high %v1304, 0.0
        %v1323 = vcombine.high %v1313, 0.0
        %v1324 = vcombine.high %v1320, 0.0
        %1325 = vrot.lane.b32.xlu0 %v1163, 64
        %v1326 = vpop.permute.xlu0 %1325
        %1327 = vrot.lane.b32.xlu0 %v1167, 64
        %v1328 = vpop.permute.xlu0 %1327
        %1329 = vrot.lane.b32.xlu0 %v1188, 64
        %v1330 = vpop.permute.xlu0 %1329
        %1331 = vrot.lane.b32.xlu0 %v1190, 64
        %v1332 = vpop.permute.xlu0 %1331
        %v1337 = vcombine.high %v1326, 0.0
        %v1339 = vunpack.c.l.s4 1983009808
        %v1340 = vunpack.c.0.s8 %v1339
        %v1341 = vlaneseq
        %v1342 = vshrl.u32 %v1341, 7
        %v1343 = vsub.s32 %v1340, %v1342
        %v1344 = vrot.slane %v1326, %v1343
        %v1346 = vunpack.c.l.s4 1983009808
        %v1347 = vunpack.c.0.s8 %v1346
        %v1348 = vlaneseq
        %v1349 = vshrl.u32 %v1348, 7
        %v1350 = vsub.s32 %v1347, %v1349
        %v1351 = vrot.slane %v1337, %v1350
        %v1352 = vcombine.high %v1330, 0.0
        %v1354 = vunpack.c.l.s4 1983009808
        %v1355 = vunpack.c.0.s8 %v1354
        %v1356 = vlaneseq
        %v1357 = vshrl.u32 %v1356, 7
        %v1358 = vsub.s32 %v1355, %v1357
        %v1359 = vrot.slane %v1330, %v1358
        %v1361 = vunpack.c.l.s4 1983009808
        %v1362 = vunpack.c.0.s8 %v1361
        %v1363 = vlaneseq
        %v1364 = vshrl.u32 %v1363, 7
        %v1365 = vsub.s32 %v1362, %v1364
        %v1366 = vrot.slane %v1352, %v1365
        %v1367 = vcombine.low %v1344, %v1359
        %v1368 = vcombine.high %v1344, %v1359
        %v1370 = vunpack.c.l.s4 1934713408
        %v1371 = vunpack.c.0.s8 %v1370
        %v1372 = vlaneseq
        %v1373 = vshrl.u32 %v1372, 7
        %v1374 = vsub.s32 %v1371, %v1373
        %v1375 = vrot.slane %v1367, %v1374
        %v1377 = vunpack.c.l.s4 1934713408
        %v1378 = vunpack.c.0.s8 %v1377
        %v1379 = vlaneseq
        %v1380 = vshrl.u32 %v1379, 7
        %v1381 = vsub.s32 %v1378, %v1380
        %v1382 = vrot.slane %v1368, %v1381
        %v1383 = vcombine.low %v1351, %v1366
        %v1384 = vcombine.high %v1351, %v1366
        %v1386 = vunpack.c.l.s4 1934713408
        %v1387 = vunpack.c.0.s8 %v1386
        %v1388 = vlaneseq
        %v1389 = vshrl.u32 %v1388, 7
        %v1390 = vsub.s32 %v1387, %v1389
        %v1391 = vrot.slane %v1383, %v1390
        %v1393 = vunpack.c.l.s4 1934713408
        %v1394 = vunpack.c.0.s8 %v1393
        %v1395 = vlaneseq
        %v1396 = vshrl.u32 %v1395, 7
        %v1397 = vsub.s32 %v1394, %v1396
        %v1398 = vrot.slane %v1384, %v1397
        %v1399 = vcombine.high %v1375, 0.0
        %v1400 = vcombine.high %v1382, 0.0
        %v1401 = vcombine.high %v1391, 0.0
        %v1402 = vcombine.high %v1398, 0.0
        %v1403 = vcombine.high %v1328, 0.0
        %v1405 = vunpack.c.l.s4 1983009808
        %v1406 = vunpack.c.0.s8 %v1405
        %v1407 = vlaneseq
        %v1408 = vshrl.u32 %v1407, 7
        %v1409 = vsub.s32 %v1406, %v1408
        %v1410 = vrot.slane %v1328, %v1409
        %v1412 = vunpack.c.l.s4 1983009808
        %v1413 = vunpack.c.0.s8 %v1412
        %v1414 = vlaneseq
        %v1415 = vshrl.u32 %v1414, 7
        %v1416 = vsub.s32 %v1413, %v1415
        %v1417 = vrot.slane %v1403, %v1416
        %v1418 = vcombine.high %v1332, 0.0
        %v1420 = vunpack.c.l.s4 1983009808
        %v1421 = vunpack.c.0.s8 %v1420
        %v1422 = vlaneseq
        %v1423 = vshrl.u32 %v1422, 7
        %v1424 = vsub.s32 %v1421, %v1423
        %v1425 = vrot.slane %v1332, %v1424
        %v1427 = vunpack.c.l.s4 1983009808
        %v1428 = vunpack.c.0.s8 %v1427
        %v1429 = vlaneseq
        %v1430 = vshrl.u32 %v1429, 7
        %v1431 = vsub.s32 %v1428, %v1430
        %v1432 = vrot.slane %v1418, %v1431
        %v1433 = vcombine.low %v1410, %v1425
        %v1434 = vcombine.high %v1410, %v1425
        %v1436 = vunpack.c.l.s4 1934713408
        %v1437 = vunpack.c.0.s8 %v1436
        %v1438 = vlaneseq
        %v1439 = vshrl.u32 %v1438, 7
        %v1440 = vsub.s32 %v1437, %v1439
        %v1441 = vrot.slane %v1433, %v1440
        %v1443 = vunpack.c.l.s4 1934713408
        %v1444 = vunpack.c.0.s8 %v1443
        %v1445 = vlaneseq
        %v1446 = vshrl.u32 %v1445, 7
        %v1447 = vsub.s32 %v1444, %v1446
        %v1448 = vrot.slane %v1434, %v1447
        %v1449 = vcombine.low %v1417, %v1432
        %v1450 = vcombine.high %v1417, %v1432
        %v1452 = vunpack.c.l.s4 1934713408
        %v1453 = vunpack.c.0.s8 %v1452
        %v1454 = vlaneseq
        %v1455 = vshrl.u32 %v1454, 7
        %v1456 = vsub.s32 %v1453, %v1455
        %v1457 = vrot.slane %v1449, %v1456
        %v1459 = vunpack.c.l.s4 1934713408
        %v1460 = vunpack.c.0.s8 %v1459
        %v1461 = vlaneseq
        %v1462 = vshrl.u32 %v1461, 7
        %v1463 = vsub.s32 %v1460, %v1462
        %v1464 = vrot.slane %v1450, %v1463
        %v1465 = vcombine.high %v1441, 0.0
        %v1466 = vcombine.high %v1448, 0.0
        %v1467 = vcombine.high %v1457, 0.0
        %v1468 = vcombine.high %v1464, 0.0
        %1471 = vrot.lane.b32.xlu0 %v1165, 96
        %v1472 = vpop.permute.xlu0 %1471
        %1473 = vrot.lane.b32.xlu0 %v1169, 96
        %v1474 = vpop.permute.xlu0 %1473
        %v1477 = vcombine.high %v1165, 0.0
        %v1479 = vunpack.c.l.s4 1983009808
        %v1480 = vunpack.c.0.s8 %v1479
        %v1481 = vlaneseq
        %v1482 = vshrl.u32 %v1481, 7
        %v1483 = vsub.s32 %v1480, %v1482
        %v1484 = vrot.slane %v1165, %v1483
        %v1486 = vunpack.c.l.s4 1983009808
        %v1487 = vunpack.c.0.s8 %v1486
        %v1488 = vlaneseq
        %v1489 = vshrl.u32 %v1488, 7
        %v1490 = vsub.s32 %v1487, %v1489
        %v1491 = vrot.slane %v1477, %v1490
        %v1492 = vcombine.high %v1472, 0.0
        %v1494 = vunpack.c.l.s4 1983009808
        %v1495 = vunpack.c.0.s8 %v1494
        %v1496 = vlaneseq
        %v1497 = vshrl.u32 %v1496, 7
        %v1498 = vsub.s32 %v1495, %v1497
        %v1499 = vrot.slane %v1472, %v1498
        %v1501 = vunpack.c.l.s4 1983009808
        %v1502 = vunpack.c.0.s8 %v1501
        %v1503 = vlaneseq
        %v1504 = vshrl.u32 %v1503, 7
        %v1505 = vsub.s32 %v1502, %v1504
        %v1506 = vrot.slane %v1492, %v1505
        %v1507 = vcombine.low %v1484, %v1499
        %v1508 = vcombine.high %v1484, %v1499
        %v1510 = vunpack.c.l.s4 1934713408
        %v1511 = vunpack.c.0.s8 %v1510
        %v1512 = vlaneseq
        %v1513 = vshrl.u32 %v1512, 7
        %v1514 = vsub.s32 %v1511, %v1513
        %v1515 = vrot.slane %v1507, %v1514
        %v1517 = vunpack.c.l.s4 1934713408
        %v1518 = vunpack.c.0.s8 %v1517
        %v1519 = vlaneseq
        %v1520 = vshrl.u32 %v1519, 7
        %v1521 = vsub.s32 %v1518, %v1520
        %v1522 = vrot.slane %v1508, %v1521
        %v1523 = vcombine.low %v1491, %v1506
        %v1524 = vcombine.high %v1491, %v1506
        %v1526 = vunpack.c.l.s4 1934713408
        %v1527 = vunpack.c.0.s8 %v1526
        %v1528 = vlaneseq
        %v1529 = vshrl.u32 %v1528, 7
        %v1530 = vsub.s32 %v1527, %v1529
        %v1531 = vrot.slane %v1523, %v1530
        %v1533 = vunpack.c.l.s4 1934713408
        %v1534 = vunpack.c.0.s8 %v1533
        %v1535 = vlaneseq
        %v1536 = vshrl.u32 %v1535, 7
        %v1537 = vsub.s32 %v1534, %v1536
        %v1538 = vrot.slane %v1524, %v1537
        %v1539 = vcombine.high %v1515, 0.0
        %v1540 = vcombine.high %v1522, 0.0
        %v1541 = vcombine.high %v1531, 0.0
        %v1542 = vcombine.high %v1538, 0.0
        %v1543 = vcombine.high %v1169, 0.0
        %v1545 = vunpack.c.l.s4 1983009808
        %v1546 = vunpack.c.0.s8 %v1545
        %v1547 = vlaneseq
        %v1548 = vshrl.u32 %v1547, 7
        %v1549 = vsub.s32 %v1546, %v1548
        %v1550 = vrot.slane %v1169, %v1549
        %v1552 = vunpack.c.l.s4 1983009808
        %v1553 = vunpack.c.0.s8 %v1552
        %v1554 = vlaneseq
        %v1555 = vshrl.u32 %v1554, 7
        %v1556 = vsub.s32 %v1553, %v1555
        %v1557 = vrot.slane %v1543, %v1556
        %v1558 = vcombine.high %v1474, 0.0
        %v1560 = vunpack.c.l.s4 1983009808
        %v1561 = vunpack.c.0.s8 %v1560
        %v1562 = vlaneseq
        %v1563 = vshrl.u32 %v1562, 7
        %v1564 = vsub.s32 %v1561, %v1563
        %v1565 = vrot.slane %v1474, %v1564
        %v1567 = vunpack.c.l.s4 1983009808
        %v1568 = vunpack.c.0.s8 %v1567
        %v1569 = vlaneseq
        %v1570 = vshrl.u32 %v1569, 7
        %v1571 = vsub.s32 %v1568, %v1570
        %v1572 = vrot.slane %v1558, %v1571
        %v1573 = vcombine.low %v1550, %v1565
        %v1574 = vcombine.high %v1550, %v1565
        %v1576 = vunpack.c.l.s4 1934713408
        %v1577 = vunpack.c.0.s8 %v1576
        %v1578 = vlaneseq
        %v1579 = vshrl.u32 %v1578, 7
        %v1580 = vsub.s32 %v1577, %v1579
        %v1581 = vrot.slane %v1573, %v1580
        %v1583 = vunpack.c.l.s4 1934713408
        %v1584 = vunpack.c.0.s8 %v1583
        %v1585 = vlaneseq
        %v1586 = vshrl.u32 %v1585, 7
        %v1587 = vsub.s32 %v1584, %v1586
        %v1588 = vrot.slane %v1574, %v1587
        %v1589 = vcombine.low %v1557, %v1572
        %v1590 = vcombine.high %v1557, %v1572
        %v1592 = vunpack.c.l.s4 1934713408
        %v1593 = vunpack.c.0.s8 %v1592
        %v1594 = vlaneseq
        %v1595 = vshrl.u32 %v1594, 7
        %v1596 = vsub.s32 %v1593, %v1595
        %v1597 = vrot.slane %v1589, %v1596
        %v1599 = vunpack.c.l.s4 1934713408
        %v1600 = vunpack.c.0.s8 %v1599
        %v1601 = vlaneseq
        %v1602 = vshrl.u32 %v1601, 7
        %v1603 = vsub.s32 %v1600, %v1602
        %v1604 = vrot.slane %v1590, %v1603
        %v1605 = vcombine.high %v1581, 0.0
        %v1606 = vcombine.high %v1588, 0.0
        %v1607 = vcombine.high %v1597, 0.0
        %v1608 = vcombine.high %v1604, 0.0
        %v1609 = vld [vmem:[%s13] sm:$0x3]
        %v1610 = vld [vmem:[%s12] sm:$0x3]
        %v1611 = vlaneseq
        %v1612 = vshrl.u32 %v1611, 7
        %v1613 = vsub.s32 0, %v1612
        %v1614 = vrot.slane %v1610, %v1613
        %1616 = vbcast.lane.b32.xlu0 %v1614, 256
        %v1617 = vpop.permute.xlu0 %1616
        %s1619 = sor.u32 256, 8
        %1620 = vbcast.lane.b32.xlu0 %v1614, %s1619
        %v1621 = vpop.permute.xlu0 %1620
        %s1623 = sor.u32 256, 16
        %1624 = vbcast.lane.b32.xlu0 %v1614, %s1623
        %v1625 = vpop.permute.xlu0 %1624
        %s1627 = sor.u32 256, 24
        %1628 = vbcast.lane.b32.xlu0 %v1614, %s1627
        %v1629 = vpop.permute.xlu0 %1628
        %v1630 = vlaneseq
        %v1631 = vshrl.u32 %v1630, 7
        %v1632 = vsub.s32 1, %v1631
        %v1633 = vrot.slane %v1610, %v1632
        %1635 = vbcast.lane.b32.xlu0 %v1633, 256
        %v1636 = vpop.permute.xlu0 %1635
        %s1638 = sor.u32 256, 8
        %1639 = vbcast.lane.b32.xlu0 %v1633, %s1638
        %v1640 = vpop.permute.xlu0 %1639
        %s1642 = sor.u32 256, 16
        %1643 = vbcast.lane.b32.xlu0 %v1633, %s1642
        %v1644 = vpop.permute.xlu0 %1643
        %s1646 = sor.u32 256, 24
        %1647 = vbcast.lane.b32.xlu0 %v1633, %s1646
        %v1648 = vpop.permute.xlu0 %1647
        %v1649 = vld [vmem:[%s749] sm:$0xff]
        %v1650 = vld [vmem:[%s749 + $0x8] sm:$0xff]
        %v1651 = vld [vmem:[%s749 + $0x10] sm:$0xff]
        %v1652 = vld [vmem:[%s749 + $0x18] sm:$0xff]
        %v1653 = vld [vmem:[%s749 + $0x20] sm:$0xff]
        %v1654 = vld [vmem:[%s749 + $0x28] sm:$0xff]
        %v1655 = vld [vmem:[%s749 + $0x30] sm:$0xff]
        %v1656 = vld [vmem:[%s749 + $0x38] sm:$0xff]
        %v1657 = vld [vmem:[%s749 + $0x40] sm:$0xff]
        %v1658 = vld [vmem:[%s749 + $0x48] sm:$0xff]
        %v1659 = vld [vmem:[%s749 + $0x50] sm:$0xff]
        %v1660 = vld [vmem:[%s749 + $0x58] sm:$0xff]
        %v1661 = vld [vmem:[%s749 + $0x60] sm:$0xff]
        %v1662 = vld [vmem:[%s749 + $0x68] sm:$0xff]
        %v1663 = vld [vmem:[%s749 + $0x70] sm:$0xff]
        %v1664 = vld [vmem:[%s749 + $0x78] sm:$0xff]
        %v1665 = vmul.f32 %v1231, %v1609
        %v1666 = vmul.f32 %v1297, %v1609
        %v1667 = vmul.f32 %v1665, %v1375
        %v1668 = vmul.f32 %v1666, %v1441
        %vm1669 = vcmask 254976
        %v1670 = vsel %vm1669, %v1667, 0.0
        %1671 = vadd.xlane.f32.xlu0 %v1670
        %v1672 = vpop.xlane.xlu0 %1671
        %v1673 = vsel %vm1669, %v1668, 0.0
        %1674 = vadd.xlane.f32.xlu0 %v1673
        %v1675 = vpop.xlane.xlu0 %1674
        %v1676 = vlaneseq
        %v1677 = vshrl.u32 %v1676, 7
        %v1678 = vsub.s32 0, %v1677
        %v1679 = vrot.slane %v1231, %v1678
        %1681 = vbcast.lane.b32.xlu0 %v1679, 256
        %v1682 = vpop.permute.xlu0 %1681
        %s1684 = sor.u32 256, 8
        %1685 = vbcast.lane.b32.xlu0 %v1679, %s1684
        %v1686 = vpop.permute.xlu0 %1685
        %s1688 = sor.u32 256, 16
        %1689 = vbcast.lane.b32.xlu0 %v1679, %s1688
        %v1690 = vpop.permute.xlu0 %1689
        %s1692 = sor.u32 256, 24
        %1693 = vbcast.lane.b32.xlu0 %v1679, %s1692
        %v1694 = vpop.permute.xlu0 %1693
        %v1695 = vlaneseq
        %v1696 = vshrl.u32 %v1695, 7
        %v1697 = vsub.s32 1, %v1696
        %v1698 = vrot.slane %v1231, %v1697
        %1700 = vbcast.lane.b32.xlu0 %v1698, 256
        %v1701 = vpop.permute.xlu0 %1700
        %s1703 = sor.u32 256, 8
        %1704 = vbcast.lane.b32.xlu0 %v1698, %s1703
        %v1705 = vpop.permute.xlu0 %1704
        %s1707 = sor.u32 256, 16
        %1708 = vbcast.lane.b32.xlu0 %v1698, %s1707
        %v1709 = vpop.permute.xlu0 %1708
        %s1711 = sor.u32 256, 24
        %1712 = vbcast.lane.b32.xlu0 %v1698, %s1711
        %v1713 = vpop.permute.xlu0 %1712
        %v1714 = vlaneseq
        %v1715 = vshrl.u32 %v1714, 7
        %v1716 = vsub.s32 0, %v1715
        %v1717 = vrot.slane %v1297, %v1716
        %1719 = vbcast.lane.b32.xlu0 %v1717, 256
        %v1720 = vpop.permute.xlu0 %1719
        %s1722 = sor.u32 256, 8
        %1723 = vbcast.lane.b32.xlu0 %v1717, %s1722
        %v1724 = vpop.permute.xlu0 %1723
        %s1726 = sor.u32 256, 16
        %1727 = vbcast.lane.b32.xlu0 %v1717, %s1726
        %v1728 = vpop.permute.xlu0 %1727
        %s1730 = sor.u32 256, 24
        %1731 = vbcast.lane.b32.xlu0 %v1717, %s1730
        %v1732 = vpop.permute.xlu0 %1731
        %v1733 = vlaneseq
        %v1734 = vshrl.u32 %v1733, 7
        %v1735 = vsub.s32 1, %v1734
        %v1736 = vrot.slane %v1297, %v1735
        %1738 = vbcast.lane.b32.xlu0 %v1736, 256
        %v1739 = vpop.permute.xlu0 %1738
        %s1741 = sor.u32 256, 8
        %1742 = vbcast.lane.b32.xlu0 %v1736, %s1741
        %v1743 = vpop.permute.xlu0 %1742
        %s1745 = sor.u32 256, 16
        %1746 = vbcast.lane.b32.xlu0 %v1736, %s1745
        %v1747 = vpop.permute.xlu0 %1746
        %s1749 = sor.u32 256, 24
        %1750 = vbcast.lane.b32.xlu0 %v1736, %s1749
        %v1751 = vpop.permute.xlu0 %1750
        %v1752 = vmul.f32 %v1682, %v1649
        %v1753 = vmul.f32 %v1686, %v1650
        %v1754 = vmul.f32 %v1690, %v1651
        %v1755 = vmul.f32 %v1694, %v1652
        %v1756 = vmul.f32 %v1701, %v1653
        %v1757 = vmul.f32 %v1705, %v1654
        %v1758 = vmul.f32 %v1709, %v1655
        %v1759 = vmul.f32 %v1713, %v1656
        %v1760 = vmul.f32 %v1720, %v1657
        %v1761 = vmul.f32 %v1724, %v1658
        %v1762 = vmul.f32 %v1728, %v1659
        %v1763 = vmul.f32 %v1732, %v1660
        %v1764 = vmul.f32 %v1739, %v1661
        %v1765 = vmul.f32 %v1743, %v1662
        %v1766 = vmul.f32 %v1747, %v1663
        %v1767 = vmul.f32 %v1751, %v1664
        %vm1768 = vcmask 261120
        %v1769 = vsel %vm1768, %v1752, 0.0
        %v1770 = vsel %vm1768, %v1753, 0.0
        %v1771 = vadd.f32 %v1769, %v1770
        %v1772 = vsel %vm1768, %v1754, 0.0
        %v1773 = vadd.f32 %v1771, %v1772
        %v1774 = vsel %vm1768, %v1755, 0.0
        %v1775 = vadd.f32 %v1773, %v1774
        %v1776 = vrot.slane %v1775, 4
        %v1777 = vadd.f32 %v1775, %v1776
        %v1778 = vrot.slane %v1777, 2
        %v1779 = vadd.f32 %v1777, %v1778
        %v1780 = vrot.slane %v1779, 1
        %v1781 = vadd.f32 %v1779, %v1780
        %v1782 = vsel %vm1768, %v1756, 0.0
        %v1783 = vsel %vm1768, %v1757, 0.0
        %v1784 = vadd.f32 %v1782, %v1783
        %v1785 = vsel %vm1768, %v1758, 0.0
        %v1786 = vadd.f32 %v1784, %v1785
        %v1787 = vsel %vm1768, %v1759, 0.0
        %v1788 = vadd.f32 %v1786, %v1787
        %v1789 = vrot.slane %v1788, 4
        %v1790 = vadd.f32 %v1788, %v1789
        %v1791 = vrot.slane %v1790, 2
        %v1792 = vadd.f32 %v1790, %v1791
        %v1793 = vrot.slane %v1792, 1
        %v1794 = vadd.f32 %v1792, %v1793
        %v1795 = vsel %vm1768, %v1760, 0.0
        %v1796 = vsel %vm1768, %v1761, 0.0
        %v1797 = vadd.f32 %v1795, %v1796
        %v1798 = vsel %vm1768, %v1762, 0.0
        %v1799 = vadd.f32 %v1797, %v1798
        %v1800 = vsel %vm1768, %v1763, 0.0
        %v1801 = vadd.f32 %v1799, %v1800
        %v1802 = vrot.slane %v1801, 4
        %v1803 = vadd.f32 %v1801, %v1802
        %v1804 = vrot.slane %v1803, 2
        %v1805 = vadd.f32 %v1803, %v1804
        %v1806 = vrot.slane %v1805, 1
        %v1807 = vadd.f32 %v1805, %v1806
        %v1808 = vsel %vm1768, %v1764, 0.0
        %v1809 = vsel %vm1768, %v1765, 0.0
        %v1810 = vadd.f32 %v1808, %v1809
        %v1811 = vsel %vm1768, %v1766, 0.0
        %v1812 = vadd.f32 %v1810, %v1811
        %v1813 = vsel %vm1768, %v1767, 0.0
        %v1814 = vadd.f32 %v1812, %v1813
        %v1815 = vrot.slane %v1814, 4
        %v1816 = vadd.f32 %v1814, %v1815
        %v1817 = vrot.slane %v1816, 2
        %v1818 = vadd.f32 %v1816, %v1817
        %v1819 = vrot.slane %v1818, 1
        %v1820 = vadd.f32 %v1818, %v1819
        %v1821 = vmul.f32 %v1672, %v1515
        %v1822 = vmul.f32 %v1675, %v1581
        %vm1827 = vcmask 1041409
        %v1828 = vsel %vm1827, %v1794, %v1781
        %v1829 = vsel %vm1827, %v1820, %v1807
        %v1832 = vadd.f32 %v1821, %v1828
        %v1833 = vadd.f32 %v1822, %v1829
        %v1834 = vsel %vm1669, %v1832, 0.0
        %1835 = vadd.xlane.f32.xlu0 %v1834
        %v1836 = vpop.xlane.xlu0 %1835
        %v1837 = vsel %vm1669, %v1833, 0.0
        %1838 = vadd.xlane.f32.xlu0 %v1837
        %v1839 = vpop.xlane.xlu0 %1838
        %v1840 = vrcp.pop 32.0
        %v1841 = vmul.f32 %v1836, %v1840
        %v1842 = vmul.f32 %v1839, %v1840
        %v1843 = vsub.f32 %v1832, %v1841
        %v1844 = vsub.f32 %v1833, %v1842
        %v1845 = vmul.f32 %v1843, %v1843
        %v1846 = vmul.f32 %v1844, %v1844
        %v1847 = vsel %vm1669, %v1845, 0.0
        %1848 = vadd.xlane.f32.xlu0 %v1847
        %v1849 = vpop.xlane.xlu0 %1848
        %v1850 = vsel %vm1669, %v1846, 0.0
        %1851 = vadd.xlane.f32.xlu0 %v1850
        %v1852 = vpop.xlane.xlu0 %1851
        %v1853 = vmul.f32 %v1849, %v1840
        %v1854 = vmul.f32 %v1852, %v1840
        %v1855 = vadd.f32 %v1853, 0.00064
        %v1856 = vadd.f32 %v1854, 0.00064
        %v1857 = vrsqrt.pop %v1855
        %v1858 = vrsqrt.pop %v1856
        %v1859 = vmul.f32 %v1843, %v1857
        %v1861 = vunpack.c.l.s4 1934713408
        %v1862 = vunpack.c.0.s8 %v1861
        %v1863 = vlaneseq
        %v1864 = vshrl.u32 %v1863, 7
        %v1865 = vsub.s32 %v1862, %v1864
        %v1866 = vrot.slane %v1859, %v1865
        %v1867 = vcombine.high %v1866, 0.0
        %v1868 = vmul.f32 %v1844, %v1858
        %v1870 = vunpack.c.l.s4 1934713408
        %v1871 = vunpack.c.0.s8 %v1870
        %v1872 = vlaneseq
        %v1873 = vshrl.u32 %v1872, 7
        %v1874 = vsub.s32 %v1871, %v1873
        %v1875 = vrot.slane %v1868, %v1874
        %v1876 = vcombine.high %v1875, 0.0
        %1879 = vrot.lane.b32.xlu0 %v1867, 32
        %v1880 = vpop.permute.xlu0 %1879
        %1881 = vrot.lane.b32.xlu0 %v1876, 32
        %v1882 = vpop.permute.xlu0 %1881
        %v1885 = vsel %vm1768, %v1866, %v1880
        %v1886 = vsel %vm1768, %v1875, %v1882
        %v1887 = vmul.f32 %v1617, %v1649
        %v1888 = vmul.f32 %v1621, %v1650
        %v1889 = vmul.f32 %v1625, %v1651
        %v1890 = vmul.f32 %v1629, %v1652
        %v1891 = vmul.f32 %v1636, %v1653
        %v1892 = vmul.f32 %v1640, %v1654
        %v1893 = vmul.f32 %v1644, %v1655
        %v1894 = vmul.f32 %v1648, %v1656
        %v1895 = vmul.f32 %v1617, %v1657
        %v1896 = vmul.f32 %v1621, %v1658
        %v1897 = vmul.f32 %v1625, %v1659
        %v1898 = vmul.f32 %v1629, %v1660
        %v1899 = vmul.f32 %v1636, %v1661
        %v1900 = vmul.f32 %v1640, %v1662
        %v1901 = vmul.f32 %v1644, %v1663
        %v1902 = vmul.f32 %v1648, %v1664
        %v1903 = vlaneseq
        %v1904 = vshrl.u32 %v1903, 7
        %v1905 = vsub.s32 0, %v1904
        %v1906 = vrot.slane %v1375, %v1905
        %1908 = vbcast.lane.b32.xlu0 %v1906, 256
        %v1909 = vpop.permute.xlu0 %1908
        %s1911 = sor.u32 256, 8
        %1912 = vbcast.lane.b32.xlu0 %v1906, %s1911
        %v1913 = vpop.permute.xlu0 %1912
        %s1915 = sor.u32 256, 16
        %1916 = vbcast.lane.b32.xlu0 %v1906, %s1915
        %v1917 = vpop.permute.xlu0 %1916
        %s1919 = sor.u32 256, 24
        %1920 = vbcast.lane.b32.xlu0 %v1906, %s1919
        %v1921 = vpop.permute.xlu0 %1920
        %v1922 = vlaneseq
        %v1923 = vshrl.u32 %v1922, 7
        %v1924 = vsub.s32 1, %v1923
        %v1925 = vrot.slane %v1375, %v1924
        %1927 = vbcast.lane.b32.xlu0 %v1925, 256
        %v1928 = vpop.permute.xlu0 %1927
        %s1930 = sor.u32 256, 8
        %1931 = vbcast.lane.b32.xlu0 %v1925, %s1930
        %v1932 = vpop.permute.xlu0 %1931
        %s1934 = sor.u32 256, 16
        %1935 = vbcast.lane.b32.xlu0 %v1925, %s1934
        %v1936 = vpop.permute.xlu0 %1935
        %s1938 = sor.u32 256, 24
        %1939 = vbcast.lane.b32.xlu0 %v1925, %s1938
        %v1940 = vpop.permute.xlu0 %1939
        %v1941 = vlaneseq
        %v1942 = vshrl.u32 %v1941, 7
        %v1943 = vsub.s32 0, %v1942
        %v1944 = vrot.slane %v1441, %v1943
        %1946 = vbcast.lane.b32.xlu0 %v1944, 256
        %v1947 = vpop.permute.xlu0 %1946
        %s1949 = sor.u32 256, 8
        %1950 = vbcast.lane.b32.xlu0 %v1944, %s1949
        %v1951 = vpop.permute.xlu0 %1950
        %s1953 = sor.u32 256, 16
        %1954 = vbcast.lane.b32.xlu0 %v1944, %s1953
        %v1955 = vpop.permute.xlu0 %1954
        %s1957 = sor.u32 256, 24
        %1958 = vbcast.lane.b32.xlu0 %v1944, %s1957
        %v1959 = vpop.permute.xlu0 %1958
        %v1960 = vlaneseq
        %v1961 = vshrl.u32 %v1960, 7
        %v1962 = vsub.s32 1, %v1961
        %v1963 = vrot.slane %v1441, %v1962
        %1965 = vbcast.lane.b32.xlu0 %v1963, 256
        %v1966 = vpop.permute.xlu0 %1965
        %s1968 = sor.u32 256, 8
        %1969 = vbcast.lane.b32.xlu0 %v1963, %s1968
        %v1970 = vpop.permute.xlu0 %1969
        %s1972 = sor.u32 256, 16
        %1973 = vbcast.lane.b32.xlu0 %v1963, %s1972
        %v1974 = vpop.permute.xlu0 %1973
        %s1976 = sor.u32 256, 24
        %1977 = vbcast.lane.b32.xlu0 %v1963, %s1976
        %v1978 = vpop.permute.xlu0 %1977
        %v1982 = vunpack.c.l.s4 1966171168
        %v1983 = vunpack.c.0.s8 %v1982
        %v1984 = vlaneseq
        %v1985 = vshrl.u32 %v1984, 7
        %v1986 = vsub.s32 %v1983, %v1985
        %v1987 = vrot.slane %v1515, %v1986
        %v1988 = vcombine.high %v1987, %v1987
        %v1990 = vunpack.c.l.s4 1966171168
        %v1991 = vunpack.c.0.s8 %v1990
        %v1992 = vlaneseq
        %v1993 = vshrl.u32 %v1992, 7
        %v1994 = vsub.s32 %v1991, %v1993
        %v1995 = vrot.slane %v1987, %v1994
        %v1997 = vunpack.c.l.s4 1966171168
        %v1998 = vunpack.c.0.s8 %v1997
        %v1999 = vlaneseq
        %v2000 = vshrl.u32 %v1999, 7
        %v2001 = vsub.s32 %v1998, %v2000
        %v2002 = vrot.slane %v1988, %v2001
        %v2004 = vunpack.c.l.s4 1966171168
        %v2005 = vunpack.c.0.s8 %v2004
        %v2006 = vlaneseq
        %v2007 = vshrl.u32 %v2006, 7
        %v2008 = vsub.s32 %v2005, %v2007
        %v2009 = vrot.slane %v1581, %v2008
        %v2010 = vcombine.high %v2009, %v2009
        %v2012 = vunpack.c.l.s4 1966171168
        %v2013 = vunpack.c.0.s8 %v2012
        %v2014 = vlaneseq
        %v2015 = vshrl.u32 %v2014, 7
        %v2016 = vsub.s32 %v2013, %v2015
        %v2017 = vrot.slane %v2009, %v2016
        %v2019 = vunpack.c.l.s4 1966171168
        %v2020 = vunpack.c.0.s8 %v2019
        %v2021 = vlaneseq
        %v2022 = vshrl.u32 %v2021, 7
        %v2023 = vsub.s32 %v2020, %v2022
        %v2024 = vrot.slane %v2010, %v2023
        %v2025 = vlaneseq
        %v2026 = vshrl.u32 %v2025, 7
        %v2027 = vsub.s32 0, %v2026
        %v2028 = vrot.slane %v1995, %v2027
        %v2029 = vlaneseq
        %v2030 = vshrl.u32 %v2029, 7
        %v2031 = vsub.s32 0, %v2030
        %v2032 = vrot.slane %v2002, %v2031
        %v2033 = vlaneseq
        %v2034 = vshrl.u32 %v2033, 7
        %v2035 = vsub.s32 0, %v2034
        %v2036 = vrot.slane %v2017, %v2035
        %v2037 = vlaneseq
        %v2038 = vshrl.u32 %v2037, 7
        %v2039 = vsub.s32 0, %v2038
        %v2040 = vrot.slane %v2024, %v2039
        %v2045 = vmul.f32 %v1909, %v2028
        %v2046 = vmul.f32 %v1913, %v2028
        %v2047 = vmul.f32 %v1917, %v2028
        %v2048 = vmul.f32 %v1921, %v2028
        %v2049 = vmul.f32 %v1928, %v2032
        %v2050 = vmul.f32 %v1932, %v2032
        %v2051 = vmul.f32 %v1936, %v2032
        %v2052 = vmul.f32 %v1940, %v2032
        %v2053 = vmul.f32 %v1947, %v2036
        %v2054 = vmul.f32 %v1951, %v2036
        %v2055 = vmul.f32 %v1955, %v2036
        %v2056 = vmul.f32 %v1959, %v2036
        %v2057 = vmul.f32 %v1966, %v2040
        %v2058 = vmul.f32 %v1970, %v2040
        %v2059 = vmul.f32 %v1974, %v2040
        %v2060 = vmul.f32 %v1978, %v2040
        %v2061 = vadd.f32 %v1887, %v2045
        %v2062 = vadd.f32 %v1888, %v2046
        %v2063 = vadd.f32 %v1889, %v2047
        %v2064 = vadd.f32 %v1890, %v2048
        %v2065 = vadd.f32 %v1891, %v2049
        %v2066 = vadd.f32 %v1892, %v2050
        %v2067 = vadd.f32 %v1893, %v2051
        %v2068 = vadd.f32 %v1894, %v2052
        %v2069 = vadd.f32 %v1895, %v2053
        %v2070 = vadd.f32 %v1896, %v2054
        %v2071 = vadd.f32 %v1897, %v2055
        %v2072 = vadd.f32 %v1898, %v2056
        %v2073 = vadd.f32 %v1899, %v2057
        %v2074 = vadd.f32 %v1900, %v2058
        %v2075 = vadd.f32 %v1901, %v2059
        %v2076 = vadd.f32 %v1902, %v2060
        %v2077 = vmul.f32 %v1255, %v1609
        %v2078 = vmul.f32 %v1321, %v1609
        %v2079 = vmul.f32 %v2077, %v1399
        %v2080 = vmul.f32 %v2078, %v1465
        %v2081 = vsel %vm1669, %v2079, 0.0
        %2082 = vadd.xlane.f32.xlu0 %v2081
        %v2083 = vpop.xlane.xlu0 %2082
        %v2084 = vsel %vm1669, %v2080, 0.0
        %2085 = vadd.xlane.f32.xlu0 %v2084
        %v2086 = vpop.xlane.xlu0 %2085
        %v2087 = vlaneseq
        %v2088 = vshrl.u32 %v2087, 7
        %v2089 = vsub.s32 0, %v2088
        %v2090 = vrot.slane %v1255, %v2089
        %2092 = vbcast.lane.b32.xlu0 %v2090, 256
        %v2093 = vpop.permute.xlu0 %2092
        %s2095 = sor.u32 256, 8
        %2096 = vbcast.lane.b32.xlu0 %v2090, %s2095
        %v2097 = vpop.permute.xlu0 %2096
        %s2099 = sor.u32 256, 16
        %2100 = vbcast.lane.b32.xlu0 %v2090, %s2099
        %v2101 = vpop.permute.xlu0 %2100
        %s2103 = sor.u32 256, 24
        %2104 = vbcast.lane.b32.xlu0 %v2090, %s2103
        %v2105 = vpop.permute.xlu0 %2104
        %v2106 = vlaneseq
        %v2107 = vshrl.u32 %v2106, 7
        %v2108 = vsub.s32 1, %v2107
        %v2109 = vrot.slane %v1255, %v2108
        %2111 = vbcast.lane.b32.xlu0 %v2109, 256
        %v2112 = vpop.permute.xlu0 %2111
        %s2114 = sor.u32 256, 8
        %2115 = vbcast.lane.b32.xlu0 %v2109, %s2114
        %v2116 = vpop.permute.xlu0 %2115
        %s2118 = sor.u32 256, 16
        %2119 = vbcast.lane.b32.xlu0 %v2109, %s2118
        %v2120 = vpop.permute.xlu0 %2119
        %s2122 = sor.u32 256, 24
        %2123 = vbcast.lane.b32.xlu0 %v2109, %s2122
        %v2124 = vpop.permute.xlu0 %2123
        %v2125 = vlaneseq
        %v2126 = vshrl.u32 %v2125, 7
        %v2127 = vsub.s32 0, %v2126
        %v2128 = vrot.slane %v1321, %v2127
        %2130 = vbcast.lane.b32.xlu0 %v2128, 256
        %v2131 = vpop.permute.xlu0 %2130
        %s2133 = sor.u32 256, 8
        %2134 = vbcast.lane.b32.xlu0 %v2128, %s2133
        %v2135 = vpop.permute.xlu0 %2134
        %s2137 = sor.u32 256, 16
        %2138 = vbcast.lane.b32.xlu0 %v2128, %s2137
        %v2139 = vpop.permute.xlu0 %2138
        %s2141 = sor.u32 256, 24
        %2142 = vbcast.lane.b32.xlu0 %v2128, %s2141
        %v2143 = vpop.permute.xlu0 %2142
        %v2144 = vlaneseq
        %v2145 = vshrl.u32 %v2144, 7
        %v2146 = vsub.s32 1, %v2145
        %v2147 = vrot.slane %v1321, %v2146
        %2149 = vbcast.lane.b32.xlu0 %v2147, 256
        %v2150 = vpop.permute.xlu0 %2149
        %s2152 = sor.u32 256, 8
        %2153 = vbcast.lane.b32.xlu0 %v2147, %s2152
        %v2154 = vpop.permute.xlu0 %2153
        %s2156 = sor.u32 256, 16
        %2157 = vbcast.lane.b32.xlu0 %v2147, %s2156
        %v2158 = vpop.permute.xlu0 %2157
        %s2160 = sor.u32 256, 24
        %2161 = vbcast.lane.b32.xlu0 %v2147, %s2160
        %v2162 = vpop.permute.xlu0 %2161
        %v2163 = vmul.f32 %v2093, %v2061
        %v2164 = vmul.f32 %v2097, %v2062
        %v2165 = vmul.f32 %v2101, %v2063
        %v2166 = vmul.f32 %v2105, %v2064
        %v2167 = vmul.f32 %v2112, %v2065
        %v2168 = vmul.f32 %v2116, %v2066
        %v2169 = vmul.f32 %v2120, %v2067
        %v2170 = vmul.f32 %v2124, %v2068
        %v2171 = vmul.f32 %v2131, %v2069
        %v2172 = vmul.f32 %v2135, %v2070
        %v2173 = vmul.f32 %v2139, %v2071
        %v2174 = vmul.f32 %v2143, %v2072
        %v2175 = vmul.f32 %v2150, %v2073
        %v2176 = vmul.f32 %v2154, %v2074
        %v2177 = vmul.f32 %v2158, %v2075
        %v2178 = vmul.f32 %v2162, %v2076
        %v2179 = vsel %vm1768, %v2163, 0.0
        %v2180 = vsel %vm1768, %v2164, 0.0
        %v2181 = vadd.f32 %v2179, %v2180
        %v2182 = vsel %vm1768, %v2165, 0.0
        %v2183 = vadd.f32 %v2181, %v2182
        %v2184 = vsel %vm1768, %v2166, 0.0
        %v2185 = vadd.f32 %v2183, %v2184
        %v2186 = vrot.slane %v2185, 4
        %v2187 = vadd.f32 %v2185, %v2186
        %v2188 = vrot.slane %v2187, 2
        %v2189 = vadd.f32 %v2187, %v2188
        %v2190 = vrot.slane %v2189, 1
        %v2191 = vadd.f32 %v2189, %v2190
        %v2192 = vsel %vm1768, %v2167, 0.0
        %v2193 = vsel %vm1768, %v2168, 0.0
        %v2194 = vadd.f32 %v2192, %v2193
        %v2195 = vsel %vm1768, %v2169, 0.0
        %v2196 = vadd.f32 %v2194, %v2195
        %v2197 = vsel %vm1768, %v2170, 0.0
        %v2198 = vadd.f32 %v2196, %v2197
        %v2199 = vrot.slane %v2198, 4
        %v2200 = vadd.f32 %v2198, %v2199
        %v2201 = vrot.slane %v2200, 2
        %v2202 = vadd.f32 %v2200, %v2201
        %v2203 = vrot.slane %v2202, 1
        %v2204 = vadd.f32 %v2202, %v2203
        %v2205 = vsel %vm1768, %v2171, 0.0
        %v2206 = vsel %vm1768, %v2172, 0.0
        %v2207 = vadd.f32 %v2205, %v2206
        %v2208 = vsel %vm1768, %v2173, 0.0
        %v2209 = vadd.f32 %v2207, %v2208
        %v2210 = vsel %vm1768, %v2174, 0.0
        %v2211 = vadd.f32 %v2209, %v2210
        %v2212 = vrot.slane %v2211, 4
        %v2213 = vadd.f32 %v2211, %v2212
        %v2214 = vrot.slane %v2213, 2
        %v2215 = vadd.f32 %v2213, %v2214
        %v2216 = vrot.slane %v2215, 1
        %v2217 = vadd.f32 %v2215, %v2216
        %v2218 = vsel %vm1768, %v2175, 0.0
        %v2219 = vsel %vm1768, %v2176, 0.0
        %v2220 = vadd.f32 %v2218, %v2219
        %v2221 = vsel %vm1768, %v2177, 0.0
        %v2222 = vadd.f32 %v2220, %v2221
        %v2223 = vsel %vm1768, %v2178, 0.0
        %v2224 = vadd.f32 %v2222, %v2223
        %v2225 = vrot.slane %v2224, 4
        %v2226 = vadd.f32 %v2224, %v2225
        %v2227 = vrot.slane %v2226, 2
        %v2228 = vadd.f32 %v2226, %v2227
        %v2229 = vrot.slane %v2228, 1
        %v2230 = vadd.f32 %v2228, %v2229
        %v2231 = vmul.f32 %v2083, %v1539
        %v2232 = vmul.f32 %v2086, %v1605
        %v2237 = vsel %vm1827, %v2204, %v2191
        %v2238 = vsel %vm1827, %v2230, %v2217
        %v2241 = vadd.f32 %v2231, %v2237
        %v2242 = vadd.f32 %v2232, %v2238
        %v2243 = vsel %vm1669, %v2241, 0.0
        %2244 = vadd.xlane.f32.xlu0 %v2243
        %v2245 = vpop.xlane.xlu0 %2244
        %v2246 = vsel %vm1669, %v2242, 0.0
        %2247 = vadd.xlane.f32.xlu0 %v2246
        %v2248 = vpop.xlane.xlu0 %2247
        %v2249 = vmul.f32 %v2245, %v1840
        %v2250 = vmul.f32 %v2248, %v1840
        %v2251 = vsub.f32 %v2241, %v2249
        %v2252 = vsub.f32 %v2242, %v2250
        %v2253 = vmul.f32 %v2251, %v2251
        %v2254 = vmul.f32 %v2252, %v2252
        %v2255 = vsel %vm1669, %v2253, 0.0
        %2256 = vadd.xlane.f32.xlu0 %v2255
        %v2257 = vpop.xlane.xlu0 %2256
        %v2258 = vsel %vm1669, %v2254, 0.0
        %2259 = vadd.xlane.f32.xlu0 %v2258
        %v2260 = vpop.xlane.xlu0 %2259
        %v2261 = vmul.f32 %v2257, %v1840
        %v2262 = vmul.f32 %v2260, %v1840
        %v2263 = vadd.f32 %v2261, 0.00064
        %v2264 = vadd.f32 %v2262, 0.00064
        %v2265 = vrsqrt.pop %v2263
        %v2266 = vrsqrt.pop %v2264
        %v2267 = vmul.f32 %v2251, %v2265
        %v2269 = vunpack.c.l.s4 1934713408
        %v2270 = vunpack.c.0.s8 %v2269
        %v2271 = vlaneseq
        %v2272 = vshrl.u32 %v2271, 7
        %v2273 = vsub.s32 %v2270, %v2272
        %v2274 = vrot.slane %v2267, %v2273
        %v2275 = vcombine.high %v2274, 0.0
        %v2276 = vmul.f32 %v2252, %v2266
        %v2278 = vunpack.c.l.s4 1934713408
        %v2279 = vunpack.c.0.s8 %v2278
        %v2280 = vlaneseq
        %v2281 = vshrl.u32 %v2280, 7
        %v2282 = vsub.s32 %v2279, %v2281
        %v2283 = vrot.slane %v2276, %v2282
        %v2284 = vcombine.high %v2283, 0.0
        %2287 = vrot.lane.b32.xlu0 %v2275, 32
        %v2288 = vpop.permute.xlu0 %2287
        %2289 = vrot.lane.b32.xlu0 %v2284, 32
        %v2290 = vpop.permute.xlu0 %2289
        %v2293 = vsel %vm1768, %v2274, %v2288
        %v2294 = vsel %vm1768, %v2283, %v2290
        %v2295 = vmul.f32 %v1617, %v2061
        %v2296 = vmul.f32 %v1621, %v2062
        %v2297 = vmul.f32 %v1625, %v2063
        %v2298 = vmul.f32 %v1629, %v2064
        %v2299 = vmul.f32 %v1636, %v2065
        %v2300 = vmul.f32 %v1640, %v2066
        %v2301 = vmul.f32 %v1644, %v2067
        %v2302 = vmul.f32 %v1648, %v2068
        %v2303 = vmul.f32 %v1617, %v2069
        %v2304 = vmul.f32 %v1621, %v2070
        %v2305 = vmul.f32 %v1625, %v2071
        %v2306 = vmul.f32 %v1629, %v2072
        %v2307 = vmul.f32 %v1636, %v2073
        %v2308 = vmul.f32 %v1640, %v2074
        %v2309 = vmul.f32 %v1644, %v2075
        %v2310 = vmul.f32 %v1648, %v2076
        %v2311 = vlaneseq
        %v2312 = vshrl.u32 %v2311, 7
        %v2313 = vsub.s32 0, %v2312
        %v2314 = vrot.slane %v1399, %v2313
        %2316 = vbcast.lane.b32.xlu0 %v2314, 256
        %v2317 = vpop.permute.xlu0 %2316
        %s2319 = sor.u32 256, 8
        %2320 = vbcast.lane.b32.xlu0 %v2314, %s2319
        %v2321 = vpop.permute.xlu0 %2320
        %s2323 = sor.u32 256, 16
        %2324 = vbcast.lane.b32.xlu0 %v2314, %s2323
        %v2325 = vpop.permute.xlu0 %2324
        %s2327 = sor.u32 256, 24
        %2328 = vbcast.lane.b32.xlu0 %v2314, %s2327
        %v2329 = vpop.permute.xlu0 %2328
        %v2330 = vlaneseq
        %v2331 = vshrl.u32 %v2330, 7
        %v2332 = vsub.s32 1, %v2331
        %v2333 = vrot.slane %v1399, %v2332
        %2335 = vbcast.lane.b32.xlu0 %v2333, 256
        %v2336 = vpop.permute.xlu0 %2335
        %s2338 = sor.u32 256, 8
        %2339 = vbcast.lane.b32.xlu0 %v2333, %s2338
        %v2340 = vpop.permute.xlu0 %2339
        %s2342 = sor.u32 256, 16
        %2343 = vbcast.lane.b32.xlu0 %v2333, %s2342
        %v2344 = vpop.permute.xlu0 %2343
        %s2346 = sor.u32 256, 24
        %2347 = vbcast.lane.b32.xlu0 %v2333, %s2346
        %v2348 = vpop.permute.xlu0 %2347
        %v2349 = vlaneseq
        %v2350 = vshrl.u32 %v2349, 7
        %v2351 = vsub.s32 0, %v2350
        %v2352 = vrot.slane %v1465, %v2351
        %2354 = vbcast.lane.b32.xlu0 %v2352, 256
        %v2355 = vpop.permute.xlu0 %2354
        %s2357 = sor.u32 256, 8
        %2358 = vbcast.lane.b32.xlu0 %v2352, %s2357
        %v2359 = vpop.permute.xlu0 %2358
        %s2361 = sor.u32 256, 16
        %2362 = vbcast.lane.b32.xlu0 %v2352, %s2361
        %v2363 = vpop.permute.xlu0 %2362
        %s2365 = sor.u32 256, 24
        %2366 = vbcast.lane.b32.xlu0 %v2352, %s2365
        %v2367 = vpop.permute.xlu0 %2366
        %v2368 = vlaneseq
        %v2369 = vshrl.u32 %v2368, 7
        %v2370 = vsub.s32 1, %v2369
        %v2371 = vrot.slane %v1465, %v2370
        %2373 = vbcast.lane.b32.xlu0 %v2371, 256
        %v2374 = vpop.permute.xlu0 %2373
        %s2376 = sor.u32 256, 8
        %2377 = vbcast.lane.b32.xlu0 %v2371, %s2376
        %v2378 = vpop.permute.xlu0 %2377
        %s2380 = sor.u32 256, 16
        %2381 = vbcast.lane.b32.xlu0 %v2371, %s2380
        %v2382 = vpop.permute.xlu0 %2381
        %s2384 = sor.u32 256, 24
        %2385 = vbcast.lane.b32.xlu0 %v2371, %s2384
        %v2386 = vpop.permute.xlu0 %2385
        %v2390 = vunpack.c.l.s4 1966171168
        %v2391 = vunpack.c.0.s8 %v2390
        %v2392 = vlaneseq
        %v2393 = vshrl.u32 %v2392, 7
        %v2394 = vsub.s32 %v2391, %v2393
        %v2395 = vrot.slane %v1539, %v2394
        %v2396 = vcombine.high %v2395, %v2395
        %v2398 = vunpack.c.l.s4 1966171168
        %v2399 = vunpack.c.0.s8 %v2398
        %v2400 = vlaneseq
        %v2401 = vshrl.u32 %v2400, 7
        %v2402 = vsub.s32 %v2399, %v2401
        %v2403 = vrot.slane %v2395, %v2402
        %v2405 = vunpack.c.l.s4 1966171168
        %v2406 = vunpack.c.0.s8 %v2405
        %v2407 = vlaneseq
        %v2408 = vshrl.u32 %v2407, 7
        %v2409 = vsub.s32 %v2406, %v2408
        %v2410 = vrot.slane %v2396, %v2409
        %v2412 = vunpack.c.l.s4 1966171168
        %v2413 = vunpack.c.0.s8 %v2412
        %v2414 = vlaneseq
        %v2415 = vshrl.u32 %v2414, 7
        %v2416 = vsub.s32 %v2413, %v2415
        %v2417 = vrot.slane %v1605, %v2416
        %v2418 = vcombine.high %v2417, %v2417
        %v2420 = vunpack.c.l.s4 1966171168
        %v2421 = vunpack.c.0.s8 %v2420
        %v2422 = vlaneseq
        %v2423 = vshrl.u32 %v2422, 7
        %v2424 = vsub.s32 %v2421, %v2423
        %v2425 = vrot.slane %v2417, %v2424
        %v2427 = vunpack.c.l.s4 1966171168
        %v2428 = vunpack.c.0.s8 %v2427
        %v2429 = vlaneseq
        %v2430 = vshrl.u32 %v2429, 7
        %v2431 = vsub.s32 %v2428, %v2430
        %v2432 = vrot.slane %v2418, %v2431
        %v2433 = vlaneseq
        %v2434 = vshrl.u32 %v2433, 7
        %v2435 = vsub.s32 0, %v2434
        %v2436 = vrot.slane %v2403, %v2435
        %v2437 = vlaneseq
        %v2438 = vshrl.u32 %v2437, 7
        %v2439 = vsub.s32 0, %v2438
        %v2440 = vrot.slane %v2410, %v2439
        %v2441 = vlaneseq
        %v2442 = vshrl.u32 %v2441, 7
        %v2443 = vsub.s32 0, %v2442
        %v2444 = vrot.slane %v2425, %v2443
        %v2445 = vlaneseq
        %v2446 = vshrl.u32 %v2445, 7
        %v2447 = vsub.s32 0, %v2446
        %v2448 = vrot.slane %v2432, %v2447
        %v2453 = vmul.f32 %v2317, %v2436
        %v2454 = vmul.f32 %v2321, %v2436
        %v2455 = vmul.f32 %v2325, %v2436
        %v2456 = vmul.f32 %v2329, %v2436
        %v2457 = vmul.f32 %v2336, %v2440
        %v2458 = vmul.f32 %v2340, %v2440
        %v2459 = vmul.f32 %v2344, %v2440
        %v2460 = vmul.f32 %v2348, %v2440
        %v2461 = vmul.f32 %v2355, %v2444
        %v2462 = vmul.f32 %v2359, %v2444
        %v2463 = vmul.f32 %v2363, %v2444
        %v2464 = vmul.f32 %v2367, %v2444
        %v2465 = vmul.f32 %v2374, %v2448
        %v2466 = vmul.f32 %v2378, %v2448
        %v2467 = vmul.f32 %v2382, %v2448
        %v2468 = vmul.f32 %v2386, %v2448
        %v2469 = vadd.f32 %v2295, %v2453
        %v2470 = vadd.f32 %v2296, %v2454
        %v2471 = vadd.f32 %v2297, %v2455
        %v2472 = vadd.f32 %v2298, %v2456
        %v2473 = vadd.f32 %v2299, %v2457
        %v2474 = vadd.f32 %v2300, %v2458
        %v2475 = vadd.f32 %v2301, %v2459
        %v2476 = vadd.f32 %v2302, %v2460
        %v2477 = vadd.f32 %v2303, %v2461
        %v2478 = vadd.f32 %v2304, %v2462
        %v2479 = vadd.f32 %v2305, %v2463
        %v2480 = vadd.f32 %v2306, %v2464
        %v2481 = vadd.f32 %v2307, %v2465
        %v2482 = vadd.f32 %v2308, %v2466
        %v2483 = vadd.f32 %v2309, %v2467
        %v2484 = vadd.f32 %v2310, %v2468
        %v2485 = vmul.f32 %v1238, %v1609
        %v2486 = vmul.f32 %v1304, %v1609
        %v2487 = vmul.f32 %v2485, %v1382
        %v2488 = vmul.f32 %v2486, %v1448
        %v2489 = vsel %vm1669, %v2487, 0.0
        %2490 = vadd.xlane.f32.xlu0 %v2489
        %v2491 = vpop.xlane.xlu0 %2490
        %v2492 = vsel %vm1669, %v2488, 0.0
        %2493 = vadd.xlane.f32.xlu0 %v2492
        %v2494 = vpop.xlane.xlu0 %2493
        %v2495 = vlaneseq
        %v2496 = vshrl.u32 %v2495, 7
        %v2497 = vsub.s32 0, %v2496
        %v2498 = vrot.slane %v1238, %v2497
        %2500 = vbcast.lane.b32.xlu0 %v2498, 256
        %v2501 = vpop.permute.xlu0 %2500
        %s2503 = sor.u32 256, 8
        %2504 = vbcast.lane.b32.xlu0 %v2498, %s2503
        %v2505 = vpop.permute.xlu0 %2504
        %s2507 = sor.u32 256, 16
        %2508 = vbcast.lane.b32.xlu0 %v2498, %s2507
        %v2509 = vpop.permute.xlu0 %2508
        %s2511 = sor.u32 256, 24
        %2512 = vbcast.lane.b32.xlu0 %v2498, %s2511
        %v2513 = vpop.permute.xlu0 %2512
        %v2514 = vlaneseq
        %v2515 = vshrl.u32 %v2514, 7
        %v2516 = vsub.s32 1, %v2515
        %v2517 = vrot.slane %v1238, %v2516
        %2519 = vbcast.lane.b32.xlu0 %v2517, 256
        %v2520 = vpop.permute.xlu0 %2519
        %s2522 = sor.u32 256, 8
        %2523 = vbcast.lane.b32.xlu0 %v2517, %s2522
        %v2524 = vpop.permute.xlu0 %2523
        %s2526 = sor.u32 256, 16
        %2527 = vbcast.lane.b32.xlu0 %v2517, %s2526
        %v2528 = vpop.permute.xlu0 %2527
        %s2530 = sor.u32 256, 24
        %2531 = vbcast.lane.b32.xlu0 %v2517, %s2530
        %v2532 = vpop.permute.xlu0 %2531
        %v2533 = vlaneseq
        %v2534 = vshrl.u32 %v2533, 7
        %v2535 = vsub.s32 0, %v2534
        %v2536 = vrot.slane %v1304, %v2535
        %2538 = vbcast.lane.b32.xlu0 %v2536, 256
        %v2539 = vpop.permute.xlu0 %2538
        %s2541 = sor.u32 256, 8
        %2542 = vbcast.lane.b32.xlu0 %v2536, %s2541
        %v2543 = vpop.permute.xlu0 %2542
        %s2545 = sor.u32 256, 16
        %2546 = vbcast.lane.b32.xlu0 %v2536, %s2545
        %v2547 = vpop.permute.xlu0 %2546
        %s2549 = sor.u32 256, 24
        %2550 = vbcast.lane.b32.xlu0 %v2536, %s2549
        %v2551 = vpop.permute.xlu0 %2550
        %v2552 = vlaneseq
        %v2553 = vshrl.u32 %v2552, 7
        %v2554 = vsub.s32 1, %v2553
        %v2555 = vrot.slane %v1304, %v2554
        %2557 = vbcast.lane.b32.xlu0 %v2555, 256
        %v2558 = vpop.permute.xlu0 %2557
        %s2560 = sor.u32 256, 8
        %2561 = vbcast.lane.b32.xlu0 %v2555, %s2560
        %v2562 = vpop.permute.xlu0 %2561
        %s2564 = sor.u32 256, 16
        %2565 = vbcast.lane.b32.xlu0 %v2555, %s2564
        %v2566 = vpop.permute.xlu0 %2565
        %s2568 = sor.u32 256, 24
        %2569 = vbcast.lane.b32.xlu0 %v2555, %s2568
        %v2570 = vpop.permute.xlu0 %2569
        %v2571 = vmul.f32 %v2501, %v2469
        %v2572 = vmul.f32 %v2505, %v2470
        %v2573 = vmul.f32 %v2509, %v2471
        %v2574 = vmul.f32 %v2513, %v2472
        %v2575 = vmul.f32 %v2520, %v2473
        %v2576 = vmul.f32 %v2524, %v2474
        %v2577 = vmul.f32 %v2528, %v2475
        %v2578 = vmul.f32 %v2532, %v2476
        %v2579 = vmul.f32 %v2539, %v2477
        %v2580 = vmul.f32 %v2543, %v2478
        %v2581 = vmul.f32 %v2547, %v2479
        %v2582 = vmul.f32 %v2551, %v2480
        %v2583 = vmul.f32 %v2558, %v2481
        %v2584 = vmul.f32 %v2562, %v2482
        %v2585 = vmul.f32 %v2566, %v2483
        %v2586 = vmul.f32 %v2570, %v2484
        %v2587 = vsel %vm1768, %v2571, 0.0
        %v2588 = vsel %vm1768, %v2572, 0.0
        %v2589 = vadd.f32 %v2587, %v2588
        %v2590 = vsel %vm1768, %v2573, 0.0
        %v2591 = vadd.f32 %v2589, %v2590
        %v2592 = vsel %vm1768, %v2574, 0.0
        %v2593 = vadd.f32 %v2591, %v2592
        %v2594 = vrot.slane %v2593, 4
        %v2595 = vadd.f32 %v2593, %v2594
        %v2596 = vrot.slane %v2595, 2
        %v2597 = vadd.f32 %v2595, %v2596
        %v2598 = vrot.slane %v2597, 1
        %v2599 = vadd.f32 %v2597, %v2598
        %v2600 = vsel %vm1768, %v2575, 0.0
        %v2601 = vsel %vm1768, %v2576, 0.0
        %v2602 = vadd.f32 %v2600, %v2601
        %v2603 = vsel %vm1768, %v2577, 0.0
        %v2604 = vadd.f32 %v2602, %v2603
        %v2605 = vsel %vm1768, %v2578, 0.0
        %v2606 = vadd.f32 %v2604, %v2605
        %v2607 = vrot.slane %v2606, 4
        %v2608 = vadd.f32 %v2606, %v2607
        %v2609 = vrot.slane %v2608, 2
        %v2610 = vadd.f32 %v2608, %v2609
        %v2611 = vrot.slane %v2610, 1
        %v2612 = vadd.f32 %v2610, %v2611
        %v2613 = vsel %vm1768, %v2579, 0.0
        %v2614 = vsel %vm1768, %v2580, 0.0
        %v2615 = vadd.f32 %v2613, %v2614
        %v2616 = vsel %vm1768, %v2581, 0.0
        %v2617 = vadd.f32 %v2615, %v2616
        %v2618 = vsel %vm1768, %v2582, 0.0
        %v2619 = vadd.f32 %v2617, %v2618
        %v2620 = vrot.slane %v2619, 4
        %v2621 = vadd.f32 %v2619, %v2620
        %v2622 = vrot.slane %v2621, 2
        %v2623 = vadd.f32 %v2621, %v2622
        %v2624 = vrot.slane %v2623, 1
        %v2625 = vadd.f32 %v2623, %v2624
        %v2626 = vsel %vm1768, %v2583, 0.0
        %v2627 = vsel %vm1768, %v2584, 0.0
        %v2628 = vadd.f32 %v2626, %v2627
        %v2629 = vsel %vm1768, %v2585, 0.0
        %v2630 = vadd.f32 %v2628, %v2629
        %v2631 = vsel %vm1768, %v2586, 0.0
        %v2632 = vadd.f32 %v2630, %v2631
        %v2633 = vrot.slane %v2632, 4
        %v2634 = vadd.f32 %v2632, %v2633
        %v2635 = vrot.slane %v2634, 2
        %v2636 = vadd.f32 %v2634, %v2635
        %v2637 = vrot.slane %v2636, 1
        %v2638 = vadd.f32 %v2636, %v2637
        %v2639 = vmul.f32 %v2491, %v1522
        %v2640 = vmul.f32 %v2494, %v1588
        %v2645 = vsel %vm1827, %v2612, %v2599
        %v2646 = vsel %vm1827, %v2638, %v2625
        %v2649 = vadd.f32 %v2639, %v2645
        %v2650 = vadd.f32 %v2640, %v2646
        %v2651 = vsel %vm1669, %v2649, 0.0
        %2652 = vadd.xlane.f32.xlu0 %v2651
        %v2653 = vpop.xlane.xlu0 %2652
        %v2654 = vsel %vm1669, %v2650, 0.0
        %2655 = vadd.xlane.f32.xlu0 %v2654
        %v2656 = vpop.xlane.xlu0 %2655
        %v2657 = vmul.f32 %v2653, %v1840
        %v2658 = vmul.f32 %v2656, %v1840
        %v2659 = vsub.f32 %v2649, %v2657
        %v2660 = vsub.f32 %v2650, %v2658
        %v2661 = vmul.f32 %v2659, %v2659
        %v2662 = vmul.f32 %v2660, %v2660
        %v2663 = vsel %vm1669, %v2661, 0.0
        %2664 = vadd.xlane.f32.xlu0 %v2663
        %v2665 = vpop.xlane.xlu0 %2664
        %v2666 = vsel %vm1669, %v2662, 0.0
        %2667 = vadd.xlane.f32.xlu0 %v2666
        %v2668 = vpop.xlane.xlu0 %2667
        %v2669 = vmul.f32 %v2665, %v1840
        %v2670 = vmul.f32 %v2668, %v1840
        %v2671 = vadd.f32 %v2669, 0.00064
        %v2672 = vadd.f32 %v2670, 0.00064
        %v2673 = vrsqrt.pop %v2671
        %v2674 = vrsqrt.pop %v2672
        %v2675 = vmul.f32 %v2659, %v2673
        %v2677 = vunpack.c.l.s4 1934713408
        %v2678 = vunpack.c.0.s8 %v2677
        %v2679 = vlaneseq
        %v2680 = vshrl.u32 %v2679, 7
        %v2681 = vsub.s32 %v2678, %v2680
        %v2682 = vrot.slane %v2675, %v2681
        %v2683 = vcombine.high %v2682, 0.0
        %v2684 = vmul.f32 %v2660, %v2674
        %v2686 = vunpack.c.l.s4 1934713408
        %v2687 = vunpack.c.0.s8 %v2686
        %v2688 = vlaneseq
        %v2689 = vshrl.u32 %v2688, 7
        %v2690 = vsub.s32 %v2687, %v2689
        %v2691 = vrot.slane %v2684, %v2690
        %v2692 = vcombine.high %v2691, 0.0
        %2695 = vrot.lane.b32.xlu0 %v2683, 32
        %v2696 = vpop.permute.xlu0 %2695
        %2697 = vrot.lane.b32.xlu0 %v2692, 32
        %v2698 = vpop.permute.xlu0 %2697
        %v2701 = vsel %vm1768, %v2682, %v2696
        %v2702 = vsel %vm1768, %v2691, %v2698
        %v2703 = vmul.f32 %v1617, %v2469
        %v2704 = vmul.f32 %v1621, %v2470
        %v2705 = vmul.f32 %v1625, %v2471
        %v2706 = vmul.f32 %v1629, %v2472
        %v2707 = vmul.f32 %v1636, %v2473
        %v2708 = vmul.f32 %v1640, %v2474
        %v2709 = vmul.f32 %v1644, %v2475
        %v2710 = vmul.f32 %v1648, %v2476
        %v2711 = vmul.f32 %v1617, %v2477
        %v2712 = vmul.f32 %v1621, %v2478
        %v2713 = vmul.f32 %v1625, %v2479
        %v2714 = vmul.f32 %v1629, %v2480
        %v2715 = vmul.f32 %v1636, %v2481
        %v2716 = vmul.f32 %v1640, %v2482
        %v2717 = vmul.f32 %v1644, %v2483
        %v2718 = vmul.f32 %v1648, %v2484
        %v2719 = vlaneseq
        %v2720 = vshrl.u32 %v2719, 7
        %v2721 = vsub.s32 0, %v2720
        %v2722 = vrot.slane %v1382, %v2721
        %2724 = vbcast.lane.b32.xlu0 %v2722, 256
        %v2725 = vpop.permute.xlu0 %2724
        %s2727 = sor.u32 256, 8
        %2728 = vbcast.lane.b32.xlu0 %v2722, %s2727
        %v2729 = vpop.permute.xlu0 %2728
        %s2731 = sor.u32 256, 16
        %2732 = vbcast.lane.b32.xlu0 %v2722, %s2731
        %v2733 = vpop.permute.xlu0 %2732
        %s2735 = sor.u32 256, 24
        %2736 = vbcast.lane.b32.xlu0 %v2722, %s2735
        %v2737 = vpop.permute.xlu0 %2736
        %v2738 = vlaneseq
        %v2739 = vshrl.u32 %v2738, 7
        %v2740 = vsub.s32 1, %v2739
        %v2741 = vrot.slane %v1382, %v2740
        %2743 = vbcast.lane.b32.xlu0 %v2741, 256
        %v2744 = vpop.permute.xlu0 %2743
        %s2746 = sor.u32 256, 8
        %2747 = vbcast.lane.b32.xlu0 %v2741, %s2746
        %v2748 = vpop.permute.xlu0 %2747
        %s2750 = sor.u32 256, 16
        %2751 = vbcast.lane.b32.xlu0 %v2741, %s2750
        %v2752 = vpop.permute.xlu0 %2751
        %s2754 = sor.u32 256, 24
        %2755 = vbcast.lane.b32.xlu0 %v2741, %s2754
        %v2756 = vpop.permute.xlu0 %2755
        %v2757 = vlaneseq
        %v2758 = vshrl.u32 %v2757, 7
        %v2759 = vsub.s32 0, %v2758
        %v2760 = vrot.slane %v1448, %v2759
        %2762 = vbcast.lane.b32.xlu0 %v2760, 256
        %v2763 = vpop.permute.xlu0 %2762
        %s2765 = sor.u32 256, 8
        %2766 = vbcast.lane.b32.xlu0 %v2760, %s2765
        %v2767 = vpop.permute.xlu0 %2766
        %s2769 = sor.u32 256, 16
        %2770 = vbcast.lane.b32.xlu0 %v2760, %s2769
        %v2771 = vpop.permute.xlu0 %2770
        %s2773 = sor.u32 256, 24
        %2774 = vbcast.lane.b32.xlu0 %v2760, %s2773
        %v2775 = vpop.permute.xlu0 %2774
        %v2776 = vlaneseq
        %v2777 = vshrl.u32 %v2776, 7
        %v2778 = vsub.s32 1, %v2777
        %v2779 = vrot.slane %v1448, %v2778
        %2781 = vbcast.lane.b32.xlu0 %v2779, 256
        %v2782 = vpop.permute.xlu0 %2781
        %s2784 = sor.u32 256, 8
        %2785 = vbcast.lane.b32.xlu0 %v2779, %s2784
        %v2786 = vpop.permute.xlu0 %2785
        %s2788 = sor.u32 256, 16
        %2789 = vbcast.lane.b32.xlu0 %v2779, %s2788
        %v2790 = vpop.permute.xlu0 %2789
        %s2792 = sor.u32 256, 24
        %2793 = vbcast.lane.b32.xlu0 %v2779, %s2792
        %v2794 = vpop.permute.xlu0 %2793
        %v2798 = vunpack.c.l.s4 1966171168
        %v2799 = vunpack.c.0.s8 %v2798
        %v2800 = vlaneseq
        %v2801 = vshrl.u32 %v2800, 7
        %v2802 = vsub.s32 %v2799, %v2801
        %v2803 = vrot.slane %v1522, %v2802
        %v2804 = vcombine.high %v2803, %v2803
        %v2806 = vunpack.c.l.s4 1966171168
        %v2807 = vunpack.c.0.s8 %v2806
        %v2808 = vlaneseq
        %v2809 = vshrl.u32 %v2808, 7
        %v2810 = vsub.s32 %v2807, %v2809
        %v2811 = vrot.slane %v2803, %v2810
        %v2813 = vunpack.c.l.s4 1966171168
        %v2814 = vunpack.c.0.s8 %v2813
        %v2815 = vlaneseq
        %v2816 = vshrl.u32 %v2815, 7
        %v2817 = vsub.s32 %v2814, %v2816
        %v2818 = vrot.slane %v2804, %v2817
        %v2820 = vunpack.c.l.s4 1966171168
        %v2821 = vunpack.c.0.s8 %v2820
        %v2822 = vlaneseq
        %v2823 = vshrl.u32 %v2822, 7
        %v2824 = vsub.s32 %v2821, %v2823
        %v2825 = vrot.slane %v1588, %v2824
        %v2826 = vcombine.high %v2825, %v2825
        %v2828 = vunpack.c.l.s4 1966171168
        %v2829 = vunpack.c.0.s8 %v2828
        %v2830 = vlaneseq
        %v2831 = vshrl.u32 %v2830, 7
        %v2832 = vsub.s32 %v2829, %v2831
        %v2833 = vrot.slane %v2825, %v2832
        %v2835 = vunpack.c.l.s4 1966171168
        %v2836 = vunpack.c.0.s8 %v2835
        %v2837 = vlaneseq
        %v2838 = vshrl.u32 %v2837, 7
        %v2839 = vsub.s32 %v2836, %v2838
        %v2840 = vrot.slane %v2826, %v2839
        %v2841 = vlaneseq
        %v2842 = vshrl.u32 %v2841, 7
        %v2843 = vsub.s32 0, %v2842
        %v2844 = vrot.slane %v2811, %v2843
        %v2845 = vlaneseq
        %v2846 = vshrl.u32 %v2845, 7
        %v2847 = vsub.s32 0, %v2846
        %v2848 = vrot.slane %v2818, %v2847
        %v2849 = vlaneseq
        %v2850 = vshrl.u32 %v2849, 7
        %v2851 = vsub.s32 0, %v2850
        %v2852 = vrot.slane %v2833, %v2851
        %v2853 = vlaneseq
        %v2854 = vshrl.u32 %v2853, 7
        %v2855 = vsub.s32 0, %v2854
        %v2856 = vrot.slane %v2840, %v2855
        %v2861 = vmul.f32 %v2725, %v2844
        %v2862 = vmul.f32 %v2729, %v2844
        %v2863 = vmul.f32 %v2733, %v2844
        %v2864 = vmul.f32 %v2737, %v2844
        %v2865 = vmul.f32 %v2744, %v2848
        %v2866 = vmul.f32 %v2748, %v2848
        %v2867 = vmul.f32 %v2752, %v2848
        %v2868 = vmul.f32 %v2756, %v2848
        %v2869 = vmul.f32 %v2763, %v2852
        %v2870 = vmul.f32 %v2767, %v2852
        %v2871 = vmul.f32 %v2771, %v2852
        %v2872 = vmul.f32 %v2775, %v2852
        %v2873 = vmul.f32 %v2782, %v2856
        %v2874 = vmul.f32 %v2786, %v2856
        %v2875 = vmul.f32 %v2790, %v2856
        %v2876 = vmul.f32 %v2794, %v2856
        %v2877 = vadd.f32 %v2703, %v2861
        %v2878 = vadd.f32 %v2704, %v2862
        %v2879 = vadd.f32 %v2705, %v2863
        %v2880 = vadd.f32 %v2706, %v2864
        %v2881 = vadd.f32 %v2707, %v2865
        %v2882 = vadd.f32 %v2708, %v2866
        %v2883 = vadd.f32 %v2709, %v2867
        %v2884 = vadd.f32 %v2710, %v2868
        %v2885 = vadd.f32 %v2711, %v2869
        %v2886 = vadd.f32 %v2712, %v2870
        %v2887 = vadd.f32 %v2713, %v2871
        %v2888 = vadd.f32 %v2714, %v2872
        %v2889 = vadd.f32 %v2715, %v2873
        %v2890 = vadd.f32 %v2716, %v2874
        %v2891 = vadd.f32 %v2717, %v2875
        %v2892 = vadd.f32 %v2718, %v2876
        %v2893 = vmul.f32 %v1256, %v1609
        %v2894 = vmul.f32 %v1322, %v1609
        %v2895 = vmul.f32 %v2893, %v1400
        %v2896 = vmul.f32 %v2894, %v1466
        %v2897 = vsel %vm1669, %v2895, 0.0
        %2898 = vadd.xlane.f32.xlu0 %v2897
        %v2899 = vpop.xlane.xlu0 %2898
        %v2900 = vsel %vm1669, %v2896, 0.0
        %2901 = vadd.xlane.f32.xlu0 %v2900
        %v2902 = vpop.xlane.xlu0 %2901
        %v2903 = vlaneseq
        %v2904 = vshrl.u32 %v2903, 7
        %v2905 = vsub.s32 0, %v2904
        %v2906 = vrot.slane %v1256, %v2905
        %2908 = vbcast.lane.b32.xlu0 %v2906, 256
        %v2909 = vpop.permute.xlu0 %2908
        %s2911 = sor.u32 256, 8
        %2912 = vbcast.lane.b32.xlu0 %v2906, %s2911
        %v2913 = vpop.permute.xlu0 %2912
        %s2915 = sor.u32 256, 16
        %2916 = vbcast.lane.b32.xlu0 %v2906, %s2915
        %v2917 = vpop.permute.xlu0 %2916
        %s2919 = sor.u32 256, 24
        %2920 = vbcast.lane.b32.xlu0 %v2906, %s2919
        %v2921 = vpop.permute.xlu0 %2920
        %v2922 = vlaneseq
        %v2923 = vshrl.u32 %v2922, 7
        %v2924 = vsub.s32 1, %v2923
        %v2925 = vrot.slane %v1256, %v2924
        %2927 = vbcast.lane.b32.xlu0 %v2925, 256
        %v2928 = vpop.permute.xlu0 %2927
        %s2930 = sor.u32 256, 8
        %2931 = vbcast.lane.b32.xlu0 %v2925, %s2930
        %v2932 = vpop.permute.xlu0 %2931
        %s2934 = sor.u32 256, 16
        %2935 = vbcast.lane.b32.xlu0 %v2925, %s2934
        %v2936 = vpop.permute.xlu0 %2935
        %s2938 = sor.u32 256, 24
        %2939 = vbcast.lane.b32.xlu0 %v2925, %s2938
        %v2940 = vpop.permute.xlu0 %2939
        %v2941 = vlaneseq
        %v2942 = vshrl.u32 %v2941, 7
        %v2943 = vsub.s32 0, %v2942
        %v2944 = vrot.slane %v1322, %v2943
        %2946 = vbcast.lane.b32.xlu0 %v2944, 256
        %v2947 = vpop.permute.xlu0 %2946
        %s2949 = sor.u32 256, 8
        %2950 = vbcast.lane.b32.xlu0 %v2944, %s2949
        %v2951 = vpop.permute.xlu0 %2950
        %s2953 = sor.u32 256, 16
        %2954 = vbcast.lane.b32.xlu0 %v2944, %s2953
        %v2955 = vpop.permute.xlu0 %2954
        %s2957 = sor.u32 256, 24
        %2958 = vbcast.lane.b32.xlu0 %v2944, %s2957
        %v2959 = vpop.permute.xlu0 %2958
        %v2960 = vlaneseq
        %v2961 = vshrl.u32 %v2960, 7
        %v2962 = vsub.s32 1, %v2961
        %v2963 = vrot.slane %v1322, %v2962
        %2965 = vbcast.lane.b32.xlu0 %v2963, 256
        %v2966 = vpop.permute.xlu0 %2965
        %s2968 = sor.u32 256, 8
        %2969 = vbcast.lane.b32.xlu0 %v2963, %s2968
        %v2970 = vpop.permute.xlu0 %2969
        %s2972 = sor.u32 256, 16
        %2973 = vbcast.lane.b32.xlu0 %v2963, %s2972
        %v2974 = vpop.permute.xlu0 %2973
        %s2976 = sor.u32 256, 24
        %2977 = vbcast.lane.b32.xlu0 %v2963, %s2976
        %v2978 = vpop.permute.xlu0 %2977
        %v2979 = vmul.f32 %v2909, %v2877
        %v2980 = vmul.f32 %v2913, %v2878
        %v2981 = vmul.f32 %v2917, %v2879
        %v2982 = vmul.f32 %v2921, %v2880
        %v2983 = vmul.f32 %v2928, %v2881
        %v2984 = vmul.f32 %v2932, %v2882
        %v2985 = vmul.f32 %v2936, %v2883
        %v2986 = vmul.f32 %v2940, %v2884
        %v2987 = vmul.f32 %v2947, %v2885
        %v2988 = vmul.f32 %v2951, %v2886
        %v2989 = vmul.f32 %v2955, %v2887
        %v2990 = vmul.f32 %v2959, %v2888
        %v2991 = vmul.f32 %v2966, %v2889
        %v2992 = vmul.f32 %v2970, %v2890
        %v2993 = vmul.f32 %v2974, %v2891
        %v2994 = vmul.f32 %v2978, %v2892
        %v2995 = vsel %vm1768, %v2979, 0.0
        %v2996 = vsel %vm1768, %v2980, 0.0
        %v2997 = vadd.f32 %v2995, %v2996
        %v2998 = vsel %vm1768, %v2981, 0.0
        %v2999 = vadd.f32 %v2997, %v2998
        %v3000 = vsel %vm1768, %v2982, 0.0
        %v3001 = vadd.f32 %v2999, %v3000
        %v3002 = vrot.slane %v3001, 4
        %v3003 = vadd.f32 %v3001, %v3002
        %v3004 = vrot.slane %v3003, 2
        %v3005 = vadd.f32 %v3003, %v3004
        %v3006 = vrot.slane %v3005, 1
        %v3007 = vadd.f32 %v3005, %v3006
        %v3008 = vsel %vm1768, %v2983, 0.0
        %v3009 = vsel %vm1768, %v2984, 0.0
        %v3010 = vadd.f32 %v3008, %v3009
        %v3011 = vsel %vm1768, %v2985, 0.0
        %v3012 = vadd.f32 %v3010, %v3011
        %v3013 = vsel %vm1768, %v2986, 0.0
        %v3014 = vadd.f32 %v3012, %v3013
        %v3015 = vrot.slane %v3014, 4
        %v3016 = vadd.f32 %v3014, %v3015
        %v3017 = vrot.slane %v3016, 2
        %v3018 = vadd.f32 %v3016, %v3017
        %v3019 = vrot.slane %v3018, 1
        %v3020 = vadd.f32 %v3018, %v3019
        %v3021 = vsel %vm1768, %v2987, 0.0
        %v3022 = vsel %vm1768, %v2988, 0.0
        %v3023 = vadd.f32 %v3021, %v3022
        %v3024 = vsel %vm1768, %v2989, 0.0
        %v3025 = vadd.f32 %v3023, %v3024
        %v3026 = vsel %vm1768, %v2990, 0.0
        %v3027 = vadd.f32 %v3025, %v3026
        %v3028 = vrot.slane %v3027, 4
        %v3029 = vadd.f32 %v3027, %v3028
        %v3030 = vrot.slane %v3029, 2
        %v3031 = vadd.f32 %v3029, %v3030
        %v3032 = vrot.slane %v3031, 1
        %v3033 = vadd.f32 %v3031, %v3032
        %v3034 = vsel %vm1768, %v2991, 0.0
        %v3035 = vsel %vm1768, %v2992, 0.0
        %v3036 = vadd.f32 %v3034, %v3035
        %v3037 = vsel %vm1768, %v2993, 0.0
        %v3038 = vadd.f32 %v3036, %v3037
        %v3039 = vsel %vm1768, %v2994, 0.0
        %v3040 = vadd.f32 %v3038, %v3039
        %v3041 = vrot.slane %v3040, 4
        %v3042 = vadd.f32 %v3040, %v3041
        %v3043 = vrot.slane %v3042, 2
        %v3044 = vadd.f32 %v3042, %v3043
        %v3045 = vrot.slane %v3044, 1
        %v3046 = vadd.f32 %v3044, %v3045
        %v3047 = vmul.f32 %v2899, %v1540
        %v3048 = vmul.f32 %v2902, %v1606
        %v3053 = vsel %vm1827, %v3020, %v3007
        %v3054 = vsel %vm1827, %v3046, %v3033
        %v3057 = vadd.f32 %v3047, %v3053
        %v3058 = vadd.f32 %v3048, %v3054
        %v3059 = vsel %vm1669, %v3057, 0.0
        %3060 = vadd.xlane.f32.xlu0 %v3059
        %v3061 = vpop.xlane.xlu0 %3060
        %v3062 = vsel %vm1669, %v3058, 0.0
        %3063 = vadd.xlane.f32.xlu0 %v3062
        %v3064 = vpop.xlane.xlu0 %3063
        %v3065 = vmul.f32 %v3061, %v1840
        %v3066 = vmul.f32 %v3064, %v1840
        %v3067 = vsub.f32 %v3057, %v3065
        %v3068 = vsub.f32 %v3058, %v3066
        %v3069 = vmul.f32 %v3067, %v3067
        %v3070 = vmul.f32 %v3068, %v3068
        %v3071 = vsel %vm1669, %v3069, 0.0
        %3072 = vadd.xlane.f32.xlu0 %v3071
        %v3073 = vpop.xlane.xlu0 %3072
        %v3074 = vsel %vm1669, %v3070, 0.0
        %3075 = vadd.xlane.f32.xlu0 %v3074
        %v3076 = vpop.xlane.xlu0 %3075
        %v3077 = vmul.f32 %v3073, %v1840
        %v3078 = vmul.f32 %v3076, %v1840
        %v3079 = vadd.f32 %v3077, 0.00064
        %v3080 = vadd.f32 %v3078, 0.00064
        %v3081 = vrsqrt.pop %v3079
        %v3082 = vrsqrt.pop %v3080
        %v3083 = vmul.f32 %v3067, %v3081
        %v3085 = vunpack.c.l.s4 1934713408
        %v3086 = vunpack.c.0.s8 %v3085
        %v3087 = vlaneseq
        %v3088 = vshrl.u32 %v3087, 7
        %v3089 = vsub.s32 %v3086, %v3088
        %v3090 = vrot.slane %v3083, %v3089
        %v3091 = vcombine.high %v3090, 0.0
        %v3092 = vmul.f32 %v3068, %v3082
        %v3094 = vunpack.c.l.s4 1934713408
        %v3095 = vunpack.c.0.s8 %v3094
        %v3096 = vlaneseq
        %v3097 = vshrl.u32 %v3096, 7
        %v3098 = vsub.s32 %v3095, %v3097
        %v3099 = vrot.slane %v3092, %v3098
        %v3100 = vcombine.high %v3099, 0.0
        %3103 = vrot.lane.b32.xlu0 %v3091, 32
        %v3104 = vpop.permute.xlu0 %3103
        %3105 = vrot.lane.b32.xlu0 %v3100, 32
        %v3106 = vpop.permute.xlu0 %3105
        %v3109 = vsel %vm1768, %v3090, %v3104
        %v3110 = vsel %vm1768, %v3099, %v3106
        %v3111 = vmul.f32 %v1617, %v2877
        %v3112 = vmul.f32 %v1621, %v2878
        %v3113 = vmul.f32 %v1625, %v2879
        %v3114 = vmul.f32 %v1629, %v2880
        %v3115 = vmul.f32 %v1636, %v2881
        %v3116 = vmul.f32 %v1640, %v2882
        %v3117 = vmul.f32 %v1644, %v2883
        %v3118 = vmul.f32 %v1648, %v2884
        %v3119 = vmul.f32 %v1617, %v2885
        %v3120 = vmul.f32 %v1621, %v2886
        %v3121 = vmul.f32 %v1625, %v2887
        %v3122 = vmul.f32 %v1629, %v2888
        %v3123 = vmul.f32 %v1636, %v2889
        %v3124 = vmul.f32 %v1640, %v2890
        %v3125 = vmul.f32 %v1644, %v2891
        %v3126 = vmul.f32 %v1648, %v2892
        %v3127 = vlaneseq
        %v3128 = vshrl.u32 %v3127, 7
        %v3129 = vsub.s32 0, %v3128
        %v3130 = vrot.slane %v1400, %v3129
        %3132 = vbcast.lane.b32.xlu0 %v3130, 256
        %v3133 = vpop.permute.xlu0 %3132
        %s3135 = sor.u32 256, 8
        %3136 = vbcast.lane.b32.xlu0 %v3130, %s3135
        %v3137 = vpop.permute.xlu0 %3136
        %s3139 = sor.u32 256, 16
        %3140 = vbcast.lane.b32.xlu0 %v3130, %s3139
        %v3141 = vpop.permute.xlu0 %3140
        %s3143 = sor.u32 256, 24
        %3144 = vbcast.lane.b32.xlu0 %v3130, %s3143
        %v3145 = vpop.permute.xlu0 %3144
        %v3146 = vlaneseq
        %v3147 = vshrl.u32 %v3146, 7
        %v3148 = vsub.s32 1, %v3147
        %v3149 = vrot.slane %v1400, %v3148
        %3151 = vbcast.lane.b32.xlu0 %v3149, 256
        %v3152 = vpop.permute.xlu0 %3151
        %s3154 = sor.u32 256, 8
        %3155 = vbcast.lane.b32.xlu0 %v3149, %s3154
        %v3156 = vpop.permute.xlu0 %3155
        %s3158 = sor.u32 256, 16
        %3159 = vbcast.lane.b32.xlu0 %v3149, %s3158
        %v3160 = vpop.permute.xlu0 %3159
        %s3162 = sor.u32 256, 24
        %3163 = vbcast.lane.b32.xlu0 %v3149, %s3162
        %v3164 = vpop.permute.xlu0 %3163
        %v3165 = vlaneseq
        %v3166 = vshrl.u32 %v3165, 7
        %v3167 = vsub.s32 0, %v3166
        %v3168 = vrot.slane %v1466, %v3167
        %3170 = vbcast.lane.b32.xlu0 %v3168, 256
        %v3171 = vpop.permute.xlu0 %3170
        %s3173 = sor.u32 256, 8
        %3174 = vbcast.lane.b32.xlu0 %v3168, %s3173
        %v3175 = vpop.permute.xlu0 %3174
        %s3177 = sor.u32 256, 16
        %3178 = vbcast.lane.b32.xlu0 %v3168, %s3177
        %v3179 = vpop.permute.xlu0 %3178
        %s3181 = sor.u32 256, 24
        %3182 = vbcast.lane.b32.xlu0 %v3168, %s3181
        %v3183 = vpop.permute.xlu0 %3182
        %v3184 = vlaneseq
        %v3185 = vshrl.u32 %v3184, 7
        %v3186 = vsub.s32 1, %v3185
        %v3187 = vrot.slane %v1466, %v3186
        %3189 = vbcast.lane.b32.xlu0 %v3187, 256
        %v3190 = vpop.permute.xlu0 %3189
        %s3192 = sor.u32 256, 8
        %3193 = vbcast.lane.b32.xlu0 %v3187, %s3192
        %v3194 = vpop.permute.xlu0 %3193
        %s3196 = sor.u32 256, 16
        %3197 = vbcast.lane.b32.xlu0 %v3187, %s3196
        %v3198 = vpop.permute.xlu0 %3197
        %s3200 = sor.u32 256, 24
        %3201 = vbcast.lane.b32.xlu0 %v3187, %s3200
        %v3202 = vpop.permute.xlu0 %3201
        %v3206 = vunpack.c.l.s4 1966171168
        %v3207 = vunpack.c.0.s8 %v3206
        %v3208 = vlaneseq
        %v3209 = vshrl.u32 %v3208, 7
        %v3210 = vsub.s32 %v3207, %v3209
        %v3211 = vrot.slane %v1540, %v3210
        %v3212 = vcombine.high %v3211, %v3211
        %v3214 = vunpack.c.l.s4 1966171168
        %v3215 = vunpack.c.0.s8 %v3214
        %v3216 = vlaneseq
        %v3217 = vshrl.u32 %v3216, 7
        %v3218 = vsub.s32 %v3215, %v3217
        %v3219 = vrot.slane %v3211, %v3218
        %v3221 = vunpack.c.l.s4 1966171168
        %v3222 = vunpack.c.0.s8 %v3221
        %v3223 = vlaneseq
        %v3224 = vshrl.u32 %v3223, 7
        %v3225 = vsub.s32 %v3222, %v3224
        %v3226 = vrot.slane %v3212, %v3225
        %v3228 = vunpack.c.l.s4 1966171168
        %v3229 = vunpack.c.0.s8 %v3228
        %v3230 = vlaneseq
        %v3231 = vshrl.u32 %v3230, 7
        %v3232 = vsub.s32 %v3229, %v3231
        %v3233 = vrot.slane %v1606, %v3232
        %v3234 = vcombine.high %v3233, %v3233
        %v3236 = vunpack.c.l.s4 1966171168
        %v3237 = vunpack.c.0.s8 %v3236
        %v3238 = vlaneseq
        %v3239 = vshrl.u32 %v3238, 7
        %v3240 = vsub.s32 %v3237, %v3239
        %v3241 = vrot.slane %v3233, %v3240
        %v3243 = vunpack.c.l.s4 1966171168
        %v3244 = vunpack.c.0.s8 %v3243
        %v3245 = vlaneseq
        %v3246 = vshrl.u32 %v3245, 7
        %v3247 = vsub.s32 %v3244, %v3246
        %v3248 = vrot.slane %v3234, %v3247
        %v3249 = vlaneseq
        %v3250 = vshrl.u32 %v3249, 7
        %v3251 = vsub.s32 0, %v3250
        %v3252 = vrot.slane %v3219, %v3251
        %v3253 = vlaneseq
        %v3254 = vshrl.u32 %v3253, 7
        %v3255 = vsub.s32 0, %v3254
        %v3256 = vrot.slane %v3226, %v3255
        %v3257 = vlaneseq
        %v3258 = vshrl.u32 %v3257, 7
        %v3259 = vsub.s32 0, %v3258
        %v3260 = vrot.slane %v3241, %v3259
        %v3261 = vlaneseq
        %v3262 = vshrl.u32 %v3261, 7
        %v3263 = vsub.s32 0, %v3262
        %v3264 = vrot.slane %v3248, %v3263
        %v3269 = vmul.f32 %v3133, %v3252
        %v3270 = vmul.f32 %v3137, %v3252
        %v3271 = vmul.f32 %v3141, %v3252
        %v3272 = vmul.f32 %v3145, %v3252
        %v3273 = vmul.f32 %v3152, %v3256
        %v3274 = vmul.f32 %v3156, %v3256
        %v3275 = vmul.f32 %v3160, %v3256
        %v3276 = vmul.f32 %v3164, %v3256
        %v3277 = vmul.f32 %v3171, %v3260
        %v3278 = vmul.f32 %v3175, %v3260
        %v3279 = vmul.f32 %v3179, %v3260
        %v3280 = vmul.f32 %v3183, %v3260
        %v3281 = vmul.f32 %v3190, %v3264
        %v3282 = vmul.f32 %v3194, %v3264
        %v3283 = vmul.f32 %v3198, %v3264
        %v3284 = vmul.f32 %v3202, %v3264
        %v3285 = vadd.f32 %v3111, %v3269
        %v3286 = vadd.f32 %v3112, %v3270
        %v3287 = vadd.f32 %v3113, %v3271
        %v3288 = vadd.f32 %v3114, %v3272
        %v3289 = vadd.f32 %v3115, %v3273
        %v3290 = vadd.f32 %v3116, %v3274
        %v3291 = vadd.f32 %v3117, %v3275
        %v3292 = vadd.f32 %v3118, %v3276
        %v3293 = vadd.f32 %v3119, %v3277
        %v3294 = vadd.f32 %v3120, %v3278
        %v3295 = vadd.f32 %v3121, %v3279
        %v3296 = vadd.f32 %v3122, %v3280
        %v3297 = vadd.f32 %v3123, %v3281
        %v3298 = vadd.f32 %v3124, %v3282
        %v3299 = vadd.f32 %v3125, %v3283
        %v3300 = vadd.f32 %v3126, %v3284
        %v3301 = vmul.f32 %v1247, %v1609
        %v3302 = vmul.f32 %v1313, %v1609
        %v3303 = vmul.f32 %v3301, %v1391
        %v3304 = vmul.f32 %v3302, %v1457
        %v3305 = vsel %vm1669, %v3303, 0.0
        %3306 = vadd.xlane.f32.xlu0 %v3305
        %v3307 = vpop.xlane.xlu0 %3306
        %v3308 = vsel %vm1669, %v3304, 0.0
        %3309 = vadd.xlane.f32.xlu0 %v3308
        %v3310 = vpop.xlane.xlu0 %3309
        %v3311 = vlaneseq
        %v3312 = vshrl.u32 %v3311, 7
        %v3313 = vsub.s32 0, %v3312
        %v3314 = vrot.slane %v1247, %v3313
        %3316 = vbcast.lane.b32.xlu0 %v3314, 256
        %v3317 = vpop.permute.xlu0 %3316
        %s3319 = sor.u32 256, 8
        %3320 = vbcast.lane.b32.xlu0 %v3314, %s3319
        %v3321 = vpop.permute.xlu0 %3320
        %s3323 = sor.u32 256, 16
        %3324 = vbcast.lane.b32.xlu0 %v3314, %s3323
        %v3325 = vpop.permute.xlu0 %3324
        %s3327 = sor.u32 256, 24
        %3328 = vbcast.lane.b32.xlu0 %v3314, %s3327
        %v3329 = vpop.permute.xlu0 %3328
        %v3330 = vlaneseq
        %v3331 = vshrl.u32 %v3330, 7
        %v3332 = vsub.s32 1, %v3331
        %v3333 = vrot.slane %v1247, %v3332
        %3335 = vbcast.lane.b32.xlu0 %v3333, 256
        %v3336 = vpop.permute.xlu0 %3335
        %s3338 = sor.u32 256, 8
        %3339 = vbcast.lane.b32.xlu0 %v3333, %s3338
        %v3340 = vpop.permute.xlu0 %3339
        %s3342 = sor.u32 256, 16
        %3343 = vbcast.lane.b32.xlu0 %v3333, %s3342
        %v3344 = vpop.permute.xlu0 %3343
        %s3346 = sor.u32 256, 24
        %3347 = vbcast.lane.b32.xlu0 %v3333, %s3346
        %v3348 = vpop.permute.xlu0 %3347
        %v3349 = vlaneseq
        %v3350 = vshrl.u32 %v3349, 7
        %v3351 = vsub.s32 0, %v3350
        %v3352 = vrot.slane %v1313, %v3351
        %3354 = vbcast.lane.b32.xlu0 %v3352, 256
        %v3355 = vpop.permute.xlu0 %3354
        %s3357 = sor.u32 256, 8
        %3358 = vbcast.lane.b32.xlu0 %v3352, %s3357
        %v3359 = vpop.permute.xlu0 %3358
        %s3361 = sor.u32 256, 16
        %3362 = vbcast.lane.b32.xlu0 %v3352, %s3361
        %v3363 = vpop.permute.xlu0 %3362
        %s3365 = sor.u32 256, 24
        %3366 = vbcast.lane.b32.xlu0 %v3352, %s3365
        %v3367 = vpop.permute.xlu0 %3366
        %v3368 = vlaneseq
        %v3369 = vshrl.u32 %v3368, 7
        %v3370 = vsub.s32 1, %v3369
        %v3371 = vrot.slane %v1313, %v3370
        %3373 = vbcast.lane.b32.xlu0 %v3371, 256
        %v3374 = vpop.permute.xlu0 %3373
        %s3376 = sor.u32 256, 8
        %3377 = vbcast.lane.b32.xlu0 %v3371, %s3376
        %v3378 = vpop.permute.xlu0 %3377
        %s3380 = sor.u32 256, 16
        %3381 = vbcast.lane.b32.xlu0 %v3371, %s3380
        %v3382 = vpop.permute.xlu0 %3381
        %s3384 = sor.u32 256, 24
        %3385 = vbcast.lane.b32.xlu0 %v3371, %s3384
        %v3386 = vpop.permute.xlu0 %3385
        %v3387 = vmul.f32 %v3317, %v3285
        %v3388 = vmul.f32 %v3321, %v3286
        %v3389 = vmul.f32 %v3325, %v3287
        %v3390 = vmul.f32 %v3329, %v3288
        %v3391 = vmul.f32 %v3336, %v3289
        %v3392 = vmul.f32 %v3340, %v3290
        %v3393 = vmul.f32 %v3344, %v3291
        %v3394 = vmul.f32 %v3348, %v3292
        %v3395 = vmul.f32 %v3355, %v3293
        %v3396 = vmul.f32 %v3359, %v3294
        %v3397 = vmul.f32 %v3363, %v3295
        %v3398 = vmul.f32 %v3367, %v3296
        %v3399 = vmul.f32 %v3374, %v3297
        %v3400 = vmul.f32 %v3378, %v3298
        %v3401 = vmul.f32 %v3382, %v3299
        %v3402 = vmul.f32 %v3386, %v3300
        %v3403 = vsel %vm1768, %v3387, 0.0
        %v3404 = vsel %vm1768, %v3388, 0.0
        %v3405 = vadd.f32 %v3403, %v3404
        %v3406 = vsel %vm1768, %v3389, 0.0
        %v3407 = vadd.f32 %v3405, %v3406
        %v3408 = vsel %vm1768, %v3390, 0.0
        %v3409 = vadd.f32 %v3407, %v3408
        %v3410 = vrot.slane %v3409, 4
        %v3411 = vadd.f32 %v3409, %v3410
        %v3412 = vrot.slane %v3411, 2
        %v3413 = vadd.f32 %v3411, %v3412
        %v3414 = vrot.slane %v3413, 1
        %v3415 = vadd.f32 %v3413, %v3414
        %v3416 = vsel %vm1768, %v3391, 0.0
        %v3417 = vsel %vm1768, %v3392, 0.0
        %v3418 = vadd.f32 %v3416, %v3417
        %v3419 = vsel %vm1768, %v3393, 0.0
        %v3420 = vadd.f32 %v3418, %v3419
        %v3421 = vsel %vm1768, %v3394, 0.0
        %v3422 = vadd.f32 %v3420, %v3421
        %v3423 = vrot.slane %v3422, 4
        %v3424 = vadd.f32 %v3422, %v3423
        %v3425 = vrot.slane %v3424, 2
        %v3426 = vadd.f32 %v3424, %v3425
        %v3427 = vrot.slane %v3426, 1
        %v3428 = vadd.f32 %v3426, %v3427
        %v3429 = vsel %vm1768, %v3395, 0.0
        %v3430 = vsel %vm1768, %v3396, 0.0
        %v3431 = vadd.f32 %v3429, %v3430
        %v3432 = vsel %vm1768, %v3397, 0.0
        %v3433 = vadd.f32 %v3431, %v3432
        %v3434 = vsel %vm1768, %v3398, 0.0
        %v3435 = vadd.f32 %v3433, %v3434
        %v3436 = vrot.slane %v3435, 4
        %v3437 = vadd.f32 %v3435, %v3436
        %v3438 = vrot.slane %v3437, 2
        %v3439 = vadd.f32 %v3437, %v3438
        %v3440 = vrot.slane %v3439, 1
        %v3441 = vadd.f32 %v3439, %v3440
        %v3442 = vsel %vm1768, %v3399, 0.0
        %v3443 = vsel %vm1768, %v3400, 0.0
        %v3444 = vadd.f32 %v3442, %v3443
        %v3445 = vsel %vm1768, %v3401, 0.0
        %v3446 = vadd.f32 %v3444, %v3445
        %v3447 = vsel %vm1768, %v3402, 0.0
        %v3448 = vadd.f32 %v3446, %v3447
        %v3449 = vrot.slane %v3448, 4
        %v3450 = vadd.f32 %v3448, %v3449
        %v3451 = vrot.slane %v3450, 2
        %v3452 = vadd.f32 %v3450, %v3451
        %v3453 = vrot.slane %v3452, 1
        %v3454 = vadd.f32 %v3452, %v3453
        %v3455 = vmul.f32 %v3307, %v1531
        %v3456 = vmul.f32 %v3310, %v1597
        %v3461 = vsel %vm1827, %v3428, %v3415
        %v3462 = vsel %vm1827, %v3454, %v3441
        %v3465 = vadd.f32 %v3455, %v3461
        %v3466 = vadd.f32 %v3456, %v3462
        %v3467 = vsel %vm1669, %v3465, 0.0
        %3468 = vadd.xlane.f32.xlu0 %v3467
        %v3469 = vpop.xlane.xlu0 %3468
        %v3470 = vsel %vm1669, %v3466, 0.0
        %3471 = vadd.xlane.f32.xlu0 %v3470
        %v3472 = vpop.xlane.xlu0 %3471
        %v3473 = vmul.f32 %v3469, %v1840
        %v3474 = vmul.f32 %v3472, %v1840
        %v3475 = vsub.f32 %v3465, %v3473
        %v3476 = vsub.f32 %v3466, %v3474
        %v3477 = vmul.f32 %v3475, %v3475
        %v3478 = vmul.f32 %v3476, %v3476
        %v3479 = vsel %vm1669, %v3477, 0.0
        %3480 = vadd.xlane.f32.xlu0 %v3479
        %v3481 = vpop.xlane.xlu0 %3480
        %v3482 = vsel %vm1669, %v3478, 0.0
        %3483 = vadd.xlane.f32.xlu0 %v3482
        %v3484 = vpop.xlane.xlu0 %3483
        %v3485 = vmul.f32 %v3481, %v1840
        %v3486 = vmul.f32 %v3484, %v1840
        %v3487 = vadd.f32 %v3485, 0.00064
        %v3488 = vadd.f32 %v3486, 0.00064
        %v3489 = vrsqrt.pop %v3487
        %v3490 = vrsqrt.pop %v3488
        %v3491 = vmul.f32 %v3475, %v3489
        %v3493 = vunpack.c.l.s4 1934713408
        %v3494 = vunpack.c.0.s8 %v3493
        %v3495 = vlaneseq
        %v3496 = vshrl.u32 %v3495, 7
        %v3497 = vsub.s32 %v3494, %v3496
        %v3498 = vrot.slane %v3491, %v3497
        %v3499 = vcombine.high %v3498, 0.0
        %v3500 = vmul.f32 %v3476, %v3490
        %v3502 = vunpack.c.l.s4 1934713408
        %v3503 = vunpack.c.0.s8 %v3502
        %v3504 = vlaneseq
        %v3505 = vshrl.u32 %v3504, 7
        %v3506 = vsub.s32 %v3503, %v3505
        %v3507 = vrot.slane %v3500, %v3506
        %v3508 = vcombine.high %v3507, 0.0
        %3511 = vrot.lane.b32.xlu0 %v3499, 32
        %v3512 = vpop.permute.xlu0 %3511
        %3513 = vrot.lane.b32.xlu0 %v3508, 32
        %v3514 = vpop.permute.xlu0 %3513
        %v3517 = vsel %vm1768, %v3498, %v3512
        %v3518 = vsel %vm1768, %v3507, %v3514
        %v3519 = vmul.f32 %v1617, %v3285
        %v3520 = vmul.f32 %v1621, %v3286
        %v3521 = vmul.f32 %v1625, %v3287
        %v3522 = vmul.f32 %v1629, %v3288
        %v3523 = vmul.f32 %v1636, %v3289
        %v3524 = vmul.f32 %v1640, %v3290
        %v3525 = vmul.f32 %v1644, %v3291
        %v3526 = vmul.f32 %v1648, %v3292
        %v3527 = vmul.f32 %v1617, %v3293
        %v3528 = vmul.f32 %v1621, %v3294
        %v3529 = vmul.f32 %v1625, %v3295
        %v3530 = vmul.f32 %v1629, %v3296
        %v3531 = vmul.f32 %v1636, %v3297
        %v3532 = vmul.f32 %v1640, %v3298
        %v3533 = vmul.f32 %v1644, %v3299
        %v3534 = vmul.f32 %v1648, %v3300
        %v3535 = vlaneseq
        %v3536 = vshrl.u32 %v3535, 7
        %v3537 = vsub.s32 0, %v3536
        %v3538 = vrot.slane %v1391, %v3537
        %3540 = vbcast.lane.b32.xlu0 %v3538, 256
        %v3541 = vpop.permute.xlu0 %3540
        %s3543 = sor.u32 256, 8
        %3544 = vbcast.lane.b32.xlu0 %v3538, %s3543
        %v3545 = vpop.permute.xlu0 %3544
        %s3547 = sor.u32 256, 16
        %3548 = vbcast.lane.b32.xlu0 %v3538, %s3547
        %v3549 = vpop.permute.xlu0 %3548
        %s3551 = sor.u32 256, 24
        %3552 = vbcast.lane.b32.xlu0 %v3538, %s3551
        %v3553 = vpop.permute.xlu0 %3552
        %v3554 = vlaneseq
        %v3555 = vshrl.u32 %v3554, 7
        %v3556 = vsub.s32 1, %v3555
        %v3557 = vrot.slane %v1391, %v3556
        %3559 = vbcast.lane.b32.xlu0 %v3557, 256
        %v3560 = vpop.permute.xlu0 %3559
        %s3562 = sor.u32 256, 8
        %3563 = vbcast.lane.b32.xlu0 %v3557, %s3562
        %v3564 = vpop.permute.xlu0 %3563
        %s3566 = sor.u32 256, 16
        %3567 = vbcast.lane.b32.xlu0 %v3557, %s3566
        %v3568 = vpop.permute.xlu0 %3567
        %s3570 = sor.u32 256, 24
        %3571 = vbcast.lane.b32.xlu0 %v3557, %s3570
        %v3572 = vpop.permute.xlu0 %3571
        %v3573 = vlaneseq
        %v3574 = vshrl.u32 %v3573, 7
        %v3575 = vsub.s32 0, %v3574
        %v3576 = vrot.slane %v1457, %v3575
        %3578 = vbcast.lane.b32.xlu0 %v3576, 256
        %v3579 = vpop.permute.xlu0 %3578
        %s3581 = sor.u32 256, 8
        %3582 = vbcast.lane.b32.xlu0 %v3576, %s3581
        %v3583 = vpop.permute.xlu0 %3582
        %s3585 = sor.u32 256, 16
        %3586 = vbcast.lane.b32.xlu0 %v3576, %s3585
        %v3587 = vpop.permute.xlu0 %3586
        %s3589 = sor.u32 256, 24
        %3590 = vbcast.lane.b32.xlu0 %v3576, %s3589
        %v3591 = vpop.permute.xlu0 %3590
        %v3592 = vlaneseq
        %v3593 = vshrl.u32 %v3592, 7
        %v3594 = vsub.s32 1, %v3593
        %v3595 = vrot.slane %v1457, %v3594
        %3597 = vbcast.lane.b32.xlu0 %v3595, 256
        %v3598 = vpop.permute.xlu0 %3597
        %s3600 = sor.u32 256, 8
        %3601 = vbcast.lane.b32.xlu0 %v3595, %s3600
        %v3602 = vpop.permute.xlu0 %3601
        %s3604 = sor.u32 256, 16
        %3605 = vbcast.lane.b32.xlu0 %v3595, %s3604
        %v3606 = vpop.permute.xlu0 %3605
        %s3608 = sor.u32 256, 24
        %3609 = vbcast.lane.b32.xlu0 %v3595, %s3608
        %v3610 = vpop.permute.xlu0 %3609
        %v3614 = vunpack.c.l.s4 1966171168
        %v3615 = vunpack.c.0.s8 %v3614
        %v3616 = vlaneseq
        %v3617 = vshrl.u32 %v3616, 7
        %v3618 = vsub.s32 %v3615, %v3617
        %v3619 = vrot.slane %v1531, %v3618
        %v3620 = vcombine.high %v3619, %v3619
        %v3622 = vunpack.c.l.s4 1966171168
        %v3623 = vunpack.c.0.s8 %v3622
        %v3624 = vlaneseq
        %v3625 = vshrl.u32 %v3624, 7
        %v3626 = vsub.s32 %v3623, %v3625
        %v3627 = vrot.slane %v3619, %v3626
        %v3629 = vunpack.c.l.s4 1966171168
        %v3630 = vunpack.c.0.s8 %v3629
        %v3631 = vlaneseq
        %v3632 = vshrl.u32 %v3631, 7
        %v3633 = vsub.s32 %v3630, %v3632
        %v3634 = vrot.slane %v3620, %v3633
        %v3636 = vunpack.c.l.s4 1966171168
        %v3637 = vunpack.c.0.s8 %v3636
        %v3638 = vlaneseq
        %v3639 = vshrl.u32 %v3638, 7
        %v3640 = vsub.s32 %v3637, %v3639
        %v3641 = vrot.slane %v1597, %v3640
        %v3642 = vcombine.high %v3641, %v3641
        %v3644 = vunpack.c.l.s4 1966171168
        %v3645 = vunpack.c.0.s8 %v3644
        %v3646 = vlaneseq
        %v3647 = vshrl.u32 %v3646, 7
        %v3648 = vsub.s32 %v3645, %v3647
        %v3649 = vrot.slane %v3641, %v3648
        %v3651 = vunpack.c.l.s4 1966171168
        %v3652 = vunpack.c.0.s8 %v3651
        %v3653 = vlaneseq
        %v3654 = vshrl.u32 %v3653, 7
        %v3655 = vsub.s32 %v3652, %v3654
        %v3656 = vrot.slane %v3642, %v3655
        %v3657 = vlaneseq
        %v3658 = vshrl.u32 %v3657, 7
        %v3659 = vsub.s32 0, %v3658
        %v3660 = vrot.slane %v3627, %v3659
        %v3661 = vlaneseq
        %v3662 = vshrl.u32 %v3661, 7
        %v3663 = vsub.s32 0, %v3662
        %v3664 = vrot.slane %v3634, %v3663
        %v3665 = vlaneseq
        %v3666 = vshrl.u32 %v3665, 7
        %v3667 = vsub.s32 0, %v3666
        %v3668 = vrot.slane %v3649, %v3667
        %v3669 = vlaneseq
        %v3670 = vshrl.u32 %v3669, 7
        %v3671 = vsub.s32 0, %v3670
        %v3672 = vrot.slane %v3656, %v3671
        %v3677 = vmul.f32 %v3541, %v3660
        %v3678 = vmul.f32 %v3545, %v3660
        %v3679 = vmul.f32 %v3549, %v3660
        %v3680 = vmul.f32 %v3553, %v3660
        %v3681 = vmul.f32 %v3560, %v3664
        %v3682 = vmul.f32 %v3564, %v3664
        %v3683 = vmul.f32 %v3568, %v3664
        %v3684 = vmul.f32 %v3572, %v3664
        %v3685 = vmul.f32 %v3579, %v3668
        %v3686 = vmul.f32 %v3583, %v3668
        %v3687 = vmul.f32 %v3587, %v3668
        %v3688 = vmul.f32 %v3591, %v3668
        %v3689 = vmul.f32 %v3598, %v3672
        %v3690 = vmul.f32 %v3602, %v3672
        %v3691 = vmul.f32 %v3606, %v3672
        %v3692 = vmul.f32 %v3610, %v3672
        %v3693 = vadd.f32 %v3519, %v3677
        %v3694 = vadd.f32 %v3520, %v3678
        %v3695 = vadd.f32 %v3521, %v3679
        %v3696 = vadd.f32 %v3522, %v3680
        %v3697 = vadd.f32 %v3523, %v3681
        %v3698 = vadd.f32 %v3524, %v3682
        %v3699 = vadd.f32 %v3525, %v3683
        %v3700 = vadd.f32 %v3526, %v3684
        %v3701 = vadd.f32 %v3527, %v3685
        %v3702 = vadd.f32 %v3528, %v3686
        %v3703 = vadd.f32 %v3529, %v3687
        %v3704 = vadd.f32 %v3530, %v3688
        %v3705 = vadd.f32 %v3531, %v3689
        %v3706 = vadd.f32 %v3532, %v3690
        %v3707 = vadd.f32 %v3533, %v3691
        %v3708 = vadd.f32 %v3534, %v3692
        %v3709 = vmul.f32 %v1257, %v1609
        %v3710 = vmul.f32 %v1323, %v1609
        %v3711 = vmul.f32 %v3709, %v1401
        %v3712 = vmul.f32 %v3710, %v1467
        %v3713 = vsel %vm1669, %v3711, 0.0
        %3714 = vadd.xlane.f32.xlu0 %v3713
        %v3715 = vpop.xlane.xlu0 %3714
        %v3716 = vsel %vm1669, %v3712, 0.0
        %3717 = vadd.xlane.f32.xlu0 %v3716
        %v3718 = vpop.xlane.xlu0 %3717
        %v3719 = vlaneseq
        %v3720 = vshrl.u32 %v3719, 7
        %v3721 = vsub.s32 0, %v3720
        %v3722 = vrot.slane %v1257, %v3721
        %3724 = vbcast.lane.b32.xlu0 %v3722, 256
        %v3725 = vpop.permute.xlu0 %3724
        %s3727 = sor.u32 256, 8
        %3728 = vbcast.lane.b32.xlu0 %v3722, %s3727
        %v3729 = vpop.permute.xlu0 %3728
        %s3731 = sor.u32 256, 16
        %3732 = vbcast.lane.b32.xlu0 %v3722, %s3731
        %v3733 = vpop.permute.xlu0 %3732
        %s3735 = sor.u32 256, 24
        %3736 = vbcast.lane.b32.xlu0 %v3722, %s3735
        %v3737 = vpop.permute.xlu0 %3736
        %v3738 = vlaneseq
        %v3739 = vshrl.u32 %v3738, 7
        %v3740 = vsub.s32 1, %v3739
        %v3741 = vrot.slane %v1257, %v3740
        %3743 = vbcast.lane.b32.xlu0 %v3741, 256
        %v3744 = vpop.permute.xlu0 %3743
        %s3746 = sor.u32 256, 8
        %3747 = vbcast.lane.b32.xlu0 %v3741, %s3746
        %v3748 = vpop.permute.xlu0 %3747
        %s3750 = sor.u32 256, 16
        %3751 = vbcast.lane.b32.xlu0 %v3741, %s3750
        %v3752 = vpop.permute.xlu0 %3751
        %s3754 = sor.u32 256, 24
        %3755 = vbcast.lane.b32.xlu0 %v3741, %s3754
        %v3756 = vpop.permute.xlu0 %3755
        %v3757 = vlaneseq
        %v3758 = vshrl.u32 %v3757, 7
        %v3759 = vsub.s32 0, %v3758
        %v3760 = vrot.slane %v1323, %v3759
        %3762 = vbcast.lane.b32.xlu0 %v3760, 256
        %v3763 = vpop.permute.xlu0 %3762
        %s3765 = sor.u32 256, 8
        %3766 = vbcast.lane.b32.xlu0 %v3760, %s3765
        %v3767 = vpop.permute.xlu0 %3766
        %s3769 = sor.u32 256, 16
        %3770 = vbcast.lane.b32.xlu0 %v3760, %s3769
        %v3771 = vpop.permute.xlu0 %3770
        %s3773 = sor.u32 256, 24
        %3774 = vbcast.lane.b32.xlu0 %v3760, %s3773
        %v3775 = vpop.permute.xlu0 %3774
        %v3776 = vlaneseq
        %v3777 = vshrl.u32 %v3776, 7
        %v3778 = vsub.s32 1, %v3777
        %v3779 = vrot.slane %v1323, %v3778
        %3781 = vbcast.lane.b32.xlu0 %v3779, 256
        %v3782 = vpop.permute.xlu0 %3781
        %s3784 = sor.u32 256, 8
        %3785 = vbcast.lane.b32.xlu0 %v3779, %s3784
        %v3786 = vpop.permute.xlu0 %3785
        %s3788 = sor.u32 256, 16
        %3789 = vbcast.lane.b32.xlu0 %v3779, %s3788
        %v3790 = vpop.permute.xlu0 %3789
        %s3792 = sor.u32 256, 24
        %3793 = vbcast.lane.b32.xlu0 %v3779, %s3792
        %v3794 = vpop.permute.xlu0 %3793
        %v3795 = vmul.f32 %v3725, %v3693
        %v3796 = vmul.f32 %v3729, %v3694
        %v3797 = vmul.f32 %v3733, %v3695
        %v3798 = vmul.f32 %v3737, %v3696
        %v3799 = vmul.f32 %v3744, %v3697
        %v3800 = vmul.f32 %v3748, %v3698
        %v3801 = vmul.f32 %v3752, %v3699
        %v3802 = vmul.f32 %v3756, %v3700
        %v3803 = vmul.f32 %v3763, %v3701
        %v3804 = vmul.f32 %v3767, %v3702
        %v3805 = vmul.f32 %v3771, %v3703
        %v3806 = vmul.f32 %v3775, %v3704
        %v3807 = vmul.f32 %v3782, %v3705
        %v3808 = vmul.f32 %v3786, %v3706
        %v3809 = vmul.f32 %v3790, %v3707
        %v3810 = vmul.f32 %v3794, %v3708
        %v3811 = vsel %vm1768, %v3795, 0.0
        %v3812 = vsel %vm1768, %v3796, 0.0
        %v3813 = vadd.f32 %v3811, %v3812
        %v3814 = vsel %vm1768, %v3797, 0.0
        %v3815 = vadd.f32 %v3813, %v3814
        %v3816 = vsel %vm1768, %v3798, 0.0
        %v3817 = vadd.f32 %v3815, %v3816
        %v3818 = vrot.slane %v3817, 4
        %v3819 = vadd.f32 %v3817, %v3818
        %v3820 = vrot.slane %v3819, 2
        %v3821 = vadd.f32 %v3819, %v3820
        %v3822 = vrot.slane %v3821, 1
        %v3823 = vadd.f32 %v3821, %v3822
        %v3824 = vsel %vm1768, %v3799, 0.0
        %v3825 = vsel %vm1768, %v3800, 0.0
        %v3826 = vadd.f32 %v3824, %v3825
        %v3827 = vsel %vm1768, %v3801, 0.0
        %v3828 = vadd.f32 %v3826, %v3827
        %v3829 = vsel %vm1768, %v3802, 0.0
        %v3830 = vadd.f32 %v3828, %v3829
        %v3831 = vrot.slane %v3830, 4
        %v3832 = vadd.f32 %v3830, %v3831
        %v3833 = vrot.slane %v3832, 2
        %v3834 = vadd.f32 %v3832, %v3833
        %v3835 = vrot.slane %v3834, 1
        %v3836 = vadd.f32 %v3834, %v3835
        %v3837 = vsel %vm1768, %v3803, 0.0
        %v3838 = vsel %vm1768, %v3804, 0.0
        %v3839 = vadd.f32 %v3837, %v3838
        %v3840 = vsel %vm1768, %v3805, 0.0
        %v3841 = vadd.f32 %v3839, %v3840
        %v3842 = vsel %vm1768, %v3806, 0.0
        %v3843 = vadd.f32 %v3841, %v3842
        %v3844 = vrot.slane %v3843, 4
        %v3845 = vadd.f32 %v3843, %v3844
        %v3846 = vrot.slane %v3845, 2
        %v3847 = vadd.f32 %v3845, %v3846
        %v3848 = vrot.slane %v3847, 1
        %v3849 = vadd.f32 %v3847, %v3848
        %v3850 = vsel %vm1768, %v3807, 0.0
        %v3851 = vsel %vm1768, %v3808, 0.0
        %v3852 = vadd.f32 %v3850, %v3851
        %v3853 = vsel %vm1768, %v3809, 0.0
        %v3854 = vadd.f32 %v3852, %v3853
        %v3855 = vsel %vm1768, %v3810, 0.0
        %v3856 = vadd.f32 %v3854, %v3855
        %v3857 = vrot.slane %v3856, 4
        %v3858 = vadd.f32 %v3856, %v3857
        %v3859 = vrot.slane %v3858, 2
        %v3860 = vadd.f32 %v3858, %v3859
        %v3861 = vrot.slane %v3860, 1
        %v3862 = vadd.f32 %v3860, %v3861
        %v3863 = vmul.f32 %v3715, %v1541
        %v3864 = vmul.f32 %v3718, %v1607
        %v3869 = vsel %vm1827, %v3836, %v3823
        %v3870 = vsel %vm1827, %v3862, %v3849
        %v3873 = vadd.f32 %v3863, %v3869
        %v3874 = vadd.f32 %v3864, %v3870
        %v3875 = vsel %vm1669, %v3873, 0.0
        %3876 = vadd.xlane.f32.xlu0 %v3875
        %v3877 = vpop.xlane.xlu0 %3876
        %v3878 = vsel %vm1669, %v3874, 0.0
        %3879 = vadd.xlane.f32.xlu0 %v3878
        %v3880 = vpop.xlane.xlu0 %3879
        %v3881 = vmul.f32 %v3877, %v1840
        %v3882 = vmul.f32 %v3880, %v1840
        %v3883 = vsub.f32 %v3873, %v3881
        %v3884 = vsub.f32 %v3874, %v3882
        %v3885 = vmul.f32 %v3883, %v3883
        %v3886 = vmul.f32 %v3884, %v3884
        %v3887 = vsel %vm1669, %v3885, 0.0
        %3888 = vadd.xlane.f32.xlu0 %v3887
        %v3889 = vpop.xlane.xlu0 %3888
        %v3890 = vsel %vm1669, %v3886, 0.0
        %3891 = vadd.xlane.f32.xlu0 %v3890
        %v3892 = vpop.xlane.xlu0 %3891
        %v3893 = vmul.f32 %v3889, %v1840
        %v3894 = vmul.f32 %v3892, %v1840
        %v3895 = vadd.f32 %v3893, 0.00064
        %v3896 = vadd.f32 %v3894, 0.00064
        %v3897 = vrsqrt.pop %v3895
        %v3898 = vrsqrt.pop %v3896
        %v3899 = vmul.f32 %v3883, %v3897
        %v3901 = vunpack.c.l.s4 1934713408
        %v3902 = vunpack.c.0.s8 %v3901
        %v3903 = vlaneseq
        %v3904 = vshrl.u32 %v3903, 7
        %v3905 = vsub.s32 %v3902, %v3904
        %v3906 = vrot.slane %v3899, %v3905
        %v3907 = vcombine.high %v3906, 0.0
        %v3908 = vmul.f32 %v3884, %v3898
        %v3910 = vunpack.c.l.s4 1934713408
        %v3911 = vunpack.c.0.s8 %v3910
        %v3912 = vlaneseq
        %v3913 = vshrl.u32 %v3912, 7
        %v3914 = vsub.s32 %v3911, %v3913
        %v3915 = vrot.slane %v3908, %v3914
        %v3916 = vcombine.high %v3915, 0.0
        %3919 = vrot.lane.b32.xlu0 %v3907, 32
        %v3920 = vpop.permute.xlu0 %3919
        %3921 = vrot.lane.b32.xlu0 %v3916, 32
        %v3922 = vpop.permute.xlu0 %3921
        %v3925 = vsel %vm1768, %v3906, %v3920
        %v3926 = vsel %vm1768, %v3915, %v3922
        %v3927 = vmul.f32 %v1617, %v3693
        %v3928 = vmul.f32 %v1621, %v3694
        %v3929 = vmul.f32 %v1625, %v3695
        %v3930 = vmul.f32 %v1629, %v3696
        %v3931 = vmul.f32 %v1636, %v3697
        %v3932 = vmul.f32 %v1640, %v3698
        %v3933 = vmul.f32 %v1644, %v3699
        %v3934 = vmul.f32 %v1648, %v3700
        %v3935 = vmul.f32 %v1617, %v3701
        %v3936 = vmul.f32 %v1621, %v3702
        %v3937 = vmul.f32 %v1625, %v3703
        %v3938 = vmul.f32 %v1629, %v3704
        %v3939 = vmul.f32 %v1636, %v3705
        %v3940 = vmul.f32 %v1640, %v3706
        %v3941 = vmul.f32 %v1644, %v3707
        %v3942 = vmul.f32 %v1648, %v3708
        %v3943 = vlaneseq
        %v3944 = vshrl.u32 %v3943, 7
        %v3945 = vsub.s32 0, %v3944
        %v3946 = vrot.slane %v1401, %v3945
        %3948 = vbcast.lane.b32.xlu0 %v3946, 256
        %v3949 = vpop.permute.xlu0 %3948
        %s3951 = sor.u32 256, 8
        %3952 = vbcast.lane.b32.xlu0 %v3946, %s3951
        %v3953 = vpop.permute.xlu0 %3952
        %s3955 = sor.u32 256, 16
        %3956 = vbcast.lane.b32.xlu0 %v3946, %s3955
        %v3957 = vpop.permute.xlu0 %3956
        %s3959 = sor.u32 256, 24
        %3960 = vbcast.lane.b32.xlu0 %v3946, %s3959
        %v3961 = vpop.permute.xlu0 %3960
        %v3962 = vlaneseq
        %v3963 = vshrl.u32 %v3962, 7
        %v3964 = vsub.s32 1, %v3963
        %v3965 = vrot.slane %v1401, %v3964
        %3967 = vbcast.lane.b32.xlu0 %v3965, 256
        %v3968 = vpop.permute.xlu0 %3967
        %s3970 = sor.u32 256, 8
        %3971 = vbcast.lane.b32.xlu0 %v3965, %s3970
        %v3972 = vpop.permute.xlu0 %3971
        %s3974 = sor.u32 256, 16
        %3975 = vbcast.lane.b32.xlu0 %v3965, %s3974
        %v3976 = vpop.permute.xlu0 %3975
        %s3978 = sor.u32 256, 24
        %3979 = vbcast.lane.b32.xlu0 %v3965, %s3978
        %v3980 = vpop.permute.xlu0 %3979
        %v3981 = vlaneseq
        %v3982 = vshrl.u32 %v3981, 7
        %v3983 = vsub.s32 0, %v3982
        %v3984 = vrot.slane %v1467, %v3983
        %3986 = vbcast.lane.b32.xlu0 %v3984, 256
        %v3987 = vpop.permute.xlu0 %3986
        %s3989 = sor.u32 256, 8
        %3990 = vbcast.lane.b32.xlu0 %v3984, %s3989
        %v3991 = vpop.permute.xlu0 %3990
        %s3993 = sor.u32 256, 16
        %3994 = vbcast.lane.b32.xlu0 %v3984, %s3993
        %v3995 = vpop.permute.xlu0 %3994
        %s3997 = sor.u32 256, 24
        %3998 = vbcast.lane.b32.xlu0 %v3984, %s3997
        %v3999 = vpop.permute.xlu0 %3998
        %v4000 = vlaneseq
        %v4001 = vshrl.u32 %v4000, 7
        %v4002 = vsub.s32 1, %v4001
        %v4003 = vrot.slane %v1467, %v4002
        %4005 = vbcast.lane.b32.xlu0 %v4003, 256
        %v4006 = vpop.permute.xlu0 %4005
        %s4008 = sor.u32 256, 8
        %4009 = vbcast.lane.b32.xlu0 %v4003, %s4008
        %v4010 = vpop.permute.xlu0 %4009
        %s4012 = sor.u32 256, 16
        %4013 = vbcast.lane.b32.xlu0 %v4003, %s4012
        %v4014 = vpop.permute.xlu0 %4013
        %s4016 = sor.u32 256, 24
        %4017 = vbcast.lane.b32.xlu0 %v4003, %s4016
        %v4018 = vpop.permute.xlu0 %4017
        %v4022 = vunpack.c.l.s4 1966171168
        %v4023 = vunpack.c.0.s8 %v4022
        %v4024 = vlaneseq
        %v4025 = vshrl.u32 %v4024, 7
        %v4026 = vsub.s32 %v4023, %v4025
        %v4027 = vrot.slane %v1541, %v4026
        %v4028 = vcombine.high %v4027, %v4027
        %v4030 = vunpack.c.l.s4 1966171168
        %v4031 = vunpack.c.0.s8 %v4030
        %v4032 = vlaneseq
        %v4033 = vshrl.u32 %v4032, 7
        %v4034 = vsub.s32 %v4031, %v4033
        %v4035 = vrot.slane %v4027, %v4034
        %v4037 = vunpack.c.l.s4 1966171168
        %v4038 = vunpack.c.0.s8 %v4037
        %v4039 = vlaneseq
        %v4040 = vshrl.u32 %v4039, 7
        %v4041 = vsub.s32 %v4038, %v4040
        %v4042 = vrot.slane %v4028, %v4041
        %v4044 = vunpack.c.l.s4 1966171168
        %v4045 = vunpack.c.0.s8 %v4044
        %v4046 = vlaneseq
        %v4047 = vshrl.u32 %v4046, 7
        %v4048 = vsub.s32 %v4045, %v4047
        %v4049 = vrot.slane %v1607, %v4048
        %v4050 = vcombine.high %v4049, %v4049
        %v4052 = vunpack.c.l.s4 1966171168
        %v4053 = vunpack.c.0.s8 %v4052
        %v4054 = vlaneseq
        %v4055 = vshrl.u32 %v4054, 7
        %v4056 = vsub.s32 %v4053, %v4055
        %v4057 = vrot.slane %v4049, %v4056
        %v4059 = vunpack.c.l.s4 1966171168
        %v4060 = vunpack.c.0.s8 %v4059
        %v4061 = vlaneseq
        %v4062 = vshrl.u32 %v4061, 7
        %v4063 = vsub.s32 %v4060, %v4062
        %v4064 = vrot.slane %v4050, %v4063
        %v4065 = vlaneseq
        %v4066 = vshrl.u32 %v4065, 7
        %v4067 = vsub.s32 0, %v4066
        %v4068 = vrot.slane %v4035, %v4067
        %v4069 = vlaneseq
        %v4070 = vshrl.u32 %v4069, 7
        %v4071 = vsub.s32 0, %v4070
        %v4072 = vrot.slane %v4042, %v4071
        %v4073 = vlaneseq
        %v4074 = vshrl.u32 %v4073, 7
        %v4075 = vsub.s32 0, %v4074
        %v4076 = vrot.slane %v4057, %v4075
        %v4077 = vlaneseq
        %v4078 = vshrl.u32 %v4077, 7
        %v4079 = vsub.s32 0, %v4078
        %v4080 = vrot.slane %v4064, %v4079
        %v4085 = vmul.f32 %v3949, %v4068
        %v4086 = vmul.f32 %v3953, %v4068
        %v4087 = vmul.f32 %v3957, %v4068
        %v4088 = vmul.f32 %v3961, %v4068
        %v4089 = vmul.f32 %v3968, %v4072
        %v4090 = vmul.f32 %v3972, %v4072
        %v4091 = vmul.f32 %v3976, %v4072
        %v4092 = vmul.f32 %v3980, %v4072
        %v4093 = vmul.f32 %v3987, %v4076
        %v4094 = vmul.f32 %v3991, %v4076
        %v4095 = vmul.f32 %v3995, %v4076
        %v4096 = vmul.f32 %v3999, %v4076
        %v4097 = vmul.f32 %v4006, %v4080
        %v4098 = vmul.f32 %v4010, %v4080
        %v4099 = vmul.f32 %v4014, %v4080
        %v4100 = vmul.f32 %v4018, %v4080
        %v4101 = vadd.f32 %v3927, %v4085
        %v4102 = vadd.f32 %v3928, %v4086
        %v4103 = vadd.f32 %v3929, %v4087
        %v4104 = vadd.f32 %v3930, %v4088
        %v4105 = vadd.f32 %v3931, %v4089
        %v4106 = vadd.f32 %v3932, %v4090
        %v4107 = vadd.f32 %v3933, %v4091
        %v4108 = vadd.f32 %v3934, %v4092
        %v4109 = vadd.f32 %v3935, %v4093
        %v4110 = vadd.f32 %v3936, %v4094
        %v4111 = vadd.f32 %v3937, %v4095
        %v4112 = vadd.f32 %v3938, %v4096
        %v4113 = vadd.f32 %v3939, %v4097
        %v4114 = vadd.f32 %v3940, %v4098
        %v4115 = vadd.f32 %v3941, %v4099
        %v4116 = vadd.f32 %v3942, %v4100
        %v4117 = vmul.f32 %v1254, %v1609
        %v4118 = vmul.f32 %v1320, %v1609
        %v4119 = vmul.f32 %v4117, %v1398
        %v4120 = vmul.f32 %v4118, %v1464
        %v4121 = vsel %vm1669, %v4119, 0.0
        %4122 = vadd.xlane.f32.xlu0 %v4121
        %v4123 = vpop.xlane.xlu0 %4122
        %v4124 = vsel %vm1669, %v4120, 0.0
        %4125 = vadd.xlane.f32.xlu0 %v4124
        %v4126 = vpop.xlane.xlu0 %4125
        %v4127 = vlaneseq
        %v4128 = vshrl.u32 %v4127, 7
        %v4129 = vsub.s32 0, %v4128
        %v4130 = vrot.slane %v1254, %v4129
        %4132 = vbcast.lane.b32.xlu0 %v4130, 256
        %v4133 = vpop.permute.xlu0 %4132
        %s4135 = sor.u32 256, 8
        %4136 = vbcast.lane.b32.xlu0 %v4130, %s4135
        %v4137 = vpop.permute.xlu0 %4136
        %s4139 = sor.u32 256, 16
        %4140 = vbcast.lane.b32.xlu0 %v4130, %s4139
        %v4141 = vpop.permute.xlu0 %4140
        %s4143 = sor.u32 256, 24
        %4144 = vbcast.lane.b32.xlu0 %v4130, %s4143
        %v4145 = vpop.permute.xlu0 %4144
        %v4146 = vlaneseq
        %v4147 = vshrl.u32 %v4146, 7
        %v4148 = vsub.s32 1, %v4147
        %v4149 = vrot.slane %v1254, %v4148
        %4151 = vbcast.lane.b32.xlu0 %v4149, 256
        %v4152 = vpop.permute.xlu0 %4151
        %s4154 = sor.u32 256, 8
        %4155 = vbcast.lane.b32.xlu0 %v4149, %s4154
        %v4156 = vpop.permute.xlu0 %4155
        %s4158 = sor.u32 256, 16
        %4159 = vbcast.lane.b32.xlu0 %v4149, %s4158
        %v4160 = vpop.permute.xlu0 %4159
        %s4162 = sor.u32 256, 24
        %4163 = vbcast.lane.b32.xlu0 %v4149, %s4162
        %v4164 = vpop.permute.xlu0 %4163
        %v4165 = vlaneseq
        %v4166 = vshrl.u32 %v4165, 7
        %v4167 = vsub.s32 0, %v4166
        %v4168 = vrot.slane %v1320, %v4167
        %4170 = vbcast.lane.b32.xlu0 %v4168, 256
        %v4171 = vpop.permute.xlu0 %4170
        %s4173 = sor.u32 256, 8
        %4174 = vbcast.lane.b32.xlu0 %v4168, %s4173
        %v4175 = vpop.permute.xlu0 %4174
        %s4177 = sor.u32 256, 16
        %4178 = vbcast.lane.b32.xlu0 %v4168, %s4177
        %v4179 = vpop.permute.xlu0 %4178
        %s4181 = sor.u32 256, 24
        %4182 = vbcast.lane.b32.xlu0 %v4168, %s4181
        %v4183 = vpop.permute.xlu0 %4182
        %v4184 = vlaneseq
        %v4185 = vshrl.u32 %v4184, 7
        %v4186 = vsub.s32 1, %v4185
        %v4187 = vrot.slane %v1320, %v4186
        %4189 = vbcast.lane.b32.xlu0 %v4187, 256
        %v4190 = vpop.permute.xlu0 %4189
        %s4192 = sor.u32 256, 8
        %4193 = vbcast.lane.b32.xlu0 %v4187, %s4192
        %v4194 = vpop.permute.xlu0 %4193
        %s4196 = sor.u32 256, 16
        %4197 = vbcast.lane.b32.xlu0 %v4187, %s4196
        %v4198 = vpop.permute.xlu0 %4197
        %s4200 = sor.u32 256, 24
        %4201 = vbcast.lane.b32.xlu0 %v4187, %s4200
        %v4202 = vpop.permute.xlu0 %4201
        %v4203 = vmul.f32 %v4133, %v4101
        %v4204 = vmul.f32 %v4137, %v4102
        %v4205 = vmul.f32 %v4141, %v4103
        %v4206 = vmul.f32 %v4145, %v4104
        %v4207 = vmul.f32 %v4152, %v4105
        %v4208 = vmul.f32 %v4156, %v4106
        %v4209 = vmul.f32 %v4160, %v4107
        %v4210 = vmul.f32 %v4164, %v4108
        %v4211 = vmul.f32 %v4171, %v4109
        %v4212 = vmul.f32 %v4175, %v4110
        %v4213 = vmul.f32 %v4179, %v4111
        %v4214 = vmul.f32 %v4183, %v4112
        %v4215 = vmul.f32 %v4190, %v4113
        %v4216 = vmul.f32 %v4194, %v4114
        %v4217 = vmul.f32 %v4198, %v4115
        %v4218 = vmul.f32 %v4202, %v4116
        %v4219 = vsel %vm1768, %v4203, 0.0
        %v4220 = vsel %vm1768, %v4204, 0.0
        %v4221 = vadd.f32 %v4219, %v4220
        %v4222 = vsel %vm1768, %v4205, 0.0
        %v4223 = vadd.f32 %v4221, %v4222
        %v4224 = vsel %vm1768, %v4206, 0.0
        %v4225 = vadd.f32 %v4223, %v4224
        %v4226 = vrot.slane %v4225, 4
        %v4227 = vadd.f32 %v4225, %v4226
        %v4228 = vrot.slane %v4227, 2
        %v4229 = vadd.f32 %v4227, %v4228
        %v4230 = vrot.slane %v4229, 1
        %v4231 = vadd.f32 %v4229, %v4230
        %v4232 = vsel %vm1768, %v4207, 0.0
        %v4233 = vsel %vm1768, %v4208, 0.0
        %v4234 = vadd.f32 %v4232, %v4233
        %v4235 = vsel %vm1768, %v4209, 0.0
        %v4236 = vadd.f32 %v4234, %v4235
        %v4237 = vsel %vm1768, %v4210, 0.0
        %v4238 = vadd.f32 %v4236, %v4237
        %v4239 = vrot.slane %v4238, 4
        %v4240 = vadd.f32 %v4238, %v4239
        %v4241 = vrot.slane %v4240, 2
        %v4242 = vadd.f32 %v4240, %v4241
        %v4243 = vrot.slane %v4242, 1
        %v4244 = vadd.f32 %v4242, %v4243
        %v4245 = vsel %vm1768, %v4211, 0.0
        %v4246 = vsel %vm1768, %v4212, 0.0
        %v4247 = vadd.f32 %v4245, %v4246
        %v4248 = vsel %vm1768, %v4213, 0.0
        %v4249 = vadd.f32 %v4247, %v4248
        %v4250 = vsel %vm1768, %v4214, 0.0
        %v4251 = vadd.f32 %v4249, %v4250
        %v4252 = vrot.slane %v4251, 4
        %v4253 = vadd.f32 %v4251, %v4252
        %v4254 = vrot.slane %v4253, 2
        %v4255 = vadd.f32 %v4253, %v4254
        %v4256 = vrot.slane %v4255, 1
        %v4257 = vadd.f32 %v4255, %v4256
        %v4258 = vsel %vm1768, %v4215, 0.0
        %v4259 = vsel %vm1768, %v4216, 0.0
        %v4260 = vadd.f32 %v4258, %v4259
        %v4261 = vsel %vm1768, %v4217, 0.0
        %v4262 = vadd.f32 %v4260, %v4261
        %v4263 = vsel %vm1768, %v4218, 0.0
        %v4264 = vadd.f32 %v4262, %v4263
        %v4265 = vrot.slane %v4264, 4
        %v4266 = vadd.f32 %v4264, %v4265
        %v4267 = vrot.slane %v4266, 2
        %v4268 = vadd.f32 %v4266, %v4267
        %v4269 = vrot.slane %v4268, 1
        %v4270 = vadd.f32 %v4268, %v4269
        %v4271 = vmul.f32 %v4123, %v1538
        %v4272 = vmul.f32 %v4126, %v1604
        %v4277 = vsel %vm1827, %v4244, %v4231
        %v4278 = vsel %vm1827, %v4270, %v4257
        %v4281 = vadd.f32 %v4271, %v4277
        %v4282 = vadd.f32 %v4272, %v4278
        %v4283 = vsel %vm1669, %v4281, 0.0
        %4284 = vadd.xlane.f32.xlu0 %v4283
        %v4285 = vpop.xlane.xlu0 %4284
        %v4286 = vsel %vm1669, %v4282, 0.0
        %4287 = vadd.xlane.f32.xlu0 %v4286
        %v4288 = vpop.xlane.xlu0 %4287
        %v4289 = vmul.f32 %v4285, %v1840
        %v4290 = vmul.f32 %v4288, %v1840
        %v4291 = vsub.f32 %v4281, %v4289
        %v4292 = vsub.f32 %v4282, %v4290
        %v4293 = vmul.f32 %v4291, %v4291
        %v4294 = vmul.f32 %v4292, %v4292
        %v4295 = vsel %vm1669, %v4293, 0.0
        %4296 = vadd.xlane.f32.xlu0 %v4295
        %v4297 = vpop.xlane.xlu0 %4296
        %v4298 = vsel %vm1669, %v4294, 0.0
        %4299 = vadd.xlane.f32.xlu0 %v4298
        %v4300 = vpop.xlane.xlu0 %4299
        %v4301 = vmul.f32 %v4297, %v1840
        %v4302 = vmul.f32 %v4300, %v1840
        %v4303 = vadd.f32 %v4301, 0.00064
        %v4304 = vadd.f32 %v4302, 0.00064
        %v4305 = vrsqrt.pop %v4303
        %v4306 = vrsqrt.pop %v4304
        %v4307 = vmul.f32 %v4291, %v4305
        %v4309 = vunpack.c.l.s4 1934713408
        %v4310 = vunpack.c.0.s8 %v4309
        %v4311 = vlaneseq
        %v4312 = vshrl.u32 %v4311, 7
        %v4313 = vsub.s32 %v4310, %v4312
        %v4314 = vrot.slane %v4307, %v4313
        %v4315 = vcombine.high %v4314, 0.0
        %v4316 = vmul.f32 %v4292, %v4306
        %v4318 = vunpack.c.l.s4 1934713408
        %v4319 = vunpack.c.0.s8 %v4318
        %v4320 = vlaneseq
        %v4321 = vshrl.u32 %v4320, 7
        %v4322 = vsub.s32 %v4319, %v4321
        %v4323 = vrot.slane %v4316, %v4322
        %v4324 = vcombine.high %v4323, 0.0
        %4327 = vrot.lane.b32.xlu0 %v4315, 32
        %v4328 = vpop.permute.xlu0 %4327
        %4329 = vrot.lane.b32.xlu0 %v4324, 32
        %v4330 = vpop.permute.xlu0 %4329
        %v4333 = vsel %vm1768, %v4314, %v4328
        %v4334 = vsel %vm1768, %v4323, %v4330
        %v4335 = vmul.f32 %v1617, %v4101
        %v4336 = vmul.f32 %v1621, %v4102
        %v4337 = vmul.f32 %v1625, %v4103
        %v4338 = vmul.f32 %v1629, %v4104
        %v4339 = vmul.f32 %v1636, %v4105
        %v4340 = vmul.f32 %v1640, %v4106
        %v4341 = vmul.f32 %v1644, %v4107
        %v4342 = vmul.f32 %v1648, %v4108
        %v4343 = vmul.f32 %v1617, %v4109
        %v4344 = vmul.f32 %v1621, %v4110
        %v4345 = vmul.f32 %v1625, %v4111
        %v4346 = vmul.f32 %v1629, %v4112
        %v4347 = vmul.f32 %v1636, %v4113
        %v4348 = vmul.f32 %v1640, %v4114
        %v4349 = vmul.f32 %v1644, %v4115
        %v4350 = vmul.f32 %v1648, %v4116
        %v4351 = vlaneseq
        %v4352 = vshrl.u32 %v4351, 7
        %v4353 = vsub.s32 0, %v4352
        %v4354 = vrot.slane %v1398, %v4353
        %4356 = vbcast.lane.b32.xlu0 %v4354, 256
        %v4357 = vpop.permute.xlu0 %4356
        %s4359 = sor.u32 256, 8
        %4360 = vbcast.lane.b32.xlu0 %v4354, %s4359
        %v4361 = vpop.permute.xlu0 %4360
        %s4363 = sor.u32 256, 16
        %4364 = vbcast.lane.b32.xlu0 %v4354, %s4363
        %v4365 = vpop.permute.xlu0 %4364
        %s4367 = sor.u32 256, 24
        %4368 = vbcast.lane.b32.xlu0 %v4354, %s4367
        %v4369 = vpop.permute.xlu0 %4368
        %v4370 = vlaneseq
        %v4371 = vshrl.u32 %v4370, 7
        %v4372 = vsub.s32 1, %v4371
        %v4373 = vrot.slane %v1398, %v4372
        %4375 = vbcast.lane.b32.xlu0 %v4373, 256
        %v4376 = vpop.permute.xlu0 %4375
        %s4378 = sor.u32 256, 8
        %4379 = vbcast.lane.b32.xlu0 %v4373, %s4378
        %v4380 = vpop.permute.xlu0 %4379
        %s4382 = sor.u32 256, 16
        %4383 = vbcast.lane.b32.xlu0 %v4373, %s4382
        %v4384 = vpop.permute.xlu0 %4383
        %s4386 = sor.u32 256, 24
        %4387 = vbcast.lane.b32.xlu0 %v4373, %s4386
        %v4388 = vpop.permute.xlu0 %4387
        %v4389 = vlaneseq
        %v4390 = vshrl.u32 %v4389, 7
        %v4391 = vsub.s32 0, %v4390
        %v4392 = vrot.slane %v1464, %v4391
        %4394 = vbcast.lane.b32.xlu0 %v4392, 256
        %v4395 = vpop.permute.xlu0 %4394
        %s4397 = sor.u32 256, 8
        %4398 = vbcast.lane.b32.xlu0 %v4392, %s4397
        %v4399 = vpop.permute.xlu0 %4398
        %s4401 = sor.u32 256, 16
        %4402 = vbcast.lane.b32.xlu0 %v4392, %s4401
        %v4403 = vpop.permute.xlu0 %4402
        %s4405 = sor.u32 256, 24
        %4406 = vbcast.lane.b32.xlu0 %v4392, %s4405
        %v4407 = vpop.permute.xlu0 %4406
        %v4408 = vlaneseq
        %v4409 = vshrl.u32 %v4408, 7
        %v4410 = vsub.s32 1, %v4409
        %v4411 = vrot.slane %v1464, %v4410
        %4413 = vbcast.lane.b32.xlu0 %v4411, 256
        %v4414 = vpop.permute.xlu0 %4413
        %s4416 = sor.u32 256, 8
        %4417 = vbcast.lane.b32.xlu0 %v4411, %s4416
        %v4418 = vpop.permute.xlu0 %4417
        %s4420 = sor.u32 256, 16
        %4421 = vbcast.lane.b32.xlu0 %v4411, %s4420
        %v4422 = vpop.permute.xlu0 %4421
        %s4424 = sor.u32 256, 24
        %4425 = vbcast.lane.b32.xlu0 %v4411, %s4424
        %v4426 = vpop.permute.xlu0 %4425
        %v4430 = vunpack.c.l.s4 1966171168
        %v4431 = vunpack.c.0.s8 %v4430
        %v4432 = vlaneseq
        %v4433 = vshrl.u32 %v4432, 7
        %v4434 = vsub.s32 %v4431, %v4433
        %v4435 = vrot.slane %v1538, %v4434
        %v4436 = vcombine.high %v4435, %v4435
        %v4438 = vunpack.c.l.s4 1966171168
        %v4439 = vunpack.c.0.s8 %v4438
        %v4440 = vlaneseq
        %v4441 = vshrl.u32 %v4440, 7
        %v4442 = vsub.s32 %v4439, %v4441
        %v4443 = vrot.slane %v4435, %v4442
        %v4445 = vunpack.c.l.s4 1966171168
        %v4446 = vunpack.c.0.s8 %v4445
        %v4447 = vlaneseq
        %v4448 = vshrl.u32 %v4447, 7
        %v4449 = vsub.s32 %v4446, %v4448
        %v4450 = vrot.slane %v4436, %v4449
        %v4452 = vunpack.c.l.s4 1966171168
        %v4453 = vunpack.c.0.s8 %v4452
        %v4454 = vlaneseq
        %v4455 = vshrl.u32 %v4454, 7
        %v4456 = vsub.s32 %v4453, %v4455
        %v4457 = vrot.slane %v1604, %v4456
        %v4458 = vcombine.high %v4457, %v4457
        %v4460 = vunpack.c.l.s4 1966171168
        %v4461 = vunpack.c.0.s8 %v4460
        %v4462 = vlaneseq
        %v4463 = vshrl.u32 %v4462, 7
        %v4464 = vsub.s32 %v4461, %v4463
        %v4465 = vrot.slane %v4457, %v4464
        %v4467 = vunpack.c.l.s4 1966171168
        %v4468 = vunpack.c.0.s8 %v4467
        %v4469 = vlaneseq
        %v4470 = vshrl.u32 %v4469, 7
        %v4471 = vsub.s32 %v4468, %v4470
        %v4472 = vrot.slane %v4458, %v4471
        %v4473 = vlaneseq
        %v4474 = vshrl.u32 %v4473, 7
        %v4475 = vsub.s32 0, %v4474
        %v4476 = vrot.slane %v4443, %v4475
        %v4477 = vlaneseq
        %v4478 = vshrl.u32 %v4477, 7
        %v4479 = vsub.s32 0, %v4478
        %v4480 = vrot.slane %v4450, %v4479
        %v4481 = vlaneseq
        %v4482 = vshrl.u32 %v4481, 7
        %v4483 = vsub.s32 0, %v4482
        %v4484 = vrot.slane %v4465, %v4483
        %v4485 = vlaneseq
        %v4486 = vshrl.u32 %v4485, 7
        %v4487 = vsub.s32 0, %v4486
        %v4488 = vrot.slane %v4472, %v4487
        %v4493 = vmul.f32 %v4357, %v4476
        %v4494 = vmul.f32 %v4361, %v4476
        %v4495 = vmul.f32 %v4365, %v4476
        %v4496 = vmul.f32 %v4369, %v4476
        %v4497 = vmul.f32 %v4376, %v4480
        %v4498 = vmul.f32 %v4380, %v4480
        %v4499 = vmul.f32 %v4384, %v4480
        %v4500 = vmul.f32 %v4388, %v4480
        %v4501 = vmul.f32 %v4395, %v4484
        %v4502 = vmul.f32 %v4399, %v4484
        %v4503 = vmul.f32 %v4403, %v4484
        %v4504 = vmul.f32 %v4407, %v4484
        %v4505 = vmul.f32 %v4414, %v4488
        %v4506 = vmul.f32 %v4418, %v4488
        %v4507 = vmul.f32 %v4422, %v4488
        %v4508 = vmul.f32 %v4426, %v4488
        %v4509 = vadd.f32 %v4335, %v4493
        %v4510 = vadd.f32 %v4336, %v4494
        %v4511 = vadd.f32 %v4337, %v4495
        %v4512 = vadd.f32 %v4338, %v4496
        %v4513 = vadd.f32 %v4339, %v4497
        %v4514 = vadd.f32 %v4340, %v4498
        %v4515 = vadd.f32 %v4341, %v4499
        %v4516 = vadd.f32 %v4342, %v4500
        %v4517 = vadd.f32 %v4343, %v4501
        %v4518 = vadd.f32 %v4344, %v4502
        %v4519 = vadd.f32 %v4345, %v4503
        %v4520 = vadd.f32 %v4346, %v4504
        %v4521 = vadd.f32 %v4347, %v4505
        %v4522 = vadd.f32 %v4348, %v4506
        %v4523 = vadd.f32 %v4349, %v4507
        %v4524 = vadd.f32 %v4350, %v4508
        %v4525 = vmul.f32 %v1258, %v1609
        %v4526 = vmul.f32 %v1324, %v1609
        %v4527 = vmul.f32 %v4525, %v1402
        %v4528 = vmul.f32 %v4526, %v1468
        %v4529 = vsel %vm1669, %v4527, 0.0
        %4530 = vadd.xlane.f32.xlu0 %v4529
        %v4531 = vpop.xlane.xlu0 %4530
        %v4532 = vsel %vm1669, %v4528, 0.0
        %4533 = vadd.xlane.f32.xlu0 %v4532
        %v4534 = vpop.xlane.xlu0 %4533
        %v4535 = vlaneseq
        %v4536 = vshrl.u32 %v4535, 7
        %v4537 = vsub.s32 0, %v4536
        %v4538 = vrot.slane %v1258, %v4537
        %4540 = vbcast.lane.b32.xlu0 %v4538, 256
        %v4541 = vpop.permute.xlu0 %4540
        %s4543 = sor.u32 256, 8
        %4544 = vbcast.lane.b32.xlu0 %v4538, %s4543
        %v4545 = vpop.permute.xlu0 %4544
        %s4547 = sor.u32 256, 16
        %4548 = vbcast.lane.b32.xlu0 %v4538, %s4547
        %v4549 = vpop.permute.xlu0 %4548
        %s4551 = sor.u32 256, 24
        %4552 = vbcast.lane.b32.xlu0 %v4538, %s4551
        %v4553 = vpop.permute.xlu0 %4552
        %v4554 = vlaneseq
        %v4555 = vshrl.u32 %v4554, 7
        %v4556 = vsub.s32 1, %v4555
        %v4557 = vrot.slane %v1258, %v4556
        %4559 = vbcast.lane.b32.xlu0 %v4557, 256
        %v4560 = vpop.permute.xlu0 %4559
        %s4562 = sor.u32 256, 8
        %4563 = vbcast.lane.b32.xlu0 %v4557, %s4562
        %v4564 = vpop.permute.xlu0 %4563
        %s4566 = sor.u32 256, 16
        %4567 = vbcast.lane.b32.xlu0 %v4557, %s4566
        %v4568 = vpop.permute.xlu0 %4567
        %s4570 = sor.u32 256, 24
        %4571 = vbcast.lane.b32.xlu0 %v4557, %s4570
        %v4572 = vpop.permute.xlu0 %4571
        %v4573 = vlaneseq
        %v4574 = vshrl.u32 %v4573, 7
        %v4575 = vsub.s32 0, %v4574
        %v4576 = vrot.slane %v1324, %v4575
        %4578 = vbcast.lane.b32.xlu0 %v4576, 256
        %v4579 = vpop.permute.xlu0 %4578
        %s4581 = sor.u32 256, 8
        %4582 = vbcast.lane.b32.xlu0 %v4576, %s4581
        %v4583 = vpop.permute.xlu0 %4582
        %s4585 = sor.u32 256, 16
        %4586 = vbcast.lane.b32.xlu0 %v4576, %s4585
        %v4587 = vpop.permute.xlu0 %4586
        %s4589 = sor.u32 256, 24
        %4590 = vbcast.lane.b32.xlu0 %v4576, %s4589
        %v4591 = vpop.permute.xlu0 %4590
        %v4592 = vlaneseq
        %v4593 = vshrl.u32 %v4592, 7
        %v4594 = vsub.s32 1, %v4593
        %v4595 = vrot.slane %v1324, %v4594
        %4597 = vbcast.lane.b32.xlu0 %v4595, 256
        %v4598 = vpop.permute.xlu0 %4597
        %s4600 = sor.u32 256, 8
        %4601 = vbcast.lane.b32.xlu0 %v4595, %s4600
        %v4602 = vpop.permute.xlu0 %4601
        %s4604 = sor.u32 256, 16
        %4605 = vbcast.lane.b32.xlu0 %v4595, %s4604
        %v4606 = vpop.permute.xlu0 %4605
        %s4608 = sor.u32 256, 24
        %4609 = vbcast.lane.b32.xlu0 %v4595, %s4608
        %v4610 = vpop.permute.xlu0 %4609
        %v4611 = vmul.f32 %v4541, %v4509
        %v4612 = vmul.f32 %v4545, %v4510
        %v4613 = vmul.f32 %v4549, %v4511
        %v4614 = vmul.f32 %v4553, %v4512
        %v4615 = vmul.f32 %v4560, %v4513
        %v4616 = vmul.f32 %v4564, %v4514
        %v4617 = vmul.f32 %v4568, %v4515
        %v4618 = vmul.f32 %v4572, %v4516
        %v4619 = vmul.f32 %v4579, %v4517
        %v4620 = vmul.f32 %v4583, %v4518
        %v4621 = vmul.f32 %v4587, %v4519
        %v4622 = vmul.f32 %v4591, %v4520
        %v4623 = vmul.f32 %v4598, %v4521
        %v4624 = vmul.f32 %v4602, %v4522
        %v4625 = vmul.f32 %v4606, %v4523
        %v4626 = vmul.f32 %v4610, %v4524
        %v4627 = vsel %vm1768, %v4611, 0.0
        %v4628 = vsel %vm1768, %v4612, 0.0
        %v4629 = vadd.f32 %v4627, %v4628
        %v4630 = vsel %vm1768, %v4613, 0.0
        %v4631 = vadd.f32 %v4629, %v4630
        %v4632 = vsel %vm1768, %v4614, 0.0
        %v4633 = vadd.f32 %v4631, %v4632
        %v4634 = vrot.slane %v4633, 4
        %v4635 = vadd.f32 %v4633, %v4634
        %v4636 = vrot.slane %v4635, 2
        %v4637 = vadd.f32 %v4635, %v4636
        %v4638 = vrot.slane %v4637, 1
        %v4639 = vadd.f32 %v4637, %v4638
        %v4640 = vsel %vm1768, %v4615, 0.0
        %v4641 = vsel %vm1768, %v4616, 0.0
        %v4642 = vadd.f32 %v4640, %v4641
        %v4643 = vsel %vm1768, %v4617, 0.0
        %v4644 = vadd.f32 %v4642, %v4643
        %v4645 = vsel %vm1768, %v4618, 0.0
        %v4646 = vadd.f32 %v4644, %v4645
        %v4647 = vrot.slane %v4646, 4
        %v4648 = vadd.f32 %v4646, %v4647
        %v4649 = vrot.slane %v4648, 2
        %v4650 = vadd.f32 %v4648, %v4649
        %v4651 = vrot.slane %v4650, 1
        %v4652 = vadd.f32 %v4650, %v4651
        %v4653 = vsel %vm1768, %v4619, 0.0
        %v4654 = vsel %vm1768, %v4620, 0.0
        %v4655 = vadd.f32 %v4653, %v4654
        %v4656 = vsel %vm1768, %v4621, 0.0
        %v4657 = vadd.f32 %v4655, %v4656
        %v4658 = vsel %vm1768, %v4622, 0.0
        %v4659 = vadd.f32 %v4657, %v4658
        %v4660 = vrot.slane %v4659, 4
        %v4661 = vadd.f32 %v4659, %v4660
        %v4662 = vrot.slane %v4661, 2
        %v4663 = vadd.f32 %v4661, %v4662
        %v4664 = vrot.slane %v4663, 1
        %v4665 = vadd.f32 %v4663, %v4664
        %v4666 = vsel %vm1768, %v4623, 0.0
        %v4667 = vsel %vm1768, %v4624, 0.0
        %v4668 = vadd.f32 %v4666, %v4667
        %v4669 = vsel %vm1768, %v4625, 0.0
        %v4670 = vadd.f32 %v4668, %v4669
        %v4671 = vsel %vm1768, %v4626, 0.0
        %v4672 = vadd.f32 %v4670, %v4671
        %v4673 = vrot.slane %v4672, 4
        %v4674 = vadd.f32 %v4672, %v4673
        %v4675 = vrot.slane %v4674, 2
        %v4676 = vadd.f32 %v4674, %v4675
        %v4677 = vrot.slane %v4676, 1
        %v4678 = vadd.f32 %v4676, %v4677
        %v4679 = vmul.f32 %v4531, %v1542
        %v4680 = vmul.f32 %v4534, %v1608
        %v4685 = vsel %vm1827, %v4652, %v4639
        %v4686 = vsel %vm1827, %v4678, %v4665
        %v4689 = vadd.f32 %v4679, %v4685
        %v4690 = vadd.f32 %v4680, %v4686
        %v4691 = vsel %vm1669, %v4689, 0.0
        %4692 = vadd.xlane.f32.xlu0 %v4691
        %v4693 = vpop.xlane.xlu0 %4692
        %v4694 = vsel %vm1669, %v4690, 0.0
        %4695 = vadd.xlane.f32.xlu0 %v4694
        %v4696 = vpop.xlane.xlu0 %4695
        %v4697 = vmul.f32 %v4693, %v1840
        %v4698 = vmul.f32 %v4696, %v1840
        %v4699 = vsub.f32 %v4689, %v4697
        %v4700 = vsub.f32 %v4690, %v4698
        %v4701 = vmul.f32 %v4699, %v4699
        %v4702 = vmul.f32 %v4700, %v4700
        %v4703 = vsel %vm1669, %v4701, 0.0
        %4704 = vadd.xlane.f32.xlu0 %v4703
        %v4705 = vpop.xlane.xlu0 %4704
        %v4706 = vsel %vm1669, %v4702, 0.0
        %4707 = vadd.xlane.f32.xlu0 %v4706
        %v4708 = vpop.xlane.xlu0 %4707
        %v4709 = vmul.f32 %v4705, %v1840
        %v4710 = vmul.f32 %v4708, %v1840
        %v4711 = vadd.f32 %v4709, 0.00064
        %v4712 = vadd.f32 %v4710, 0.00064
        %v4713 = vrsqrt.pop %v4711
        %v4714 = vrsqrt.pop %v4712
        %v4715 = vmul.f32 %v4699, %v4713
        %v4717 = vunpack.c.l.s4 1934713408
        %v4718 = vunpack.c.0.s8 %v4717
        %v4719 = vlaneseq
        %v4720 = vshrl.u32 %v4719, 7
        %v4721 = vsub.s32 %v4718, %v4720
        %v4722 = vrot.slane %v4715, %v4721
        %v4723 = vcombine.high %v4722, 0.0
        %v4724 = vmul.f32 %v4700, %v4714
        %v4726 = vunpack.c.l.s4 1934713408
        %v4727 = vunpack.c.0.s8 %v4726
        %v4728 = vlaneseq
        %v4729 = vshrl.u32 %v4728, 7
        %v4730 = vsub.s32 %v4727, %v4729
        %v4731 = vrot.slane %v4724, %v4730
        %v4732 = vcombine.high %v4731, 0.0
        %4735 = vrot.lane.b32.xlu0 %v4723, 32
        %v4736 = vpop.permute.xlu0 %4735
        %4737 = vrot.lane.b32.xlu0 %v4732, 32
        %v4738 = vpop.permute.xlu0 %4737
        %v4741 = vsel %vm1768, %v4722, %v4736
        %v4742 = vsel %vm1768, %v4731, %v4738
        %v4743 = vmul.f32 %v1617, %v4509
        %v4744 = vmul.f32 %v1621, %v4510
        %v4745 = vmul.f32 %v1625, %v4511
        %v4746 = vmul.f32 %v1629, %v4512
        %v4747 = vmul.f32 %v1636, %v4513
        %v4748 = vmul.f32 %v1640, %v4514
        %v4749 = vmul.f32 %v1644, %v4515
        %v4750 = vmul.f32 %v1648, %v4516
        %v4751 = vmul.f32 %v1617, %v4517
        %v4752 = vmul.f32 %v1621, %v4518
        %v4753 = vmul.f32 %v1625, %v4519
        %v4754 = vmul.f32 %v1629, %v4520
        %v4755 = vmul.f32 %v1636, %v4521
        %v4756 = vmul.f32 %v1640, %v4522
        %v4757 = vmul.f32 %v1644, %v4523
        %v4758 = vmul.f32 %v1648, %v4524
        %v4759 = vlaneseq
        %v4760 = vshrl.u32 %v4759, 7
        %v4761 = vsub.s32 0, %v4760
        %v4762 = vrot.slane %v1402, %v4761
        %4764 = vbcast.lane.b32.xlu0 %v4762, 256
        %v4765 = vpop.permute.xlu0 %4764
        %s4767 = sor.u32 256, 8
        %4768 = vbcast.lane.b32.xlu0 %v4762, %s4767
        %v4769 = vpop.permute.xlu0 %4768
        %s4771 = sor.u32 256, 16
        %4772 = vbcast.lane.b32.xlu0 %v4762, %s4771
        %v4773 = vpop.permute.xlu0 %4772
        %s4775 = sor.u32 256, 24
        %4776 = vbcast.lane.b32.xlu0 %v4762, %s4775
        %v4777 = vpop.permute.xlu0 %4776
        %v4778 = vlaneseq
        %v4779 = vshrl.u32 %v4778, 7
        %v4780 = vsub.s32 1, %v4779
        %v4781 = vrot.slane %v1402, %v4780
        %4783 = vbcast.lane.b32.xlu0 %v4781, 256
        %v4784 = vpop.permute.xlu0 %4783
        %s4786 = sor.u32 256, 8
        %4787 = vbcast.lane.b32.xlu0 %v4781, %s4786
        %v4788 = vpop.permute.xlu0 %4787
        %s4790 = sor.u32 256, 16
        %4791 = vbcast.lane.b32.xlu0 %v4781, %s4790
        %v4792 = vpop.permute.xlu0 %4791
        %s4794 = sor.u32 256, 24
        %4795 = vbcast.lane.b32.xlu0 %v4781, %s4794
        %v4796 = vpop.permute.xlu0 %4795
        %v4797 = vlaneseq
        %v4798 = vshrl.u32 %v4797, 7
        %v4799 = vsub.s32 0, %v4798
        %v4800 = vrot.slane %v1468, %v4799
        %4802 = vbcast.lane.b32.xlu0 %v4800, 256
        %v4803 = vpop.permute.xlu0 %4802
        %s4805 = sor.u32 256, 8
        %4806 = vbcast.lane.b32.xlu0 %v4800, %s4805
        %v4807 = vpop.permute.xlu0 %4806
        %s4809 = sor.u32 256, 16
        %4810 = vbcast.lane.b32.xlu0 %v4800, %s4809
        %v4811 = vpop.permute.xlu0 %4810
        %s4813 = sor.u32 256, 24
        %4814 = vbcast.lane.b32.xlu0 %v4800, %s4813
        %v4815 = vpop.permute.xlu0 %4814
        %v4816 = vlaneseq
        %v4817 = vshrl.u32 %v4816, 7
        %v4818 = vsub.s32 1, %v4817
        %v4819 = vrot.slane %v1468, %v4818
        %4821 = vbcast.lane.b32.xlu0 %v4819, 256
        %v4822 = vpop.permute.xlu0 %4821
        %s4824 = sor.u32 256, 8
        %4825 = vbcast.lane.b32.xlu0 %v4819, %s4824
        %v4826 = vpop.permute.xlu0 %4825
        %s4828 = sor.u32 256, 16
        %4829 = vbcast.lane.b32.xlu0 %v4819, %s4828
        %v4830 = vpop.permute.xlu0 %4829
        %s4832 = sor.u32 256, 24
        %4833 = vbcast.lane.b32.xlu0 %v4819, %s4832
        %v4834 = vpop.permute.xlu0 %4833
        %v4838 = vunpack.c.l.s4 1966171168
        %v4839 = vunpack.c.0.s8 %v4838
        %v4840 = vlaneseq
        %v4841 = vshrl.u32 %v4840, 7
        %v4842 = vsub.s32 %v4839, %v4841
        %v4843 = vrot.slane %v1542, %v4842
        %v4844 = vcombine.high %v4843, %v4843
        %v4846 = vunpack.c.l.s4 1966171168
        %v4847 = vunpack.c.0.s8 %v4846
        %v4848 = vlaneseq
        %v4849 = vshrl.u32 %v4848, 7
        %v4850 = vsub.s32 %v4847, %v4849
        %v4851 = vrot.slane %v4843, %v4850
        %v4853 = vunpack.c.l.s4 1966171168
        %v4854 = vunpack.c.0.s8 %v4853
        %v4855 = vlaneseq
        %v4856 = vshrl.u32 %v4855, 7
        %v4857 = vsub.s32 %v4854, %v4856
        %v4858 = vrot.slane %v4844, %v4857
        %v4860 = vunpack.c.l.s4 1966171168
        %v4861 = vunpack.c.0.s8 %v4860
        %v4862 = vlaneseq
        %v4863 = vshrl.u32 %v4862, 7
        %v4864 = vsub.s32 %v4861, %v4863
        %v4865 = vrot.slane %v1608, %v4864
        %v4866 = vcombine.high %v4865, %v4865
        %v4868 = vunpack.c.l.s4 1966171168
        %v4869 = vunpack.c.0.s8 %v4868
        %v4870 = vlaneseq
        %v4871 = vshrl.u32 %v4870, 7
        %v4872 = vsub.s32 %v4869, %v4871
        %v4873 = vrot.slane %v4865, %v4872
        %v4875 = vunpack.c.l.s4 1966171168
        %v4876 = vunpack.c.0.s8 %v4875
        %v4877 = vlaneseq
        %v4878 = vshrl.u32 %v4877, 7
        %v4879 = vsub.s32 %v4876, %v4878
        %v4880 = vrot.slane %v4866, %v4879
        %v4881 = vlaneseq
        %v4882 = vshrl.u32 %v4881, 7
        %v4883 = vsub.s32 0, %v4882
        %v4884 = vrot.slane %v4851, %v4883
        %v4885 = vlaneseq
        %v4886 = vshrl.u32 %v4885, 7
        %v4887 = vsub.s32 0, %v4886
        %v4888 = vrot.slane %v4858, %v4887
        %v4889 = vlaneseq
        %v4890 = vshrl.u32 %v4889, 7
        %v4891 = vsub.s32 0, %v4890
        %v4892 = vrot.slane %v4873, %v4891
        %v4893 = vlaneseq
        %v4894 = vshrl.u32 %v4893, 7
        %v4895 = vsub.s32 0, %v4894
        %v4896 = vrot.slane %v4880, %v4895
        %v4901 = vmul.f32 %v4765, %v4884
        %v4902 = vmul.f32 %v4769, %v4884
        %v4903 = vmul.f32 %v4773, %v4884
        %v4904 = vmul.f32 %v4777, %v4884
        %v4905 = vmul.f32 %v4784, %v4888
        %v4906 = vmul.f32 %v4788, %v4888
        %v4907 = vmul.f32 %v4792, %v4888
        %v4908 = vmul.f32 %v4796, %v4888
        %v4909 = vmul.f32 %v4803, %v4892
        %v4910 = vmul.f32 %v4807, %v4892
        %v4911 = vmul.f32 %v4811, %v4892
        %v4912 = vmul.f32 %v4815, %v4892
        %v4913 = vmul.f32 %v4822, %v4896
        %v4914 = vmul.f32 %v4826, %v4896
        %v4915 = vmul.f32 %v4830, %v4896
        %v4916 = vmul.f32 %v4834, %v4896
        %v4917 = vadd.f32 %v4743, %v4901
        %v4918 = vadd.f32 %v4744, %v4902
        %v4919 = vadd.f32 %v4745, %v4903
        %v4920 = vadd.f32 %v4746, %v4904
        %v4921 = vadd.f32 %v4747, %v4905
        %v4922 = vadd.f32 %v4748, %v4906
        %v4923 = vadd.f32 %v4749, %v4907
        %v4924 = vadd.f32 %v4750, %v4908
        %v4925 = vadd.f32 %v4751, %v4909
        %v4926 = vadd.f32 %v4752, %v4910
        %v4927 = vadd.f32 %v4753, %v4911
        %v4928 = vadd.f32 %v4754, %v4912
        %v4929 = vadd.f32 %v4755, %v4913
        %v4930 = vadd.f32 %v4756, %v4914
        %v4931 = vadd.f32 %v4757, %v4915
        %v4932 = vadd.f32 %v4758, %v4916
        %v4935 = vrot.slane %v2293, 7
        %v4936 = vrot.slane %v2294, 7
        %v4941 = vrot.slane %v2701, 6
        %v4942 = vrot.slane %v2702, 6
        %v4947 = vrot.slane %v3109, 5
        %v4948 = vrot.slane %v3110, 5
        %v4953 = vrot.slane %v3517, 4
        %v4954 = vrot.slane %v3518, 4
        %v4959 = vrot.slane %v3925, 3
        %v4960 = vrot.slane %v3926, 3
        %v4965 = vrot.slane %v4333, 2
        %v4966 = vrot.slane %v4334, 2
        %v4971 = vrot.slane %v4741, 1
        %v4972 = vrot.slane %v4742, 1
        %vm4975 = vcmask 1040384
        %v4976 = vsel %vm4975, %v1885, %v4935
        %v4977 = vsel %vm4975, %v1886, %v4936
        %vm4978 = vcmask 1041408
        %v4979 = vsel %vm4978, %v4976, %v4941
        %v4980 = vsel %vm4978, %v4977, %v4942
        %vm4981 = vcmask 1042432
        %v4982 = vsel %vm4981, %v4979, %v4947
        %v4983 = vsel %vm4981, %v4980, %v4948
        %vm4984 = vcmask 1043456
        %v4985 = vsel %vm4984, %v4982, %v4953
        %v4986 = vsel %vm4984, %v4983, %v4954
        %vm4987 = vcmask 1044480
        %v4988 = vsel %vm4987, %v4985, %v4959
        %v4989 = vsel %vm4987, %v4986, %v4960
        %vm4990 = vcmask 1045504
        %v4991 = vsel %vm4990, %v4988, %v4965
        %v4992 = vsel %vm4990, %v4989, %v4966
        %vm4993 = vcmask 1046528
        %v4994 = vsel %vm4993, %v4991, %v4971
        %v4995 = vsel %vm4993, %v4992, %v4972
        %v4996 = vld [vmem:[%s15] sm:$0x1]
        %v4998 = vlaneseq
        %v4999 = vshrl.u32 %v4998, 7
        %v5000 = vsub.s32 0, %v4999
        %v5001 = vrot.slane %v4996, %v5000
        %v5003 = vmul.f32 %v4994, %v5001
        %v5004 = vmul.f32 %v4995, %v5001
        %v5005 = vld [vmem:[%s16] sm:$0x1]
        %v5007 = vlaneseq
        %v5008 = vshrl.u32 %v5007, 7
        %v5009 = vsub.s32 0, %v5008
        %v5010 = vrot.slane %v5005, %v5009
        %v5012 = vadd.f32 %v5003, %v5010
        %v5013 = vadd.f32 %v5004, %v5010
        %5016 = vrot.lane.b32.xlu0 %v1183, 64
        %v5017 = vpop.permute.xlu0 %5016
        %5018 = vrot.lane.b32.xlu0 %v1184, 64
        %v5019 = vpop.permute.xlu0 %5018
        %v5022 = vmul.f32 %v5012, %v5017
        %v5023 = vmul.f32 %v5013, %v5019
        %v5024 = vpack.c.bf16 %v5023, %v5022
        %v5025 = vld [vmem:[%s14] sm:$0xf]
        %v5026 = vld [vmem:[%s14 + $0x4] sm:$0xf]
        %v5027 = vld [vmem:[%s14 + $0x8] sm:$0xf]
        %v5028 = vld [vmem:[%s14 + $0xc] sm:$0xf]
        %v5029 = vld [vmem:[%s14 + $0x10] sm:$0xf]
        %v5030 = vld [vmem:[%s14 + $0x14] sm:$0xf]
        %v5031 = vld [vmem:[%s14 + $0x18] sm:$0xf]
        %v5032 = vld [vmem:[%s14 + $0x1c] sm:$0xf]
        %v5041 = vunpack.c.l.b16 %v5025
        %v5042 = vunpack.c.l.b16 %v5026
        %v5043 = vunpack.c.l.b16 %v5027
        %v5044 = vunpack.c.l.b16 %v5028
        %v5045 = vunpack.c.l.b16 %v5029
        %v5046 = vunpack.c.l.b16 %v5030
        %v5047 = vunpack.c.l.b16 %v5031
        %v5048 = vunpack.c.l.b16 %v5032
        %v5049 = vpack.c.b16 %v5042, %v5041
        %v5050 = vpack.c.b16 %v5044, %v5043
        %v5051 = vpack.c.b16 %v5046, %v5045
        %v5052 = vpack.c.b16 %v5048, %v5047
        %v5058 = vsel %vm869, %v5024, 0
        %5060 = vmatprep.subr.bf16.mxu0 0
        %5061 = vmatpush1.bf16.msra.mxu0 0
        %5062 = vmatprep.subr.bf16.mxu0 0
        %5063 = vmatpush1.bf16.msra.mxu0 0
        %5064 = vmatprep.subr.bf16.mxu0 0
        %5065 = vmatpush1.bf16.msra.mxu0 0
        %5066 = vmatprep.subr.bf16.mxu0 0
        %5067 = vmatpush1.bf16.msra.mxu0 0
        %5068 = vmatprep.subr.bf16.mxu0 0
        %5069 = vmatpush1.bf16.msra.mxu0 %v5052
        %5070 = vmatprep.subr.bf16.mxu0 0
        %5071 = vmatpush1.bf16.msra.mxu0 %v5051
        %5072 = vmatprep.subr.bf16.mxu0 0
        %5073 = vmatpush1.bf16.msra.mxu0 %v5050
        %5074 = vmatprep.subr.bf16.mxu0 0
        %5075 = vmatpush1.bf16.msra.mxu0 %v5049
        %5076 = vmatprep.subr.bf16.mxu0 0
        %5077 = vmatpush2.bf16.msra.mxu0 0
        %5078 = vmatprep.subr.bf16.mxu0 0
        %5079 = vmatpush2.bf16.msra.mxu0 0
        %5080 = vmatprep.subr.bf16.mxu0 0
        %5081 = vmatpush2.bf16.msra.mxu0 0
        %5082 = vmatprep.subr.bf16.mxu0 0
        %5083 = vmatpush2.bf16.msra.mxu0 0
        %5084 = vmatprep.subr.bf16.mxu0 0
        %5085 = vmatpush2.bf16.msra.mxu0 0
        %5086 = vmatprep.subr.bf16.mxu0 0
        %5087 = vmatpush2.bf16.msra.mxu0 0
        %5088 = vmatprep.subr.bf16.mxu0 0
        %5089 = vmatpush2.bf16.msra.mxu0 0
        %5090 = vmatprep.subr.bf16.mxu0 0
        %5091 = vmatpush2.bf16.msra.mxu0 0
        %5092 = vmatprep.mubr.bf16.mxu0 0
        %5093 = vmatmul.mubr.bf16.gmra.mxu0 %v5058
        %v5094 = vpop.f32.mrf.mxu0
        %v5095 = vadd.f32 0.0, %v5094
        %v5096 = vpop.f32.mrf.mxu0
        %v5097 = vpop.f32.mrf.mxu0
        %v5098 = vadd.f32 0.0, %v5097
        %v5099 = vpop.f32.mrf.mxu0
        %5100 = vdwg.mxu0
        %v5101 = vadd.f32 %v911, %v5095
        %v5102 = vadd.f32 %v912, %v5098
        %v5103 = vld [vmem:[%s8] sm:$0x1]
        %v5104 = vld [vmem:[%s9] sm:$0x1]
        %v5105 = vsel %vm869, %v5101, 0.0
        %5106 = vadd.xlane.f32.xlu0 %v5105
        %v5107 = vpop.xlane.xlu0 %5106
        %v5108 = vsel %vm869, %v5102, 0.0
        %5109 = vadd.xlane.f32.xlu0 %v5108
        %v5110 = vpop.xlane.xlu0 %5109
        %v5111 = vmul.f32 %v5107, %v876
        %v5112 = vmul.f32 %v5110, %v876
        %v5113 = vsub.f32 %v5101, %v5111
        %v5114 = vsub.f32 %v5102, %v5112
        %v5115 = vmul.f32 %v5113, %v5113
        %v5116 = vmul.f32 %v5114, %v5114
        %v5117 = vsel %vm869, %v5115, 0.0
        %5118 = vadd.xlane.f32.xlu0 %v5117
        %v5119 = vpop.xlane.xlu0 %5118
        %v5120 = vsel %vm869, %v5116, 0.0
        %5121 = vadd.xlane.f32.xlu0 %v5120
        %v5122 = vpop.xlane.xlu0 %5121
        %v5123 = vmul.f32 %v5119, %v876
        %v5124 = vmul.f32 %v5122, %v876
        %v5125 = vadd.f32 %v5123, 1e-05
        %v5126 = vadd.f32 %v5124, 1e-05
        %v5127 = vrsqrt.pop %v5125
        %v5128 = vrsqrt.pop %v5126
        %v5129 = vmul.f32 %v5113, %v5127
        %v5130 = vmul.f32 %v5114, %v5128
        %v5132 = vlaneseq
        %v5133 = vshrl.u32 %v5132, 7
        %v5134 = vsub.s32 0, %v5133
        %v5135 = vrot.slane %v5103, %v5134
        %v5137 = vmul.f32 %v5129, %v5135
        %v5138 = vmul.f32 %v5130, %v5135
        %v5140 = vlaneseq
        %v5141 = vshrl.u32 %v5140, 7
        %v5142 = vsub.s32 0, %v5141
        %v5143 = vrot.slane %v5104, %v5142
        %v5145 = vadd.f32 %v5137, %v5143
        %v5146 = vadd.f32 %v5138, %v5143
        %v5147 = vrot.slane %v5145, 7
        %v5148 = vrot.slane %v5146, 7
        %v5149 = vsel %vm961, %v5147, %v5148
        %v5150 = vsel %vm961, %v5148, %v5147
        %v5151 = vld [vmem:[%s758] sm:$0x1]
        %v5152 = vld [vmem:[%s758 + $0x1] sm:$0x1]
        %v5155 = vlaneseq
        %v5156 = vshrl.u32 %v5155, 7
        %v5157 = vsub.s32 0, %v5156
        %v5158 = vrot.slane %v5151, %v5157
        %v5159 = vlaneseq
        %v5160 = vshrl.u32 %v5159, 7
        %v5161 = vsub.s32 0, %v5160
        %v5162 = vrot.slane %v5152, %v5161
        %v5165 = vsel %vm964, %v5158, %v5150
        %v5166 = vsel %vm964, %v5162, %v5149
        %v5167 = vpack.c.bf16 %v5146, %v5145
        %v5168 = vld [vmem:[%s17] sm:$0xff]
        %v5169 = vld [vmem:[%s17 + $0x8] sm:$0xff]
        %v5170 = vld [vmem:[%s17 + $0x10] sm:$0xff]
        %v5171 = vld [vmem:[%s17 + $0x18] sm:$0xff]
        %v5172 = vld [vmem:[%s17 + $0x20] sm:$0xff]
        %v5173 = vld [vmem:[%s17 + $0x28] sm:$0xff]
        %v5174 = vld [vmem:[%s17 + $0x30] sm:$0xff]
        %v5175 = vld [vmem:[%s17 + $0x38] sm:$0xff]
        %v5176 = vpack.c.bf16 %v5166, %v5165
        %v5177 = vld [vmem:[%s18] sm:$0xff]
        %v5178 = vld [vmem:[%s18 + $0x8] sm:$0xff]
        %v5179 = vld [vmem:[%s18 + $0x10] sm:$0xff]
        %v5180 = vld [vmem:[%s18 + $0x18] sm:$0xff]
        %v5181 = vld [vmem:[%s18 + $0x20] sm:$0xff]
        %v5182 = vld [vmem:[%s18 + $0x28] sm:$0xff]
        %v5183 = vld [vmem:[%s18 + $0x30] sm:$0xff]
        %v5184 = vld [vmem:[%s18 + $0x38] sm:$0xff]
        %v5193 = vunpack.c.l.b16 %v5177
        %v5194 = vunpack.c.h.b16 %v5177
        %v5195 = vunpack.c.l.b16 %v5178
        %v5196 = vunpack.c.h.b16 %v5178
        %v5197 = vunpack.c.l.b16 %v5179
        %v5198 = vunpack.c.h.b16 %v5179
        %v5199 = vunpack.c.l.b16 %v5180
        %v5200 = vunpack.c.h.b16 %v5180
        %v5201 = vunpack.c.l.b16 %v5181
        %v5202 = vunpack.c.h.b16 %v5181
        %v5203 = vunpack.c.l.b16 %v5182
        %v5204 = vunpack.c.h.b16 %v5182
        %v5205 = vunpack.c.l.b16 %v5183
        %v5206 = vunpack.c.h.b16 %v5183
        %v5207 = vunpack.c.l.b16 %v5184
        %v5208 = vunpack.c.h.b16 %v5184
        %v5209 = vpack.c.b16 %v5195, %v5193
        %v5210 = vpack.c.b16 %v5196, %v5194
        %v5211 = vpack.c.b16 %v5199, %v5197
        %v5212 = vpack.c.b16 %v5200, %v5198
        %v5213 = vpack.c.b16 %v5203, %v5201
        %v5214 = vpack.c.b16 %v5204, %v5202
        %v5215 = vpack.c.b16 %v5207, %v5205
        %v5216 = vpack.c.b16 %v5208, %v5206
        %v5226 = vsel %vm869, %v5176, 0
        %5228 = vmatprep.subr.bf16.mxu0 0
        %5229 = vmatpush1.bf16.msra.mxu0 0
        %5230 = vmatprep.subr.bf16.mxu0 0
        %5231 = vmatpush1.bf16.msra.mxu0 0
        %5232 = vmatprep.subr.bf16.mxu0 0
        %5233 = vmatpush1.bf16.msra.mxu0 0
        %5234 = vmatprep.subr.bf16.mxu0 0
        %5235 = vmatpush1.bf16.msra.mxu0 0
        %5236 = vmatprep.subr.bf16.mxu0 %v5216
        %5237 = vmatpush1.bf16.msra.mxu0 %v5215
        %5238 = vmatprep.subr.bf16.mxu0 %v5214
        %5239 = vmatpush1.bf16.msra.mxu0 %v5213
        %5240 = vmatprep.subr.bf16.mxu0 %v5212
        %5241 = vmatpush1.bf16.msra.mxu0 %v5211
        %5242 = vmatprep.subr.bf16.mxu0 %v5210
        %5243 = vmatpush1.bf16.msra.mxu0 %v5209
        %5244 = vmatprep.subr.bf16.mxu0 0
        %5245 = vmatpush2.bf16.msra.mxu0 0
        %5246 = vmatprep.subr.bf16.mxu0 0
        %5247 = vmatpush2.bf16.msra.mxu0 0
        %5248 = vmatprep.subr.bf16.mxu0 0
        %5249 = vmatpush2.bf16.msra.mxu0 0
        %5250 = vmatprep.subr.bf16.mxu0 0
        %5251 = vmatpush2.bf16.msra.mxu0 0
        %5252 = vmatprep.subr.bf16.mxu0 0
        %5253 = vmatpush2.bf16.msra.mxu0 0
        %5254 = vmatprep.subr.bf16.mxu0 0
        %5255 = vmatpush2.bf16.msra.mxu0 0
        %5256 = vmatprep.subr.bf16.mxu0 0
        %5257 = vmatpush2.bf16.msra.mxu0 0
        %5258 = vmatprep.subr.bf16.mxu0 0
        %5259 = vmatpush2.bf16.msra.mxu0 0
        %5260 = vmatprep.mubr.bf16.mxu0 0
        %5261 = vmatmul.mubr.bf16.gmra.mxu0 %v5226
        %v5262 = vpop.f32.mrf.mxu0
        %v5263 = vadd.f32 0.0, %v5262
        %v5264 = vpop.f32.mrf.mxu0
        %v5265 = vadd.f32 0.0, %v5264
        %v5266 = vpop.f32.mrf.mxu0
        %v5267 = vadd.f32 0.0, %v5266
        %v5268 = vpop.f32.mrf.mxu0
        %v5269 = vadd.f32 0.0, %v5268
        %5270 = vdwg.mxu0
        %v5279 = vunpack.c.l.b16 %v5168
        %v5280 = vunpack.c.h.b16 %v5168
        %v5281 = vunpack.c.l.b16 %v5169
        %v5282 = vunpack.c.h.b16 %v5169
        %v5283 = vunpack.c.l.b16 %v5170
        %v5284 = vunpack.c.h.b16 %v5170
        %v5285 = vunpack.c.l.b16 %v5171
        %v5286 = vunpack.c.h.b16 %v5171
        %v5287 = vunpack.c.l.b16 %v5172
        %v5288 = vunpack.c.h.b16 %v5172
        %v5289 = vunpack.c.l.b16 %v5173
        %v5290 = vunpack.c.h.b16 %v5173
        %v5291 = vunpack.c.l.b16 %v5174
        %v5292 = vunpack.c.h.b16 %v5174
        %v5293 = vunpack.c.l.b16 %v5175
        %v5294 = vunpack.c.h.b16 %v5175
        %v5295 = vpack.c.b16 %v5281, %v5279
        %v5296 = vpack.c.b16 %v5282, %v5280
        %v5297 = vpack.c.b16 %v5285, %v5283
        %v5298 = vpack.c.b16 %v5286, %v5284
        %v5299 = vpack.c.b16 %v5289, %v5287
        %v5300 = vpack.c.b16 %v5290, %v5288
        %v5301 = vpack.c.b16 %v5293, %v5291
        %v5302 = vpack.c.b16 %v5294, %v5292
        %v5312 = vsel %vm869, %v5167, 0
        %5314 = vmatprep.subr.bf16.mxu0 0
        %5315 = vmatpush1.bf16.msra.mxu0 0
        %5316 = vmatprep.subr.bf16.mxu0 0
        %5317 = vmatpush1.bf16.msra.mxu0 0
        %5318 = vmatprep.subr.bf16.mxu0 0
        %5319 = vmatpush1.bf16.msra.mxu0 0
        %5320 = vmatprep.subr.bf16.mxu0 0
        %5321 = vmatpush1.bf16.msra.mxu0 0
        %5322 = vmatprep.subr.bf16.mxu0 %v5302
        %5323 = vmatpush1.bf16.msra.mxu0 %v5301
        %5324 = vmatprep.subr.bf16.mxu0 %v5300
        %5325 = vmatpush1.bf16.msra.mxu0 %v5299
        %5326 = vmatprep.subr.bf16.mxu0 %v5298
        %5327 = vmatpush1.bf16.msra.mxu0 %v5297
        %5328 = vmatprep.subr.bf16.mxu0 %v5296
        %5329 = vmatpush1.bf16.msra.mxu0 %v5295
        %5330 = vmatprep.subr.bf16.mxu0 0
        %5331 = vmatpush2.bf16.msra.mxu0 0
        %5332 = vmatprep.subr.bf16.mxu0 0
        %5333 = vmatpush2.bf16.msra.mxu0 0
        %5334 = vmatprep.subr.bf16.mxu0 0
        %5335 = vmatpush2.bf16.msra.mxu0 0
        %5336 = vmatprep.subr.bf16.mxu0 0
        %5337 = vmatpush2.bf16.msra.mxu0 0
        %5338 = vmatprep.subr.bf16.mxu0 0
        %5339 = vmatpush2.bf16.msra.mxu0 0
        %5340 = vmatprep.subr.bf16.mxu0 0
        %5341 = vmatpush2.bf16.msra.mxu0 0
        %5342 = vmatprep.subr.bf16.mxu0 0
        %5343 = vmatpush2.bf16.msra.mxu0 0
        %5344 = vmatprep.subr.bf16.mxu0 0
        %5345 = vmatpush2.bf16.msra.mxu0 0
        %5346 = vmatprep.mubr.bf16.mxu0 0
        %5347 = vmatmul.mubr.bf16.gmra.mxu0 %v5312
        %v5348 = vpop.f32.mrf.mxu0
        %v5349 = vadd.f32 %v5263, %v5348
        %v5350 = vpop.f32.mrf.mxu0
        %v5351 = vadd.f32 %v5265, %v5350
        %v5352 = vpop.f32.mrf.mxu0
        %v5353 = vadd.f32 %v5267, %v5352
        %v5354 = vpop.f32.mrf.mxu0
        %v5355 = vadd.f32 %v5269, %v5354
        %5356 = vdwg.mxu0
        %v5357 = vmax.f32 %v5349, 0.0
        %v5358 = vmax.f32 %v5353, 0.0
        %v5359 = vmul.f32 %v5357, %v5357
        %v5360 = vmul.f32 %v5358, %v5358
        %v5361 = vxor.u32 %v5351, 2147483648
        %v5362 = vxor.u32 %v5355, 2147483648
        %v5363 = vmul.f32 %v5361, 1.442695
        %v5364 = vpow.pop %v5363
        %v5365 = vmul.f32 %v5362, 1.442695
        %v5366 = vpow.pop %v5365
        %v5367 = vadd.f32 %v5364, 1.0
        %v5368 = vadd.f32 %v5366, 1.0
        %v5369 = vrcp.pop %v5367
        %v5370 = vmul.f32 1.0, %v5369
        %v5371 = vrcp.pop %v5368
        %v5372 = vmul.f32 1.0, %v5371
        %v5373 = vpack.c.bf16 %v5360, %v5359
        %v5374 = vld [vmem:[%s19] sm:$0xf]
        %v5375 = vld [vmem:[%s19 + $0x4] sm:$0xf]
        %v5376 = vld [vmem:[%s19 + $0x8] sm:$0xf]
        %v5377 = vld [vmem:[%s19 + $0xc] sm:$0xf]
        %v5378 = vld [vmem:[%s19 + $0x10] sm:$0xf]
        %v5379 = vld [vmem:[%s19 + $0x14] sm:$0xf]
        %v5380 = vld [vmem:[%s19 + $0x18] sm:$0xf]
        %v5381 = vld [vmem:[%s19 + $0x1c] sm:$0xf]
        %v5382 = vld [vmem:[%s19 + $0x20] sm:$0xf]
        %v5383 = vld [vmem:[%s19 + $0x24] sm:$0xf]
        %v5384 = vld [vmem:[%s19 + $0x28] sm:$0xf]
        %v5385 = vld [vmem:[%s19 + $0x2c] sm:$0xf]
        %v5386 = vld [vmem:[%s19 + $0x30] sm:$0xf]
        %v5387 = vld [vmem:[%s19 + $0x34] sm:$0xf]
        %v5388 = vld [vmem:[%s19 + $0x38] sm:$0xf]
        %v5389 = vld [vmem:[%s19 + $0x3c] sm:$0xf]
        %v5406 = vunpack.c.l.b16 %v5374
        %v5407 = vunpack.c.l.b16 %v5375
        %v5408 = vunpack.c.l.b16 %v5376
        %v5409 = vunpack.c.l.b16 %v5377
        %v5410 = vunpack.c.l.b16 %v5378
        %v5411 = vunpack.c.l.b16 %v5379
        %v5412 = vunpack.c.l.b16 %v5380
        %v5413 = vunpack.c.l.b16 %v5381
        %v5414 = vunpack.c.l.b16 %v5382
        %v5415 = vunpack.c.l.b16 %v5383
        %v5416 = vunpack.c.l.b16 %v5384
        %v5417 = vunpack.c.l.b16 %v5385
        %v5418 = vunpack.c.l.b16 %v5386
        %v5419 = vunpack.c.l.b16 %v5387
        %v5420 = vunpack.c.l.b16 %v5388
        %v5421 = vunpack.c.l.b16 %v5389
        %v5422 = vpack.c.b16 %v5407, %v5406
        %v5423 = vpack.c.b16 %v5409, %v5408
        %v5424 = vpack.c.b16 %v5411, %v5410
        %v5425 = vpack.c.b16 %v5413, %v5412
        %v5426 = vpack.c.b16 %v5415, %v5414
        %v5427 = vpack.c.b16 %v5417, %v5416
        %v5428 = vpack.c.b16 %v5419, %v5418
        %v5429 = vpack.c.b16 %v5421, %v5420
        %5438 = vmatprep.subr.bf16.mxu0 0
        %5439 = vmatpush1.bf16.msra.mxu0 %v5429
        %5440 = vmatprep.subr.bf16.mxu0 0
        %5441 = vmatpush1.bf16.msra.mxu0 %v5428
        %5442 = vmatprep.subr.bf16.mxu0 0
        %5443 = vmatpush1.bf16.msra.mxu0 %v5427
        %5444 = vmatprep.subr.bf16.mxu0 0
        %5445 = vmatpush1.bf16.msra.mxu0 %v5426
        %5446 = vmatprep.subr.bf16.mxu0 0
        %5447 = vmatpush1.bf16.msra.mxu0 %v5425
        %5448 = vmatprep.subr.bf16.mxu0 0
        %5449 = vmatpush1.bf16.msra.mxu0 %v5424
        %5450 = vmatprep.subr.bf16.mxu0 0
        %5451 = vmatpush1.bf16.msra.mxu0 %v5423
        %5452 = vmatprep.subr.bf16.mxu0 0
        %5453 = vmatpush1.bf16.msra.mxu0 %v5422
        %5454 = vmatprep.subr.bf16.mxu0 0
        %5455 = vmatpush2.bf16.msra.mxu0 0
        %5456 = vmatprep.subr.bf16.mxu0 0
        %5457 = vmatpush2.bf16.msra.mxu0 0
        %5458 = vmatprep.subr.bf16.mxu0 0
        %5459 = vmatpush2.bf16.msra.mxu0 0
        %5460 = vmatprep.subr.bf16.mxu0 0
        %5461 = vmatpush2.bf16.msra.mxu0 0
        %5462 = vmatprep.subr.bf16.mxu0 0
        %5463 = vmatpush2.bf16.msra.mxu0 0
        %5464 = vmatprep.subr.bf16.mxu0 0
        %5465 = vmatpush2.bf16.msra.mxu0 0
        %5466 = vmatprep.subr.bf16.mxu0 0
        %5467 = vmatpush2.bf16.msra.mxu0 0
        %5468 = vmatprep.subr.bf16.mxu0 0
        %5469 = vmatpush2.bf16.msra.mxu0 0
        %5470 = vmatprep.mubr.bf16.mxu0 0
        %5471 = vmatmul.mubr.bf16.gmra.mxu0 %v5373
        %v5472 = vpop.f32.mrf.mxu0
        %v5473 = vadd.f32 0.0, %v5472
        %v5474 = vpop.f32.mrf.mxu0
        %v5475 = vpop.f32.mrf.mxu0
        %v5476 = vadd.f32 0.0, %v5475
        %v5477 = vpop.f32.mrf.mxu0
        %5478 = vdwg.mxu0
        %v5479 = vmul.f32 %v5370, %v5473
        %v5480 = vmul.f32 %v5372, %v5476
        %v5481 = vadd.f32 %v5101, %v5479
        %v5482 = vadd.f32 %v5102, %v5480
        %5483 = vst.msk [vmem:[%s829] sm:$0xff] %vm869, %v5481
        %5484 = vst.msk [vmem:[%s829 + $0x8] sm:$0xff] %vm869, %v5482
        %vm5485 = vcmask 523271
        %5486 = vst.msk [vmem:[%s836 - $0x7] sm:$0x80] %vm5485, %v955
        %5487 = vst.msk [vmem:[%s836 - $0x6] sm:$0x80] %vm5485, %v956
        %5488 = vst.msk [vmem:[%s843] sm:$0xff] %vm1768, %v4917
        %5489 = vst.msk [vmem:[%s843 + $0x8] sm:$0xff] %vm1768, %v4918
        %5490 = vst.msk [vmem:[%s843 + $0x10] sm:$0xff] %vm1768, %v4919
        %5491 = vst.msk [vmem:[%s843 + $0x18] sm:$0xff] %vm1768, %v4920
        %5492 = vst.msk [vmem:[%s843 + $0x20] sm:$0xff] %vm1768, %v4921
        %5493 = vst.msk [vmem:[%s843 + $0x28] sm:$0xff] %vm1768, %v4922
        %5494 = vst.msk [vmem:[%s843 + $0x30] sm:$0xff] %vm1768, %v4923
        %5495 = vst.msk [vmem:[%s843 + $0x38] sm:$0xff] %vm1768, %v4924
        %5496 = vst.msk [vmem:[%s843 + $0x40] sm:$0xff] %vm1768, %v4925
        %5497 = vst.msk [vmem:[%s843 + $0x48] sm:$0xff] %vm1768, %v4926
        %5498 = vst.msk [vmem:[%s843 + $0x50] sm:$0xff] %vm1768, %v4927
        %5499 = vst.msk [vmem:[%s843 + $0x58] sm:$0xff] %vm1768, %v4928
        %5500 = vst.msk [vmem:[%s843 + $0x60] sm:$0xff] %vm1768, %v4929
        %5501 = vst.msk [vmem:[%s843 + $0x68] sm:$0xff] %vm1768, %v4930
        %5502 = vst.msk [vmem:[%s843 + $0x70] sm:$0xff] %vm1768, %v4931
        %5503 = vst.msk [vmem:[%s843 + $0x78] sm:$0xff] %vm1768, %v4932
        %5504 = vst.msk [vmem:[%s850 - $0x7] sm:$0x80] %vm5485, %v5145
        %5505 = vst.msk [vmem:[%s850 - $0x6] sm:$0x80] %vm5485, %v5146
        %s5506 = sand.u32 %s498, 1
        %s5507 = scalar_lea.sflag [#allocation4], %s5506
        %s5508 = sand.u32 %s498, 1
        %s5509 = smul.addr %s5508, 16
        %s5510 = scalar_lea.vmem [#allocation8], %s5509
        %s5511 = sand.u32 %s50, 1
        %s5512 = scalar_lea.sflag [#allocation10], %s5511
        %s5513 = sand.u32 %s524, 1
        %s5514 = smul.addr %s5513, 2
        %s5515 = scalar_lea.vmem [#allocation9], %s5514
        %s5516 = sand.u32 %s50, 1
        %s5517 = scalar_lea.sflag [#allocation10], %s5516
        %s5518 = sand.u32 %s550, 1
        %s5519 = smul.addr %s5518, 128
        %s5520 = scalar_lea.vmem [#allocation11], %s5519
        %s5521 = sand.u32 %s576, 1
        %s5522 = scalar_lea.sflag [#allocation13], %s5521
        %s5523 = sand.u32 %s576, 1
        %s5524 = smul.addr %s5523, 2
        %s5525 = scalar_lea.vmem [#allocation12], %s5524
        // Predicated region
        $region113: #{tpu_custom_call.1} parent=99 // pred_check
          %p5526 = pneg %p508
        $region114: #{tpu_custom_call.1} parent=99 // pred_check_branch
          %5528 = sbr.rel (%p5526) target = $region116
        $region115: #{tpu_custom_call.1} parent=99 // pred_region
          %s5529 = smul.u32 2, %s50
          %s5531 = ssub.s32 256, 256
          %5532 = vsyncadd %s5507, %s5531
          %s5533 = smul.addr %s5529, 128
          %s5534 = scalar_lea.hbm %s20, %s5533
          %s5535 = sshll.u32 %s5510, 4
          %s5536 = int_to_ptr.vmem [resolvable:$true] %s5535
          %5541 = dma.vmem_to_hbm [thread:$0]  %s5536, 256, %s5534, %s5507, 128, 128, 8
        $region116: #{tpu_custom_call.1} parent=99 // pred_fallthru
          _
        // Predicated region
        $region117: #{tpu_custom_call.1} parent=99 // pred_check
          %p5542 = pneg %p534
        $region118: #{tpu_custom_call.1} parent=99 // pred_check_branch
          %5544 = sbr.rel (%p5542) target = $region120
        $region119: #{tpu_custom_call.1} parent=99 // pred_region
          %s5545 = smul.u32 2, %s50
          %s5547 = ssub.s32 32, 32
          %5548 = vsyncadd %s5512, %s5547
          %s5549 = smul.addr %s5545, 16
          %s5550 = scalar_lea.hbm %s21, %s5549
          %s5551 = sshll.u32 %s5515, 4
          %s5552 = int_to_ptr.vmem [resolvable:$true] %s5551
          %5557 = dma.vmem_to_hbm [thread:$0]  %s5552, 32, %s5550, %s5512, 16, 16, 1
        $region120: #{tpu_custom_call.1} parent=99 // pred_fallthru
          _
        // Predicated region
        $region121: #{tpu_custom_call.1} parent=99 // pred_check
          %p5558 = pneg %p560
        $region122: #{tpu_custom_call.1} parent=99 // pred_check_branch
          %5560 = sbr.rel (%p5558) target = $region124
        $region123: #{tpu_custom_call.1} parent=99 // pred_region
          %s5561 = smul.u32 2, %s50
          %s5563 = ssub.s32 2048, 2048
          %5564 = vsyncadd %s5517, %s5563
          %s5565 = smul.addr %s5561, 8
          %s5566 = smul.addr %s5565, 128
          %s5567 = scalar_lea.hbm %s22, %s5566
          %s5568 = sshll.u32 %s5520, 4
          %s5569 = int_to_ptr.vmem [resolvable:$true] %s5568
          %5574 = dma.vmem_to_hbm [thread:$0]  %s5569, 2048, %s5567, %s5517, 128, 128, 8
        $region124: #{tpu_custom_call.1} parent=99 // pred_fallthru
          _
        // Predicated region
        $region125: #{tpu_custom_call.1} parent=99 // pred_check
          %p5575 = pneg %p586
        $region126: #{tpu_custom_call.1} parent=99 // pred_check_branch
          %5577 = sbr.rel (%p5575) target = $region128
        $region127: #{tpu_custom_call.1} parent=99 // pred_region
          %s5578 = smul.u32 2, %s50
          %s5580 = ssub.s32 32, 32
          %5581 = vsyncadd %s5522, %s5580
          %s5582 = smul.addr %s5578, 16
          %s5583 = scalar_lea.hbm %s23, %s5582
          %s5584 = sshll.u32 %s5525, 4
          %s5585 = int_to_ptr.vmem [resolvable:$true] %s5584
          %5590 = dma.vmem_to_hbm [thread:$0]  %s5585, 32, %s5583, %s5522, 16, 16, 1
        $region128: #{tpu_custom_call.1} parent=99 // pred_fallthru
          _
      $region100: #{tpu_custom_call.1} parent=5 // pred_fallthru
        _
      %p5591 = scmp.le.s32.totalorder 2, %s45
      // Predicated region
      $region129: #{tpu_custom_call.1} parent=5 // pred_check
        %p5592 = pneg %p5591
      $region130: #{tpu_custom_call.1} parent=5 // pred_check_branch
        %5594 = sbr.rel (%p5592) target = $region132
      $region131: #{tpu_custom_call.1} parent=5 // pred_region
        %s5595 = ssub.s32 %s45, 2
        // Predicated region
        $region133: #{tpu_custom_call.1} parent=131 // pred_check
          %p5596 = pneg %p514
        $region134: #{tpu_custom_call.1} parent=131 // pred_check_branch
          %5598 = sbr.rel (%p5596) target = $region136
        $region135: #{tpu_custom_call.1} parent=131 // pred_region
          %s5599 = sand.u32 %s499, 1
          %s5600 = scalar_lea.sflag [#allocation4], %s5599
          %s5601 = sand.u32 %s499, 1
          %s5602 = smul.addr %s5601, 16
          %s5603 = scalar_lea.vmem [#allocation8], %s5602
          %5604 = dma.done %s5600, 256
        $region136: #{tpu_custom_call.1} parent=131 // pred_fallthru
          _
        // Predicated region
        $region137: #{tpu_custom_call.1} parent=131 // pred_check
          %p5605 = pneg %p540
        $region138: #{tpu_custom_call.1} parent=131 // pred_check_branch
          %5607 = sbr.rel (%p5605) target = $region140
        $region139: #{tpu_custom_call.1} parent=131 // pred_region
          %s5608 = sand.u32 %s51, 1
          %s5609 = scalar_lea.sflag [#allocation10], %s5608
          %s5610 = sand.u32 %s525, 1
          %s5611 = smul.addr %s5610, 2
          %s5612 = scalar_lea.vmem [#allocation9], %s5611
          %5613 = dma.done %s5609, 32
        $region140: #{tpu_custom_call.1} parent=131 // pred_fallthru
          _
        // Predicated region
        $region141: #{tpu_custom_call.1} parent=131 // pred_check
          %p5614 = pneg %p566
        $region142: #{tpu_custom_call.1} parent=131 // pred_check_branch
          %5616 = sbr.rel (%p5614) target = $region144
        $region143: #{tpu_custom_call.1} parent=131 // pred_region
          %s5617 = sand.u32 %s51, 1
          %s5618 = scalar_lea.sflag [#allocation10], %s5617
          %s5619 = sand.u32 %s551, 1
          %s5620 = smul.addr %s5619, 128
          %s5621 = scalar_lea.vmem [#allocation11], %s5620
          %5622 = dma.done %s5618, 2048
        $region144: #{tpu_custom_call.1} parent=131 // pred_fallthru
          _
        // Predicated region
        $region145: #{tpu_custom_call.1} parent=131 // pred_check
          %p5623 = pneg %p592
        $region146: #{tpu_custom_call.1} parent=131 // pred_check_branch
          %5625 = sbr.rel (%p5623) target = $region148
        $region147: #{tpu_custom_call.1} parent=131 // pred_region
          %s5626 = sand.u32 %s577, 1
          %s5627 = scalar_lea.sflag [#allocation13], %s5626
          %s5628 = sand.u32 %s577, 1
          %s5629 = smul.addr %s5628, 2
          %s5630 = scalar_lea.vmem [#allocation12], %s5629
          %5631 = dma.done %s5627, 32
        $region148: #{tpu_custom_call.1} parent=131 // pred_fallthru
          _
      $region132: #{tpu_custom_call.1} parent=5 // pred_fallthru
        _
    $region6: #{tpu_custom_call.1} parent=1 // loop_footer
      %s49 = sadd.s32 1, %s45
    $region7: #{tpu_custom_call.1} parent=1 // loop_footer_branch
      %44 = sbr.rel target = $region3
    $region8: #{tpu_custom_call.1} parent=1 // loop_exit
      _
    %5632 = vsyncpa [#allocation3], 1
    %s5633 = scalar_lea.sflag [#allocation3], 1
    %5634 = vsyncpa %s5633, 1
    %5635 = vsyncpa [#allocation6], 1
    %s5636 = scalar_lea.sflag [#allocation6], 1
    %5637 = vsyncpa %s5636, 1
    %5638 = vsyncpa [#allocation4], 1
    %s5639 = scalar_lea.sflag [#allocation4], 1
    %5640 = vsyncpa %s5639, 1
    %5641 = vsyncpa [#allocation10], 1
    %s5642 = scalar_lea.sflag [#allocation10], 1
    %5643 = vsyncpa %s5642, 1
    %5644 = vsyncpa [#allocation13], 1
    %s5645 = scalar_lea.sflag [#allocation13], 1
    %5646 = vsyncpa %s5645, 1

</llo_original>
